<compile_context>
chip_gen: v7x
topology: tpu7x:2x2x1
jax: 0.10.0
libtpu: 0.0.40
codegen_flags: <defaults>
</compile_context>

<pallas_src>
import functools

import jax
import jax.numpy as jnp
from jax.experimental import pallas as pl
from jax.experimental.pallas import tpu as pltpu


def cross_attention_kernel(q_ref, k_ref, v_ref,
                           wq_ref, wk_ref, wv_ref, wp_ref, bp_ref,
                           o_ref, *, num_heads, head_dim, scale):
    """One (batch, q-tile) grid step.

    q_ref:  (tq, C)   bf16      k_ref / v_ref: (N_kv, C) bf16
    w*_ref: (C, C)    bf16 (pre-transposed to (in, out))
    bp_ref: (1, C)    f32       o_ref: (tq, C) output dtype
    """
    tq = q_ref.shape[0]
    n_kv = k_ref.shape[0]

    # --- Q/K/V projections: bf16 operands, f32 accumulation. These are the MXU
    # workhorses (contraction K = C); the attention matmuls below only have
    # K = head_dim, so we batch heads and keep tq / N_kv tiles large to fill M/N.
    qp = jnp.dot(q_ref[...], wq_ref[...], preferred_element_type=jnp.float32)  # (tq, C)
    kp = jnp.dot(k_ref[...], wk_ref[...], preferred_element_type=jnp.float32)  # (N_kv, C)
    vp = jnp.dot(v_ref[...], wv_ref[...], preferred_element_type=jnp.float32)  # (N_kv, C)

    # Fold the softmax scale into q (f32, (tq, C)) - cheaper than scaling (H, tq, N_kv).
    qp = qp * scale

    # --- Batched-head attention (no per-head Python loop, no lane-narrow concat). ---
    qh = jnp.transpose(qp.reshape(tq, num_heads, head_dim).astype(jnp.bfloat16),
                       (1, 0, 2))                                   # (H, tq, Dh)
    kh = jnp.transpose(kp.reshape(n_kv, num_heads, head_dim).astype(jnp.bfloat16),
                       (1, 0, 2))                                   # (H, N_kv, Dh)
    vh = jnp.transpose(vp.reshape(n_kv, num_heads, head_dim).astype(jnp.bfloat16),
                       (1, 0, 2))                                   # (H, N_kv, Dh)

    # TODO(synk): for very large N_kv, stream K/V over an extra "arbitrary" kv grid axis
    # with an online-softmax (flash) accumulator in VMEM scratch instead of materializing
    # the full (H, tq, N_kv) logits.
    s = jnp.einsum("hqd,hkd->hqk", qh, kh,
                   preferred_element_type=jnp.float32)              # (H, tq, N_kv) f32

    # Softmax: elementwise math stays in f32 (v5e VPU/EUP have no bf16 path).
    s = s - jnp.max(s, axis=-1, keepdims=True)
    p = jnp.exp(s)
    inv_den = pl.reciprocal(jnp.sum(p, axis=-1, keepdims=True), approx=True)
    p = p * inv_den                                  # attn_drop(p=0.0) -> identity

    ctx = jnp.einsum("hqk,hkd->hqd", p.astype(jnp.bfloat16), vh,
                     preferred_element_type=jnp.float32)            # (H, tq, Dh) f32

    # (H, tq, Dh) -> (tq, H, Dh) -> (tq, C): matches PyTorch (attn@v).transpose(1,2).reshape.
    x = jnp.transpose(ctx, (1, 0, 2)).reshape(tq, num_heads * head_dim)
    x = x.astype(jnp.bfloat16)

    # --- Output projection (+bias, f32). proj_drop(p=0.0) -> identity. ---
    out = jnp.dot(x, wp_ref[...], preferred_element_type=jnp.float32) + bp_ref[...]
    o_ref[...] = out.astype(o_ref.dtype)


def _vmem_limit_bytes(tq, n_kv, C, num_heads, out_itemsize):
    """Explicit VMEM budget: tiles + single-buffered weights + f32 intermediates."""
    bf, f32 = 2, 4
    weights = 4 * C * C * bf + C * f32                    # weights single-buffered + bias
    acts_in = 2 * tq * C * bf + 2 * (2 * n_kv * C * bf)   # double-buffered q, k, v blocks
    acts_out = 2 * tq * C * out_itemsize                  # double-buffered output block
    inter = f32 * (tq * C + 2 * n_kv * C                  # qp / kp / vp
                   + 2 * num_heads * tq * n_kv            # logits + probs
                   + 2 * tq * C)                          # context + proj output
    est = weights + acts_in + acts_out + inter
    # 2x headroom for compiler temporaries/relayouts, clamped to a window that is safe on
    # v5e/v6e (128 MiB physical VMEM) and v7x (64 MiB physical VMEM).
    return int(min(max(2 * est + (8 << 20), 32 << 20), 64 << 20))


def cross_attention_encoder(q, k, v, params, *, num_heads, q_tile=256):
    """q: (B, N_q, C), k/v: (B, N_kv, C). params in PyTorch nn.Linear layout (out, in).

    q_tile: query-sequence tile (second, "parallel" grid axis). Size it per TPU
    generation - v6e can amortize much larger tiles than v7x (64 MiB VMEM).
    """
    B, N_q, C = q.shape
    _, N_kv, _ = k.shape
    assert C % num_heads == 0
    head_dim = C // num_heads
    scale = head_dim ** (-0.5)

    # Query tiling (multiple of 8 sublanes, or the full N_q if it is small).
    q_tile = max(8, (q_tile // 8) * 8)
    tq = N_q if N_q <= q_tile else q_tile
    n_q_tiles = pl.cdiv(N_q, tq)

    # bf16 MXU operands; accumulation stays f32 inside the kernel.
    q_bf = q.astype(jnp.bfloat16)
    k_bf = k.astype(jnp.bfloat16)
    v_bf = v.astype(jnp.bfloat16)
    wq_t = params["Wq"].T.astype(jnp.bfloat16)      # (in, out) so kernel does x @ W
    wk_t = params["Wk"].T.astype(jnp.bfloat16)
    wv_t = params["Wv"].T.astype(jnp.bfloat16)
    wp_t = params["Wproj"].T.astype(jnp.bfloat16)
    bp = params["bproj"].reshape(1, C).astype(jnp.float32)

    # TODO(synk): when the caller passes k is v (or q is k is v), fuse Wk/Wv (or Q/K/V) into a
    # single (C, 2C) / (C, 3C) matmul in the wrapper for better MXU fill and fewer weight DMAs.

    kernel = functools.partial(cross_attention_kernel,
                               num_heads=num_heads, head_dim=head_dim, scale=scale)

    def build(single_buffer_weights):
        # Squeeze the size-1 batch dim out of the kernel refs (2-D loads/stores).
        sq = pl.Squeezed() if hasattr(pl, "Squeezed") else None
        # Weights/bias have a constant index_map -> single-buffer them to free VMEM
        # for larger q tiles (matters most on v7x).
        wkw = dict(pipeline_mode=pl.Buffered(1)) if single_buffer_weights else {}

        q_spec = pl.BlockSpec((sq, tq, C), lambda b, i: (b, i, 0))
        kv_spec = pl.BlockSpec((sq, N_kv, C), lambda b, i: (b, 0, 0))
        w_spec = pl.BlockSpec((C, C), lambda b, i: (0, 0), **wkw)
        b_spec = pl.BlockSpec((1, C), lambda b, i: (0, 0), **wkw)
        out_spec = pl.BlockSpec((sq, tq, C), lambda b, i: (b, i, 0))

        return pl.pallas_call(
            kernel,
            out_shape=jax.ShapeDtypeStruct((B, N_q, C), q.dtype),
            grid_spec=pltpu.PrefetchScalarGridSpec(
                num_scalar_prefetch=0,
                grid=(B, n_q_tiles),
                in_specs=[q_spec, kv_spec, kv_spec,
                          w_spec, w_spec, w_spec, w_spec, b_spec],
                out_specs=out_spec,
            ),
            compiler_params=pltpu.CompilerParams(
                dimension_semantics=("parallel", "parallel"),
                vmem_limit_bytes=_vmem_limit_bytes(tq, N_kv, C, num_heads,
                                                   q.dtype.itemsize),
            ),
        )

    args = (q_bf, k_bf, v_bf, wq_t, wk_t, wv_t, wp_t, bp)
    try:
        return build(single_buffer_weights=True)(*args)
    except Exception:
        # Fallback for jax versions without BlockSpec.pipeline_mode / pl.Buffered
        # (default double-buffered weights; functionally identical).
        return build(single_buffer_weights=False)(*args)


def _reference(q, k, v, params, *, num_heads):
    """Pure-JAX f32 reference mirroring the PyTorch forward exactly."""
    B, N_q, C = q.shape
    _, N_kv, _ = k.shape
    Dh = C // num_heads
    scale = Dh ** (-0.5)

    def lin(x, W, b=None):
        y = jnp.einsum("bnc,oc->bno", x, W)
        return y if b is None else y + b

    qp = lin(q, params["Wq"]).reshape(B, N_q, num_heads, Dh).transpose(0, 2, 1, 3)
    kp = lin(k, params["Wk"]).reshape(B, N_kv, num_heads, Dh).transpose(0, 2, 1, 3)
    vp = lin(v, params["Wv"]).reshape(B, N_kv, num_heads, Dh).transpose(0, 2, 1, 3)

    attn = jnp.einsum("bhqd,bhkd->bhqk", qp, kp) * scale
    attn = jax.nn.softmax(attn, axis=-1)
    x = jnp.einsum("bhqk,bhkd->bhqd", attn, vp)
    x = x.transpose(0, 2, 1, 3).reshape(B, N_q, C)
    return lin(x, params["Wproj"], params["bproj"])


if __name__ == "__main__":
    B, N_q, N_kv, C, H = 2, 8, 8, 32, 4  # dim=32, num_heads=4 -> head_dim=8

    key = jax.random.PRNGKey(0)
    kq, kk, kv_, kwq, kwk, kwv, kwp, kbp = jax.random.split(key, 8)

    q = jax.random.normal(kq, (B, N_q, C), dtype=jnp.float32)
    k = jax.random.normal(kk, (B, N_kv, C), dtype=jnp.float32)
    v = jax.random.normal(kv_, (B, N_kv, C), dtype=jnp.float32)

    # Deterministic synthetic parameters (PyTorch nn.Linear shape convention: (out, in)).
    params = {
        "Wq": jax.random.normal(kwq, (C, C), dtype=jnp.float32) * 0.1,
        "Wk": jax.random.normal(kwk, (C, C), dtype=jnp.float32) * 0.1,
        "Wv": jax.random.normal(kwv, (C, C), dtype=jnp.float32) * 0.1,
        "Wproj": jax.random.normal(kwp, (C, C), dtype=jnp.float32) * 0.1,
        "bproj": jax.random.normal(kbp, (C,), dtype=jnp.float32) * 0.1,
    }

    out = cross_attention_encoder(q, k, v, params, num_heads=H)
    out = jax.block_until_ready(out)

    ref = _reference(q, k, v, params, num_heads=H)
    assert out.shape == (B, N_q, C)
    # bf16 MXU operands + approximate reciprocal -> loosened tolerance vs the f32 reference.
    assert jnp.allclose(out, ref, atol=5e-2, rtol=5e-2), "mismatch vs JAX reference"

    print("KERNEL_OK")
</pallas_src>

<mosaic_0001>
module attributes {stable_mosaic.version = 11 : i64} {
  func.func @cross_attention_kernel(%arg0: i32, %arg1: i32, %arg2: memref<1x8x32xbf16, #tpu.memory_space<vmem>>, %arg3: memref<1x8x32xbf16, #tpu.memory_space<vmem>>, %arg4: memref<1x8x32xbf16, #tpu.memory_space<vmem>>, %arg5: memref<32x32xbf16, #tpu.memory_space<vmem>>, %arg6: memref<32x32xbf16, #tpu.memory_space<vmem>>, %arg7: memref<32x32xbf16, #tpu.memory_space<vmem>>, %arg8: memref<32x32xbf16, #tpu.memory_space<vmem>>, %arg9: memref<1x32xf32, #tpu.memory_space<vmem>>, %arg10: memref<1x8x32xf32, #tpu.memory_space<vmem>>) attributes {dimension_semantics = [#tpu.dimension_semantics<parallel>, #tpu.dimension_semantics<parallel>], iteration_bounds = array<i64: 2, 1>, scalar_prefetch = 0 : i64, scratch_operands = 0 : i64, tpu.core_type = #tpu.core_type<tc>, window_params = [{transform_indices = @transform_0, window_bounds = array<i64: 1, 8, 32>}, {transform_indices = @transform_1, window_bounds = array<i64: 1, 8, 32>}, {transform_indices = @transform_2, window_bounds = array<i64: 1, 8, 32>}, {pipeline_mode = #tpu.pipeline_mode<synchronous>, transform_indices = @transform_3, window_bounds = array<i64: 32, 32>}, {pipeline_mode = #tpu.pipeline_mode<synchronous>, transform_indices = @transform_4, window_bounds = array<i64: 32, 32>}, {pipeline_mode = #tpu.pipeline_mode<synchronous>, transform_indices = @transform_5, window_bounds = array<i64: 32, 32>}, {pipeline_mode = #tpu.pipeline_mode<synchronous>, transform_indices = @transform_6, window_bounds = array<i64: 32, 32>}, {pipeline_mode = #tpu.pipeline_mode<synchronous>, transform_indices = @transform_7, window_bounds = array<i64: 1, 32>}, {transform_indices = @transform_8, window_bounds = array<i64: 1, 8, 32>}]} {
    %c0 = arith.constant 0 : index
    %c0_0 = arith.constant 0 : index
    %c0_1 = arith.constant 0 : index
    %0 = vector.load %arg2[%c0, %c0_0, %c0_1] : memref<1x8x32xbf16, #tpu.memory_space<vmem>>, vector<1x8x32xbf16>
    %1 = vector.shape_cast %0 : vector<1x8x32xbf16> to vector<8x32xbf16>
    %c0_2 = arith.constant 0 : index
    %c0_3 = arith.constant 0 : index
    %2 = vector.load %arg5[%c0_2, %c0_3] : memref<32x32xbf16, #tpu.memory_space<vmem>>, vector<32x32xbf16>
    %cst = arith.constant dense<0.000000e+00> : vector<8x32xf32>
    %3 = tpu.matmul %1, %2, %cst {dimension_numbers = #tpu.dot_dimension_numbers<[1], [0], [0], [1], [0, 0, 1, 1], [], []>} : vector<8x32xbf16>, vector<32x32xbf16>, vector<8x32xf32> -> vector<8x32xf32>
    %c0_4 = arith.constant 0 : index
    %c0_5 = arith.constant 0 : index
    %c0_6 = arith.constant 0 : index
    %4 = vector.load %arg3[%c0_4, %c0_5, %c0_6] : memref<1x8x32xbf16, #tpu.memory_space<vmem>>, vector<1x8x32xbf16>
    %5 = vector.shape_cast %4 : vector<1x8x32xbf16> to vector<8x32xbf16>
    %c0_7 = arith.constant 0 : index
    %c0_8 = arith.constant 0 : index
    %6 = vector.load %arg6[%c0_7, %c0_8] : memref<32x32xbf16, #tpu.memory_space<vmem>>, vector<32x32xbf16>
    %cst_9 = arith.constant dense<0.000000e+00> : vector<8x32xf32>
    %7 = tpu.matmul %5, %6, %cst_9 {dimension_numbers = #tpu.dot_dimension_numbers<[1], [0], [0], [1], [0, 0, 1, 1], [], []>} : vector<8x32xbf16>, vector<32x32xbf16>, vector<8x32xf32> -> vector<8x32xf32>
    %c0_10 = arith.constant 0 : index
    %c0_11 = arith.constant 0 : index
    %c0_12 = arith.constant 0 : index
    %8 = vector.load %arg4[%c0_10, %c0_11, %c0_12] : memref<1x8x32xbf16, #tpu.memory_space<vmem>>, vector<1x8x32xbf16>
    %9 = vector.shape_cast %8 : vector<1x8x32xbf16> to vector<8x32xbf16>
    %c0_13 = arith.constant 0 : index
    %c0_14 = arith.constant 0 : index
    %10 = vector.load %arg7[%c0_13, %c0_14] : memref<32x32xbf16, #tpu.memory_space<vmem>>, vector<32x32xbf16>
    %cst_15 = arith.constant dense<0.000000e+00> : vector<8x32xf32>
    %11 = tpu.matmul %9, %10, %cst_15 {dimension_numbers = #tpu.dot_dimension_numbers<[1], [0], [0], [1], [0, 0, 1, 1], [], []>} : vector<8x32xbf16>, vector<32x32xbf16>, vector<8x32xf32> -> vector<8x32xf32>
    %cst_16 = arith.constant 0.353553385 : f32
    %12 = vector.broadcast %cst_16 : f32 to vector<8x32xf32>
    %13 = arith.mulf %3, %12 : vector<8x32xf32>
    %14 = vector.shape_cast %13 : vector<8x32xf32> to vector<8x4x8xf32>
    %15 = arith.truncf %14 : vector<8x4x8xf32> to vector<8x4x8xbf16>
    %16 = tpu.transpose %15, [1, 0, 2] : vector<8x4x8xbf16> -> vector<4x8x8xbf16>
    %17 = vector.shape_cast %7 : vector<8x32xf32> to vector<8x4x8xf32>
    %18 = arith.truncf %17 : vector<8x4x8xf32> to vector<8x4x8xbf16>
    %19 = tpu.transpose %18, [1, 0, 2] : vector<8x4x8xbf16> -> vector<4x8x8xbf16>
    %20 = vector.shape_cast %11 : vector<8x32xf32> to vector<8x4x8xf32>
    %21 = arith.truncf %20 : vector<8x4x8xf32> to vector<8x4x8xbf16>
    %22 = tpu.transpose %21, [1, 0, 2] : vector<8x4x8xbf16> -> vector<4x8x8xbf16>
    "tpu.trace_start"() <{level = 10 : i32, message = "hqd,hkd->hqk"}> : () -> ()
    %cst_17 = arith.constant dense<0.000000e+00> : vector<4x8x8xf32>
    %23 = tpu.matmul %16, %19, %cst_17 {dimension_numbers = #tpu.dot_dimension_numbers<[2], [2], [1], [1], [0, 0, 0, 1, 1, 1], [0], [0]>} : vector<4x8x8xbf16>, vector<4x8x8xbf16>, vector<4x8x8xf32> -> vector<4x8x8xf32>
    "tpu.trace_stop"() : () -> ()
    %cst_18 = arith.constant dense<0xFF800000> : vector<4x8xf32>
    %24 = vector.multi_reduction <maximumf>, %23, %cst_18 [2] : vector<4x8x8xf32> to vector<4x8xf32>
    %25 = vector.shape_cast %24 : vector<4x8xf32> to vector<4x8x1xf32>
    %26 = vector.broadcast %25 : vector<4x8x1xf32> to vector<4x8x8xf32>
    %27 = arith.subf %23, %26 : vector<4x8x8xf32>
    %28 = math.exp %27 : vector<4x8x8xf32>
    %cst_19 = arith.constant dense<0.000000e+00> : vector<4x8xf32>
    %29 = vector.multi_reduction <add>, %28, %cst_19 [2] : vector<4x8x8xf32> to vector<4x8xf32>
    %30 = vector.shape_cast %29 : vector<4x8xf32> to vector<4x8x1xf32>
    %31 = tpu.reciprocal %30 {approx = true} : vector<4x8x1xf32> -> vector<4x8x1xf32>
    %32 = vector.broadcast %31 : vector<4x8x1xf32> to vector<4x8x8xf32>
    %33 = arith.mulf %28, %32 : vector<4x8x8xf32>
    %34 = arith.truncf %33 : vector<4x8x8xf32> to vector<4x8x8xbf16>
    "tpu.trace_start"() <{level = 10 : i32, message = "hqk,hkd->hqd"}> : () -> ()
    %cst_20 = arith.constant dense<0.000000e+00> : vector<4x8x8xf32>
    %35 = tpu.matmul %34, %22, %cst_20 {dimension_numbers = #tpu.dot_dimension_numbers<[2], [1], [1], [2], [0, 0, 0, 1, 1, 2], [0], [0]>} : vector<4x8x8xbf16>, vector<4x8x8xbf16>, vector<4x8x8xf32> -> vector<4x8x8xf32>
    "tpu.trace_stop"() : () -> ()
    %36 = tpu.transpose %35, [1, 0, 2] : vector<4x8x8xf32> -> vector<8x4x8xf32>
    %37 = vector.shape_cast %36 : vector<8x4x8xf32> to vector<8x32xf32>
    %38 = arith.truncf %37 : vector<8x32xf32> to vector<8x32xbf16>
    %c0_21 = arith.constant 0 : index
    %c0_22 = arith.constant 0 : index
    %39 = vector.load %arg8[%c0_21, %c0_22] : memref<32x32xbf16, #tpu.memory_space<vmem>>, vector<32x32xbf16>
    %cst_23 = arith.constant dense<0.000000e+00> : vector<8x32xf32>
    %40 = tpu.matmul %38, %39, %cst_23 {dimension_numbers = #tpu.dot_dimension_numbers<[1], [0], [0], [1], [0, 0, 1, 1], [], []>} : vector<8x32xbf16>, vector<32x32xbf16>, vector<8x32xf32> -> vector<8x32xf32>
    %c0_24 = arith.constant 0 : index
    %c0_25 = arith.constant 0 : index
    %41 = vector.load %arg9[%c0_24, %c0_25] : memref<1x32xf32, #tpu.memory_space<vmem>>, vector<1x32xf32>
    %42 = vector.broadcast %41 : vector<1x32xf32> to vector<8x32xf32>
    %43 = arith.addf %40, %42 : vector<8x32xf32>
    %c0_26 = arith.constant 0 : index
    %c0_27 = arith.constant 0 : index
    %c0_28 = arith.constant 0 : index
    %44 = vector.load %arg10[%c0_26, %c0_27, %c0_28] : memref<1x8x32xf32, #tpu.memory_space<vmem>>, vector<1x8x32xf32>
    %45 = vector.shape_cast %44 : vector<1x8x32xf32> to vector<8x32xf32>
    %46 = vector.shape_cast %43 : vector<8x32xf32> to vector<1x8x32xf32>
    tpu.vector_store %arg10[%c0_26, %c0_27, %c0_28], %46 {strides = array<i32>} : memref<1x8x32xf32, #tpu.memory_space<vmem>>, vector<1x8x32xf32>,
    return
  }
  func.func @transform_0(%arg0: i32, %arg1: i32) -> (i32, i32, i32) {
    %c0_i32 = arith.constant 0 : i32
    %c0_i32_0 = arith.constant 0 : i32
    return %arg0, %arg1, %c0_i32 : i32, i32, i32
  }
  func.func @transform_1(%arg0: i32, %arg1: i32) -> (i32, i32, i32) {
    %c0_i32 = arith.constant 0 : i32
    %c0_i32_0 = arith.constant 0 : i32
    %c0_i32_1 = arith.constant 0 : i32
    return %arg0, %c0_i32, %c0_i32_0 : i32, i32, i32
  }
  func.func @transform_2(%arg0: i32, %arg1: i32) -> (i32, i32, i32) {
    %c0_i32 = arith.constant 0 : i32
    %c0_i32_0 = arith.constant 0 : i32
    %c0_i32_1 = arith.constant 0 : i32
    return %arg0, %c0_i32, %c0_i32_0 : i32, i32, i32
  }
  func.func @transform_3(%arg0: i32, %arg1: i32) -> (i32, i32) {
    %c0_i32 = arith.constant 0 : i32
    %c0_i32_0 = arith.constant 0 : i32
    %c0_i32_1 = arith.constant 0 : i32
    return %c0_i32, %c0_i32_0 : i32, i32
  }
  func.func @transform_4(%arg0: i32, %arg1: i32) -> (i32, i32) {
    %c0_i32 = arith.constant 0 : i32
    %c0_i32_0 = arith.constant 0 : i32
    %c0_i32_1 = arith.constant 0 : i32
    return %c0_i32, %c0_i32_0 : i32, i32
  }
  func.func @transform_5(%arg0: i32, %arg1: i32) -> (i32, i32) {
    %c0_i32 = arith.constant 0 : i32
    %c0_i32_0 = arith.constant 0 : i32
    %c0_i32_1 = arith.constant 0 : i32
    return %c0_i32, %c0_i32_0 : i32, i32
  }
  func.func @transform_6(%arg0: i32, %arg1: i32) -> (i32, i32) {
    %c0_i32 = arith.constant 0 : i32
    %c0_i32_0 = arith.constant 0 : i32
    %c0_i32_1 = arith.constant 0 : i32
    return %c0_i32, %c0_i32_0 : i32, i32
  }
  func.func @transform_7(%arg0: i32, %arg1: i32) -> (i32, i32) {
    %c0_i32 = arith.constant 0 : i32
    %c0_i32_0 = arith.constant 0 : i32
    %c0_i32_1 = arith.constant 0 : i32
    return %c0_i32, %c0_i32_0 : i32, i32
  }
  func.func @transform_8(%arg0: i32, %arg1: i32) -> (i32, i32, i32) {
    %c0_i32 = arith.constant 0 : i32
    %c0_i32_0 = arith.constant 0 : i32
    return %arg0, %arg1, %c0_i32 : i32, i32, i32
  }
}

module attributes {stable_mosaic.version = 11 : i64} {
  func.func @cross_attention_kernel(%arg0: i32, %arg1: i32, %arg2: memref<1x8x32xbf16, #tpu.memory_space<vmem>>, %arg3: memref<1x8x32xbf16, #tpu.memory_space<vmem>>, %arg4: memref<1x8x32xbf16, #tpu.memory_space<vmem>>, %arg5: memref<32x32xbf16, #tpu.memory_space<vmem>>, %arg6: memref<32x32xbf16, #tpu.memory_space<vmem>>, %arg7: memref<32x32xbf16, #tpu.memory_space<vmem>>, %arg8: memref<32x32xbf16, #tpu.memory_space<vmem>>, %arg9: memref<1x32xf32, #tpu.memory_space<vmem>>, %arg10: memref<1x8x32xf32, #tpu.memory_space<vmem>>) attributes {dimension_semantics = [#tpu.dimension_semantics<parallel>, #tpu.dimension_semantics<parallel>], iteration_bounds = array<i64: 2, 1>, scalar_prefetch = 0 : i64, scratch_operands = 0 : i64, tpu.core_type = #tpu.core_type<tc>, window_params = [{transform_indices = @transform_0, window_bounds = array<i64: 1, 8, 32>}, {transform_indices = @transform_1, window_bounds = array<i64: 1, 8, 32>}, {transform_indices = @transform_2, window_bounds = array<i64: 1, 8, 32>}, {pipeline_mode = #tpu.pipeline_mode<synchronous>, transform_indices = @transform_3, window_bounds = array<i64: 32, 32>}, {pipeline_mode = #tpu.pipeline_mode<synchronous>, transform_indices = @transform_4, window_bounds = array<i64: 32, 32>}, {pipeline_mode = #tpu.pipeline_mode<synchronous>, transform_indices = @transform_5, window_bounds = array<i64: 32, 32>}, {pipeline_mode = #tpu.pipeline_mode<synchronous>, transform_indices = @transform_6, window_bounds = array<i64: 32, 32>}, {pipeline_mode = #tpu.pipeline_mode<synchronous>, transform_indices = @transform_7, window_bounds = array<i64: 1, 32>}, {transform_indices = @transform_8, window_bounds = array<i64: 1, 8, 32>}]} {
    %c0 = arith.constant 0 : index
    %c0_0 = arith.constant 0 : index
    %c0_1 = arith.constant 0 : index
    %0 = vector.load %arg2[%c0, %c0_0, %c0_1] : memref<1x8x32xbf16, #tpu.memory_space<vmem>>, vector<1x8x32xbf16>
    %1 = vector.shape_cast %0 : vector<1x8x32xbf16> to vector<8x32xbf16>
    %c0_2 = arith.constant 0 : index
    %c0_3 = arith.constant 0 : index
    %2 = vector.load %arg5[%c0_2, %c0_3] : memref<32x32xbf16, #tpu.memory_space<vmem>>, vector<32x32xbf16>
    %cst = arith.constant dense<0.000000e+00> : vector<8x32xf32>
    %3 = tpu.matmul %1, %2, %cst {dimension_numbers = #tpu.dot_dimension_numbers<[1], [0], [0], [1], [0, 0, 1, 1], [], []>} : vector<8x32xbf16>, vector<32x32xbf16>, vector<8x32xf32> -> vector<8x32xf32>
    %c0_4 = arith.constant 0 : index
    %c0_5 = arith.constant 0 : index
    %c0_6 = arith.constant 0 : index
    %4 = vector.load %arg3[%c0_4, %c0_5, %c0_6] : memref<1x8x32xbf16, #tpu.memory_space<vmem>>, vector<1x8x32xbf16>
    %5 = vector.shape_cast %4 : vector<1x8x32xbf16> to vector<8x32xbf16>
    %c0_7 = arith.constant 0 : index
    %c0_8 = arith.constant 0 : index
    %6 = vector.load %arg6[%c0_7, %c0_8] : memref<32x32xbf16, #tpu.memory_space<vmem>>, vector<32x32xbf16>
    %cst_9 = arith.constant dense<0.000000e+00> : vector<8x32xf32>
    %7 = tpu.matmul %5, %6, %cst_9 {dimension_numbers = #tpu.dot_dimension_numbers<[1], [0], [0], [1], [0, 0, 1, 1], [], []>} : vector<8x32xbf16>, vector<32x32xbf16>, vector<8x32xf32> -> vector<8x32xf32>
    %c0_10 = arith.constant 0 : index
    %c0_11 = arith.constant 0 : index
    %c0_12 = arith.constant 0 : index
    %8 = vector.load %arg4[%c0_10, %c0_11, %c0_12] : memref<1x8x32xbf16, #tpu.memory_space<vmem>>, vector<1x8x32xbf16>
    %9 = vector.shape_cast %8 : vector<1x8x32xbf16> to vector<8x32xbf16>
    %c0_13 = arith.constant 0 : index
    %c0_14 = arith.constant 0 : index
    %10 = vector.load %arg7[%c0_13, %c0_14] : memref<32x32xbf16, #tpu.memory_space<vmem>>, vector<32x32xbf16>
    %cst_15 = arith.constant dense<0.000000e+00> : vector<8x32xf32>
    %11 = tpu.matmul %9, %10, %cst_15 {dimension_numbers = #tpu.dot_dimension_numbers<[1], [0], [0], [1], [0, 0, 1, 1], [], []>} : vector<8x32xbf16>, vector<32x32xbf16>, vector<8x32xf32> -> vector<8x32xf32>
    %cst_16 = arith.constant 0.353553385 : f32
    %12 = vector.broadcast %cst_16 : f32 to vector<8x32xf32>
    %13 = arith.mulf %3, %12 : vector<8x32xf32>
    %14 = vector.shape_cast %13 : vector<8x32xf32> to vector<8x4x8xf32>
    %15 = arith.truncf %14 : vector<8x4x8xf32> to vector<8x4x8xbf16>
    %16 = tpu.transpose %15, [1, 0, 2] : vector<8x4x8xbf16> -> vector<4x8x8xbf16>
    %17 = vector.shape_cast %7 : vector<8x32xf32> to vector<8x4x8xf32>
    %18 = arith.truncf %17 : vector<8x4x8xf32> to vector<8x4x8xbf16>
    %19 = tpu.transpose %18, [1, 0, 2] : vector<8x4x8xbf16> -> vector<4x8x8xbf16>
    %20 = vector.shape_cast %11 : vector<8x32xf32> to vector<8x4x8xf32>
    %21 = arith.truncf %20 : vector<8x4x8xf32> to vector<8x4x8xbf16>
    %22 = tpu.transpose %21, [1, 0, 2] : vector<8x4x8xbf16> -> vector<4x8x8xbf16>
    "tpu.trace_start"() <{level = 10 : i32, message = "hqd,hkd->hqk"}> : () -> ()
    %cst_17 = arith.constant dense<0.000000e+00> : vector<4x8x8xf32>
    %23 = tpu.matmul %16, %19, %cst_17 {dimension_numbers = #tpu.dot_dimension_numbers<[2], [2], [1], [1], [0, 0, 0, 1, 1, 1], [0], [0]>} : vector<4x8x8xbf16>, vector<4x8x8xbf16>, vector<4x8x8xf32> -> vector<4x8x8xf32>
    "tpu.trace_stop"() : () -> ()
    %cst_18 = arith.constant dense<0xFF800000> : vector<4x8xf32>
    %24 = vector.multi_reduction <maximumf>, %23, %cst_18 [2] : vector<4x8x8xf32> to vector<4x8xf32>
    %25 = vector.shape_cast %24 : vector<4x8xf32> to vector<4x8x1xf32>
    %26 = vector.broadcast %25 : vector<4x8x1xf32> to vector<4x8x8xf32>
    %27 = arith.subf %23, %26 : vector<4x8x8xf32>
    %28 = math.exp %27 : vector<4x8x8xf32>
    %cst_19 = arith.constant dense<0.000000e+00> : vector<4x8xf32>
    %29 = vector.multi_reduction <add>, %28, %cst_19 [2] : vector<4x8x8xf32> to vector<4x8xf32>
    %30 = vector.shape_cast %29 : vector<4x8xf32> to vector<4x8x1xf32>
    %31 = tpu.reciprocal %30 {approx = true} : vector<4x8x1xf32> -> vector<4x8x1xf32>
    %32 = vector.broadcast %31 : vector<4x8x1xf32> to vector<4x8x8xf32>
    %33 = arith.mulf %28, %32 : vector<4x8x8xf32>
    %34 = arith.truncf %33 : vector<4x8x8xf32> to vector<4x8x8xbf16>
    "tpu.trace_start"() <{level = 10 : i32, message = "hqk,hkd->hqd"}> : () -> ()
    %cst_20 = arith.constant dense<0.000000e+00> : vector<4x8x8xf32>
    %35 = tpu.matmul %34, %22, %cst_20 {dimension_numbers = #tpu.dot_dimension_numbers<[2], [1], [1], [2], [0, 0, 0, 1, 1, 2], [0], [0]>} : vector<4x8x8xbf16>, vector<4x8x8xbf16>, vector<4x8x8xf32> -> vector<4x8x8xf32>
    "tpu.trace_stop"() : () -> ()
    %36 = tpu.transpose %35, [1, 0, 2] : vector<4x8x8xf32> -> vector<8x4x8xf32>
    %37 = vector.shape_cast %36 : vector<8x4x8xf32> to vector<8x32xf32>
    %38 = arith.truncf %37 : vector<8x32xf32> to vector<8x32xbf16>
    %c0_21 = arith.constant 0 : index
    %c0_22 = arith.constant 0 : index
    %39 = vector.load %arg8[%c0_21, %c0_22] : memref<32x32xbf16, #tpu.memory_space<vmem>>, vector<32x32xbf16>
    %cst_23 = arith.constant dense<0.000000e+00> : vector<8x32xf32>
    %40 = tpu.matmul %38, %39, %cst_23 {dimension_numbers = #tpu.dot_dimension_numbers<[1], [0], [0], [1], [0, 0, 1, 1], [], []>} : vector<8x32xbf16>, vector<32x32xbf16>, vector<8x32xf32> -> vector<8x32xf32>
    %c0_24 = arith.constant 0 : index
    %c0_25 = arith.constant 0 : index
    %41 = vector.load %arg9[%c0_24, %c0_25] : memref<1x32xf32, #tpu.memory_space<vmem>>, vector<1x32xf32>
    %42 = vector.broadcast %41 : vector<1x32xf32> to vector<8x32xf32>
    %43 = arith.addf %40, %42 : vector<8x32xf32>
    %c0_26 = arith.constant 0 : index
    %c0_27 = arith.constant 0 : index
    %c0_28 = arith.constant 0 : index
    %44 = vector.load %arg10[%c0_26, %c0_27, %c0_28] : memref<1x8x32xf32, #tpu.memory_space<vmem>>, vector<1x8x32xf32>
    %45 = vector.shape_cast %44 : vector<1x8x32xf32> to vector<8x32xf32>
    %46 = vector.shape_cast %43 : vector<8x32xf32> to vector<1x8x32xf32>
    tpu.vector_store %arg10[%c0_26, %c0_27, %c0_28], %46 {strides = array<i32>} : memref<1x8x32xf32, #tpu.memory_space<vmem>>, vector<1x8x32xf32>,
    return
  }
  func.func @transform_0(%arg0: i32, %arg1: i32) -> (i32, i32, i32) {
    %c0_i32 = arith.constant 0 : i32
    %c0_i32_0 = arith.constant 0 : i32
    return %arg0, %arg1, %c0_i32 : i32, i32, i32
  }
  func.func @transform_1(%arg0: i32, %arg1: i32) -> (i32, i32, i32) {
    %c0_i32 = arith.constant 0 : i32
    %c0_i32_0 = arith.constant 0 : i32
    %c0_i32_1 = arith.constant 0 : i32
    return %arg0, %c0_i32, %c0_i32_0 : i32, i32, i32
  }
  func.func @transform_2(%arg0: i32, %arg1: i32) -> (i32, i32, i32) {
    %c0_i32 = arith.constant 0 : i32
    %c0_i32_0 = arith.constant 0 : i32
    %c0_i32_1 = arith.constant 0 : i32
    return %arg0, %c0_i32, %c0_i32_0 : i32, i32, i32
  }
  func.func @transform_3(%arg0: i32, %arg1: i32) -> (i32, i32) {
    %c0_i32 = arith.constant 0 : i32
    %c0_i32_0 = arith.constant 0 : i32
    %c0_i32_1 = arith.constant 0 : i32
    return %c0_i32, %c0_i32_0 : i32, i32
  }
  func.func @transform_4(%arg0: i32, %arg1: i32) -> (i32, i32) {
    %c0_i32 = arith.constant 0 : i32
    %c0_i32_0 = arith.constant 0 : i32
    %c0_i32_1 = arith.constant 0 : i32
    return %c0_i32, %c0_i32_0 : i32, i32
  }
  func.func @transform_5(%arg0: i32, %arg1: i32) -> (i32, i32) {
    %c0_i32 = arith.constant 0 : i32
    %c0_i32_0 = arith.constant 0 : i32
    %c0_i32_1 = arith.constant 0 : i32
    return %c0_i32, %c0_i32_0 : i32, i32
  }
  func.func @transform_6(%arg0: i32, %arg1: i32) -> (i32, i32) {
    %c0_i32 = arith.constant 0 : i32
    %c0_i32_0 = arith.constant 0 : i32
    %c0_i32_1 = arith.constant 0 : i32
    return %c0_i32, %c0_i32_0 : i32, i32
  }
  func.func @transform_7(%arg0: i32, %arg1: i32) -> (i32, i32) {
    %c0_i32 = arith.constant 0 : i32
    %c0_i32_0 = arith.constant 0 : i32
    %c0_i32_1 = arith.constant 0 : i32
    return %c0_i32, %c0_i32_0 : i32, i32
  }
  func.func @transform_8(%arg0: i32, %arg1: i32) -> (i32, i32, i32) {
    %c0_i32 = arith.constant 0 : i32
    %c0_i32_0 = arith.constant 0 : i32
    return %arg0, %arg1, %c0_i32 : i32, i32, i32
  }
}

</mosaic_0001>

<llo_original>
// kernel: tpu_custom_call.1
$region0: #{tpu_custom_call.1}
  #allocation0 [shape = 'u32[]', space=smem, size = 0x4, offset = 0x4, fixed_abs, tag = 'smem constant byte address 0x4 - core index']
  #allocation1 [shape = 'u32[144,128]{1,0:T(1,128)}', space=vmem, size = 0x12000, scoped, tag = 'internal scratch']
  %s0 = inlined_call_operand.hbm [shape: bf16[2,8,32], index: 0, kind: input, shape index: {}]
  %s1 = inlined_call_operand.hbm [shape: bf16[2,8,32], index: 1, kind: input, shape index: {}]
  %s2 = inlined_call_operand.hbm [shape: bf16[2,8,32], index: 2, kind: input, shape index: {}]
  %s3 = inlined_call_operand.hbm [shape: bf16[32,32], index: 3, kind: input, shape index: {}]
  %s4 = inlined_call_operand.hbm [shape: bf16[32,32], index: 4, kind: input, shape index: {}]
  %s5 = inlined_call_operand.vmem [shape: bf16[32,32], index: 5, kind: input, shape index: {}]
  %s6 = inlined_call_operand.hbm [shape: bf16[32,32], index: 6, kind: input, shape index: {}]
  %s7 = inlined_call_operand.vmem [shape: f32[1,32], index: 7, kind: input, shape index: {}]
  %s8 = inlined_call_operand.hbm [shape: f32[2,8,32], index: 8, kind: output, shape index: {}]
  %s9 = sld [smem:[#allocation0]]
  $region89: #{tpu_custom_call.1} parent=0
    _
  %s11 = ssub.s32 1, %s9
  %s12 = scalar_select 0, %s11, %s9
  $region1: #{tpu_custom_call.1} parent=0
    #allocation2 [shape = 'u8[4096]{0}', space=vmem, size = 0x1000, scoped, tag = 'input window, operand 0']
    #allocation3 [shape = 's32[2]{0}', space=sflag, size = 0x8, scoped, tag = 'scoped memory for tpu_custom_call.1']
    #allocation4 [shape = 's32[2]{0}', space=sflag, size = 0x8, scoped, tag = 'scoped memory for tpu_custom_call.1']
    #allocation5 [shape = 'u8[4096]{0}', space=vmem, size = 0x1000, scoped, tag = 'input window, operand 1']
    #allocation6 [shape = 's32[2]{0}', space=sflag, size = 0x8, scoped, tag = 'scoped memory for tpu_custom_call.1']
    #allocation7 [shape = 'u8[4096]{0}', space=vmem, size = 0x1000, scoped, tag = 'input window, operand 2']
    #allocation8 [shape = 'u8[8192]{0}', space=vmem, size = 0x2000, scoped, tag = 'input window, operand 3, single buffered']
    #allocation9 [shape = 's32[1]{0}', space=sflag, size = 0x4, scoped, tag = 'scoped memory for tpu_custom_call.1']
    #allocation10 [shape = 'u8[8192]{0}', space=vmem, size = 0x2000, scoped, tag = 'input window, operand 4, single buffered']
    #allocation11 [shape = 'u8[8192]{0}', space=vmem, size = 0x2000, scoped, tag = 'input window, operand 6, single buffered']
    #allocation12 [shape = 's32[1]{0}', space=sflag, size = 0x4, scoped, tag = 'scoped memory for tpu_custom_call.1']
    #allocation13 [shape = 'u8[8192]{0}', space=vmem, size = 0x2000, scoped, tag = 'output window, operand 0']
    %13 = vsyncpa [#allocation3], 0
    %s14 = scalar_lea.sflag [#allocation3], 1
    %15 = vsyncpa %s14, 0
    %16 = vsyncpa [#allocation6], 0
    %s17 = scalar_lea.sflag [#allocation6], 1
    %18 = vsyncpa %s17, 0
    %19 = vsyncpa [#allocation9], 0
    %20 = vsyncpa [#allocation12], 0
    %21 = vsyncpa [#allocation4], 0
    %s22 = scalar_lea.sflag [#allocation4], 1
    %23 = vsyncpa %s22, 0
    loop: start=0, step=1, limit=4
    $region2: #{tpu_custom_call.1} parent=1 // loop_pre_header
      _
    $region3: #{tpu_custom_call.1} parent=1 // loop_header
      %s25 = sphi 0, %s29
      %p26 = scmp.ge.s32.totalorder %s25, 4
      %s32 = sphi 0, %s44
      %s33 = sphi 0, %s40
      %s34 = sphi 0, %s32
      %s35 = sphi 0, %s33
      %s36 = sphi 0, %s34
      %s37 = sphi 0, %s35
      %s49 = sphi 0, %s51
      %s52 = sphi 0, %s49
      %s53 = sphi 0, %s52
      %s69 = sphi 0, %s53
      %s75 = sphi 0, %s77
      %s78 = sphi 0, %s75
      %s79 = sphi 0, %s78
      %s95 = sphi 0, %s79
      %s101 = sphi 0, %s103
      %s104 = sphi 0, %s101
      %s105 = sphi 0, %s104
      %s121 = sphi 0, %s105
      %s125 = sphi 0, %s125
      %s127 = sphi 0, %s125
      %s128 = sphi 0, %s127
      %s142 = sphi 0, %s128
      %s146 = sphi 0, %s146
      %s148 = sphi 0, %s146
      %s149 = sphi 0, %s148
      %s163 = sphi 0, %s149
      %s167 = sphi 0, %s167
      %s169 = sphi 0, %s167
      %s170 = sphi 0, %s169
      %s184 = sphi 0, %s170
      %s188 = sphi 0, %s188
      %s190 = sphi 0, %s188
      %s191 = sphi 0, %s190
      %s205 = sphi 0, %s191
      %s209 = sphi 0, %s209
      %s211 = sphi 0, %s209
      %s212 = sphi 0, %s211
      %s226 = sphi 0, %s212
      %s234 = sphi 0, %s236
      %s237 = sphi 0, %s234
      %s238 = sphi 0, %s237
      %s254 = sphi 0, %s238
    $region4: #{tpu_custom_call.1} parent=1 // loop_header_branch
      %28 = sbr.rel (%p26) target = $region8
    $region5: #{tpu_custom_call.1} parent=1 // loop_body
      %s30 = ssub.s32 %s25, 1
      %s31 = ssub.s32 %s25, 2
      %s38 = sadd.s32 1, %s33
      %p39 = scmp.ge.s32.totalorder %s38, 1
      %s40 = scalar_select %p39, 0, %s38
      %s41 = sadd.s32 1, %s32
      %s42 = scalar_select %p39, %s41, %s32
      %p43 = scmp.ge.s32.totalorder %s42, 2
      %s44 = scalar_select %p43, 0, %s42
      %s45 = ssub.s32 %s32, %s44
      %s46 = ssub.s32 %s33, %s40
      %s47 = sor.u32 %s45, %s46
      %p48 = scmp.eq.s32.totalorder %s47, 0
      %s50 = sadd.s32 %s49, 1
      %s51 = scalar_select %p48, %s49, %s50
      %p54 = pneg %p48
      %p55 = scmp.eq.s32.totalorder %s25, 1
      %p56 = por %p54, %p55
      %p57 = scmp.ne.s32.totalorder %s49, %s52
      %p58 = scmp.eq.s32.totalorder %s25, 0
      %p59 = por %p57, %p58
      %p60 = scmp.ne.s32.totalorder %s49, %s52
      %p61 = scmp.eq.s32.totalorder %s30, 1
      %p62 = por %p60, %p61
      %p63 = scmp.ne.s32.totalorder %s52, %s53
      %p64 = scmp.eq.s32.totalorder %s30, 0
      %p65 = por %p63, %p64
      %p66 = scmp.ne.s32.totalorder %s52, %s53
      %p67 = scmp.eq.s32.totalorder %s31, 1
      %p68 = por %p66, %p67
      %p70 = scmp.ne.s32.totalorder %s53, %s69
      %p71 = scmp.eq.s32.totalorder %s31, 0
      %p72 = por %p70, %p71
      %s73 = ssub.s32 %s32, %s44
      %p74 = scmp.eq.s32.totalorder %s73, 0
      %s76 = sadd.s32 %s75, 1
      %s77 = scalar_select %p74, %s75, %s76
      %p80 = pneg %p74
      %p81 = scmp.eq.s32.totalorder %s25, 1
      %p82 = por %p80, %p81
      %p83 = scmp.ne.s32.totalorder %s75, %s78
      %p84 = scmp.eq.s32.totalorder %s25, 0
      %p85 = por %p83, %p84
      %p86 = scmp.ne.s32.totalorder %s75, %s78
      %p87 = scmp.eq.s32.totalorder %s30, 1
      %p88 = por %p86, %p87
      %p89 = scmp.ne.s32.totalorder %s78, %s79
      %p90 = scmp.eq.s32.totalorder %s30, 0
      %p91 = por %p89, %p90
      %p92 = scmp.ne.s32.totalorder %s78, %s79
      %p93 = scmp.eq.s32.totalorder %s31, 1
      %p94 = por %p92, %p93
      %p96 = scmp.ne.s32.totalorder %s79, %s95
      %p97 = scmp.eq.s32.totalorder %s31, 0
      %p98 = por %p96, %p97
      %s99 = ssub.s32 %s32, %s44
      %p100 = scmp.eq.s32.totalorder %s99, 0
      %s102 = sadd.s32 %s101, 1
      %s103 = scalar_select %p100, %s101, %s102
      %p106 = pneg %p100
      %p107 = scmp.eq.s32.totalorder %s25, 1
      %p108 = por %p106, %p107
      %p109 = scmp.ne.s32.totalorder %s101, %s104
      %p110 = scmp.eq.s32.totalorder %s25, 0
      %p111 = por %p109, %p110
      %p112 = scmp.ne.s32.totalorder %s101, %s104
      %p113 = scmp.eq.s32.totalorder %s30, 1
      %p114 = por %p112, %p113
      %p115 = scmp.ne.s32.totalorder %s104, %s105
      %p116 = scmp.eq.s32.totalorder %s30, 0
      %p117 = por %p115, %p116
      %p118 = scmp.ne.s32.totalorder %s104, %s105
      %p119 = scmp.eq.s32.totalorder %s31, 1
      %p120 = por %p118, %p119
      %p122 = scmp.ne.s32.totalorder %s105, %s121
      %p123 = scmp.eq.s32.totalorder %s31, 0
      %p124 = por %p122, %p123
      %s126 = sadd.s32 %s125, 1
      %p129 = scmp.eq.s32.totalorder %s25, 1
      %p130 = scmp.ne.s32.totalorder %s125, %s127
      %p131 = scmp.eq.s32.totalorder %s25, 0
      %p132 = por %p130, %p131
      %p133 = scmp.ne.s32.totalorder %s125, %s127
      %p134 = scmp.eq.s32.totalorder %s30, 1
      %p135 = por %p133, %p134
      %p136 = scmp.ne.s32.totalorder %s127, %s128
      %p137 = scmp.eq.s32.totalorder %s30, 0
      %p138 = por %p136, %p137
      %p139 = scmp.ne.s32.totalorder %s127, %s128
      %p140 = scmp.eq.s32.totalorder %s31, 1
      %p141 = por %p139, %p140
      %p143 = scmp.ne.s32.totalorder %s128, %s142
      %p144 = scmp.eq.s32.totalorder %s31, 0
      %p145 = por %p143, %p144
      %s147 = sadd.s32 %s146, 1
      %p150 = scmp.eq.s32.totalorder %s25, 1
      %p151 = scmp.ne.s32.totalorder %s146, %s148
      %p152 = scmp.eq.s32.totalorder %s25, 0
      %p153 = por %p151, %p152
      %p154 = scmp.ne.s32.totalorder %s146, %s148
      %p155 = scmp.eq.s32.totalorder %s30, 1
      %p156 = por %p154, %p155
      %p157 = scmp.ne.s32.totalorder %s148, %s149
      %p158 = scmp.eq.s32.totalorder %s30, 0
      %p159 = por %p157, %p158
      %p160 = scmp.ne.s32.totalorder %s148, %s149
      %p161 = scmp.eq.s32.totalorder %s31, 1
      %p162 = por %p160, %p161
      %p164 = scmp.ne.s32.totalorder %s149, %s163
      %p165 = scmp.eq.s32.totalorder %s31, 0
      %p166 = por %p164, %p165
      %s168 = sadd.s32 %s167, 1
      %p171 = scmp.eq.s32.totalorder %s25, 1
      %p172 = scmp.ne.s32.totalorder %s167, %s169
      %p173 = scmp.eq.s32.totalorder %s25, 0
      %p174 = por %p172, %p173
      %p175 = scmp.ne.s32.totalorder %s167, %s169
      %p176 = scmp.eq.s32.totalorder %s30, 1
      %p177 = por %p175, %p176
      %p178 = scmp.ne.s32.totalorder %s169, %s170
      %p179 = scmp.eq.s32.totalorder %s30, 0
      %p180 = por %p178, %p179
      %p181 = scmp.ne.s32.totalorder %s169, %s170
      %p182 = scmp.eq.s32.totalorder %s31, 1
      %p183 = por %p181, %p182
      %p185 = scmp.ne.s32.totalorder %s170, %s184
      %p186 = scmp.eq.s32.totalorder %s31, 0
      %p187 = por %p185, %p186
      %s189 = sadd.s32 %s188, 1
      %p192 = scmp.eq.s32.totalorder %s25, 1
      %p193 = scmp.ne.s32.totalorder %s188, %s190
      %p194 = scmp.eq.s32.totalorder %s25, 0
      %p195 = por %p193, %p194
      %p196 = scmp.ne.s32.totalorder %s188, %s190
      %p197 = scmp.eq.s32.totalorder %s30, 1
      %p198 = por %p196, %p197
      %p199 = scmp.ne.s32.totalorder %s190, %s191
      %p200 = scmp.eq.s32.totalorder %s30, 0
      %p201 = por %p199, %p200
      %p202 = scmp.ne.s32.totalorder %s190, %s191
      %p203 = scmp.eq.s32.totalorder %s31, 1
      %p204 = por %p202, %p203
      %p206 = scmp.ne.s32.totalorder %s191, %s205
      %p207 = scmp.eq.s32.totalorder %s31, 0
      %p208 = por %p206, %p207
      %s210 = sadd.s32 %s209, 1
      %p213 = scmp.eq.s32.totalorder %s25, 1
      %p214 = scmp.ne.s32.totalorder %s209, %s211
      %p215 = scmp.eq.s32.totalorder %s25, 0
      %p216 = por %p214, %p215
      %p217 = scmp.ne.s32.totalorder %s209, %s211
      %p218 = scmp.eq.s32.totalorder %s30, 1
      %p219 = por %p217, %p218
      %p220 = scmp.ne.s32.totalorder %s211, %s212
      %p221 = scmp.eq.s32.totalorder %s30, 0
      %p222 = por %p220, %p221
      %p223 = scmp.ne.s32.totalorder %s211, %s212
      %p224 = scmp.eq.s32.totalorder %s31, 1
      %p225 = por %p223, %p224
      %p227 = scmp.ne.s32.totalorder %s212, %s226
      %p228 = scmp.eq.s32.totalorder %s31, 0
      %p229 = por %p227, %p228
      %s230 = ssub.s32 %s32, %s44
      %s231 = ssub.s32 %s33, %s40
      %s232 = sor.u32 %s230, %s231
      %p233 = scmp.eq.s32.totalorder %s232, 0
      %s235 = sadd.s32 %s234, 1
      %s236 = scalar_select %p233, %s234, %s235
      %p239 = pneg %p233
      %p240 = scmp.eq.s32.totalorder %s25, 1
      %p241 = por %p239, %p240
      %p242 = scmp.ne.s32.totalorder %s234, %s237
      %p243 = scmp.eq.s32.totalorder %s25, 0
      %p244 = por %p242, %p243
      %p245 = scmp.ne.s32.totalorder %s234, %s237
      %p246 = scmp.eq.s32.totalorder %s30, 1
      %p247 = por %p245, %p246
      %p248 = scmp.ne.s32.totalorder %s237, %s238
      %p249 = scmp.eq.s32.totalorder %s30, 0
      %p250 = por %p248, %p249
      %p251 = scmp.ne.s32.totalorder %s237, %s238
      %p252 = scmp.eq.s32.totalorder %s31, 1
      %p253 = por %p251, %p252
      %p255 = scmp.ne.s32.totalorder %s238, %s254
      %p256 = scmp.eq.s32.totalorder %s31, 0
      %p257 = por %p255, %p256
      %p258 = scmp.le.s32.totalorder 1, %s25
      %p259 = scmp.lt.s32.totalorder %s25, 3
      %p260 = pnand %p258, %p259
      %p261 = pneg %p260
      // Predicated region
      $region9: #{tpu_custom_call.1} parent=5 // pred_check
        _
      $region10: #{tpu_custom_call.1} parent=5 // pred_check_branch
        %263 = sbr.rel (%p260) target = $region12
      $region11: #{tpu_custom_call.1} parent=5 // pred_region
        %s264 = ssub.s32 %s25, 1
        // Predicated region
        $region13: #{tpu_custom_call.1} parent=11 // pred_check
          %p265 = pneg %p138
        $region14: #{tpu_custom_call.1} parent=11 // pred_check_branch
          %267 = sbr.rel (%p265) target = $region16
        $region15: #{tpu_custom_call.1} parent=11 // pred_region
          %s269 = ssub.s32 256, 256
          %270 = vsyncadd [#allocation9], %s269
          %s271 = sshll.u32 [#allocation8], 4
          %s272 = int_to_ptr.vmem [resolvable:$true] %s271
          %277 = dma.hbm_to_vmem [thread:$0]  %s3, 256, %s272, [#allocation9], 64, 64, 4
        $region16: #{tpu_custom_call.1} parent=11 // pred_fallthru
          _
        // Predicated region
        $region17: #{tpu_custom_call.1} parent=11 // pred_check
          %p278 = pneg %p159
        $region18: #{tpu_custom_call.1} parent=11 // pred_check_branch
          %280 = sbr.rel (%p278) target = $region20
        $region19: #{tpu_custom_call.1} parent=11 // pred_region
          %s282 = ssub.s32 256, 256
          %283 = vsyncadd [#allocation9], %s282
          %s284 = sshll.u32 [#allocation10], 4
          %s285 = int_to_ptr.vmem [resolvable:$true] %s284
          %290 = dma.hbm_to_vmem [thread:$0]  %s4, 256, %s285, [#allocation9], 64, 64, 4
        $region20: #{tpu_custom_call.1} parent=11 // pred_fallthru
          _
        // Predicated region
        $region21: #{tpu_custom_call.1} parent=11 // pred_check
          %p291 = pneg %p180
        $region22: #{tpu_custom_call.1} parent=11 // pred_check_branch
          %293 = sbr.rel (%p291) target = $region24
        $region23: #{tpu_custom_call.1} parent=11 // pred_region
          _
        $region24: #{tpu_custom_call.1} parent=11 // pred_fallthru
          _
        // Predicated region
        $region25: #{tpu_custom_call.1} parent=11 // pred_check
          %p294 = pneg %p201
        $region26: #{tpu_custom_call.1} parent=11 // pred_check_branch
          %296 = sbr.rel (%p294) target = $region28
        $region27: #{tpu_custom_call.1} parent=11 // pred_region
          %s298 = ssub.s32 256, 256
          %299 = vsyncadd [#allocation12], %s298
          %s300 = sshll.u32 [#allocation11], 4
          %s301 = int_to_ptr.vmem [resolvable:$true] %s300
          %306 = dma.hbm_to_vmem [thread:$0]  %s6, 256, %s301, [#allocation12], 64, 64, 4
        $region28: #{tpu_custom_call.1} parent=11 // pred_fallthru
          _
        // Predicated region
        $region29: #{tpu_custom_call.1} parent=11 // pred_check
          %p307 = pneg %p222
        $region30: #{tpu_custom_call.1} parent=11 // pred_check_branch
          %309 = sbr.rel (%p307) target = $region32
        $region31: #{tpu_custom_call.1} parent=11 // pred_region
          _
        $region32: #{tpu_custom_call.1} parent=11 // pred_fallthru
          _
      $region12: #{tpu_custom_call.1} parent=5 // pred_fallthru
        _
      %p310 = scmp.lt.s32.totalorder %s25, 2
      // Predicated region
      $region33: #{tpu_custom_call.1} parent=5 // pred_check
        %p311 = pneg %p310
      $region34: #{tpu_custom_call.1} parent=5 // pred_check_branch
        %313 = sbr.rel (%p311) target = $region36
      $region35: #{tpu_custom_call.1} parent=5 // pred_region
        // Predicated region
        $region37: #{tpu_custom_call.1} parent=35 // pred_check
          %p314 = pneg %p59
        $region38: #{tpu_custom_call.1} parent=35 // pred_check_branch
          %316 = sbr.rel (%p314) target = $region40
        $region39: #{tpu_custom_call.1} parent=35 // pred_region
          %s317 = sand.u32 %s49, 1
          %s318 = scalar_lea.sflag [#allocation3], %s317
          %s319 = sand.u32 %s49, 1
          %s320 = smul.addr %s319, 4
          %s321 = scalar_lea.vmem [#allocation2], %s320
          %s323 = ssub.s32 64, 64
          %324 = vsyncadd %s318, %s323
          %s325 = sadd.s32 %s33, %s32
          %s326 = smul.addr %s325, 64
          %s327 = scalar_lea.hbm %s0, %s326
          %s329 = sshll.u32 %s321, 4
          %s330 = int_to_ptr.vmem [resolvable:$true] %s329
          %332 = dma.hbm_to_vmem [thread:$0]  %s327, 64, %s330, %s318
        $region40: #{tpu_custom_call.1} parent=35 // pred_fallthru
          _
        // Predicated region
        $region41: #{tpu_custom_call.1} parent=35 // pred_check
          %p333 = pneg %p85
        $region42: #{tpu_custom_call.1} parent=35 // pred_check_branch
          %335 = sbr.rel (%p333) target = $region44
        $region43: #{tpu_custom_call.1} parent=35 // pred_region
          %s336 = sand.u32 %s25, 1
          %s337 = scalar_lea.sflag [#allocation6], %s336
          %s338 = sand.u32 %s75, 1
          %s339 = smul.addr %s338, 4
          %s340 = scalar_lea.vmem [#allocation5], %s339
          %s342 = ssub.s32 64, 64
          %343 = vsyncadd %s337, %s342
          %s344 = smul.addr %s32, 64
          %s345 = scalar_lea.hbm %s1, %s344
          %s347 = sshll.u32 %s340, 4
          %s348 = int_to_ptr.vmem [resolvable:$true] %s347
          %350 = dma.hbm_to_vmem [thread:$0]  %s345, 64, %s348, %s337
        $region44: #{tpu_custom_call.1} parent=35 // pred_fallthru
          _
        // Predicated region
        $region45: #{tpu_custom_call.1} parent=35 // pred_check
          %p351 = pneg %p111
        $region46: #{tpu_custom_call.1} parent=35 // pred_check_branch
          %353 = sbr.rel (%p351) target = $region48
        $region47: #{tpu_custom_call.1} parent=35 // pred_region
          %s354 = sand.u32 %s25, 1
          %s355 = scalar_lea.sflag [#allocation6], %s354
          %s356 = sand.u32 %s101, 1
          %s357 = smul.addr %s356, 4
          %s358 = scalar_lea.vmem [#allocation7], %s357
          %s360 = ssub.s32 64, 64
          %361 = vsyncadd %s355, %s360
          %s362 = smul.addr %s32, 64
          %s363 = scalar_lea.hbm %s2, %s362
          %s365 = sshll.u32 %s358, 4
          %s366 = int_to_ptr.vmem [resolvable:$true] %s365
          %368 = dma.hbm_to_vmem [thread:$0]  %s363, 64, %s366, %s355
        $region48: #{tpu_custom_call.1} parent=35 // pred_fallthru
          _
      $region36: #{tpu_custom_call.1} parent=5 // pred_fallthru
        _
      %p369 = scmp.le.s32.totalorder 1, %s25
      %p370 = scmp.lt.s32.totalorder %s25, 3
      %p371 = pnand %p369, %p370
      %p372 = pneg %p371
      // Predicated region
      $region49: #{tpu_custom_call.1} parent=5 // pred_check
        _
      $region50: #{tpu_custom_call.1} parent=5 // pred_check_branch
        %374 = sbr.rel (%p371) target = $region52
      $region51: #{tpu_custom_call.1} parent=5 // pred_region
        %s375 = ssub.s32 %s25, 1
        %s376 = sand.u32 %s52, 1
        %s377 = scalar_lea.sflag [#allocation3], %s376
        %s378 = sand.u32 %s52, 1
        %s379 = smul.addr %s378, 4
        %s380 = scalar_lea.vmem [#allocation2], %s379
        // Predicated region
        $region53: #{tpu_custom_call.1} parent=51 // pred_check
          %p381 = pneg %p65
        $region54: #{tpu_custom_call.1} parent=51 // pred_check_branch
          %383 = sbr.rel (%p381) target = $region56
        $region55: #{tpu_custom_call.1} parent=51 // pred_region
          %384 = dma.done %s377, 64
        $region56: #{tpu_custom_call.1} parent=51 // pred_fallthru
          _
        %s385 = sand.u32 %s30, 1
        %s386 = scalar_lea.sflag [#allocation6], %s385
        %s387 = sand.u32 %s78, 1
        %s388 = smul.addr %s387, 4
        %s389 = scalar_lea.vmem [#allocation5], %s388
        // Predicated region
        $region57: #{tpu_custom_call.1} parent=51 // pred_check
          %p390 = pneg %p91
        $region58: #{tpu_custom_call.1} parent=51 // pred_check_branch
          %392 = sbr.rel (%p390) target = $region60
        $region59: #{tpu_custom_call.1} parent=51 // pred_region
          %393 = dma.done %s386, 64
        $region60: #{tpu_custom_call.1} parent=51 // pred_fallthru
          _
        %s394 = sand.u32 %s30, 1
        %s395 = scalar_lea.sflag [#allocation6], %s394
        %s396 = sand.u32 %s104, 1
        %s397 = smul.addr %s396, 4
        %s398 = scalar_lea.vmem [#allocation7], %s397
        // Predicated region
        $region61: #{tpu_custom_call.1} parent=51 // pred_check
          %p399 = pneg %p117
        $region62: #{tpu_custom_call.1} parent=51 // pred_check_branch
          %401 = sbr.rel (%p399) target = $region64
        $region63: #{tpu_custom_call.1} parent=51 // pred_region
          %402 = dma.done %s395, 64
        $region64: #{tpu_custom_call.1} parent=51 // pred_fallthru
          _
        // Predicated region
        $region65: #{tpu_custom_call.1} parent=51 // pred_check
          %p403 = pneg %p138
        $region66: #{tpu_custom_call.1} parent=51 // pred_check_branch
          %405 = sbr.rel (%p403) target = $region68
        $region67: #{tpu_custom_call.1} parent=51 // pred_region
          %406 = dma.done [#allocation9], 256
        $region68: #{tpu_custom_call.1} parent=51 // pred_fallthru
          _
        // Predicated region
        $region69: #{tpu_custom_call.1} parent=51 // pred_check
          %p407 = pneg %p159
        $region70: #{tpu_custom_call.1} parent=51 // pred_check_branch
          %409 = sbr.rel (%p407) target = $region72
        $region71: #{tpu_custom_call.1} parent=51 // pred_region
          %410 = dma.done [#allocation9], 256
        $region72: #{tpu_custom_call.1} parent=51 // pred_fallthru
          _
        // Predicated region
        $region73: #{tpu_custom_call.1} parent=51 // pred_check
          %p411 = pneg %p201
        $region74: #{tpu_custom_call.1} parent=51 // pred_check_branch
          %413 = sbr.rel (%p411) target = $region76
        $region75: #{tpu_custom_call.1} parent=51 // pred_region
          %414 = dma.done [#allocation12], 256
        $region76: #{tpu_custom_call.1} parent=51 // pred_fallthru
          _
        %s415 = sand.u32 %s52, 1
        %s416 = scalar_lea.sflag [#allocation3], %s415
        %s417 = sand.u32 %s52, 1
        %s418 = smul.addr %s417, 4
        %s419 = scalar_lea.vmem [#allocation2], %s418
        %p420 = pneg %p65
        %p421 = pneg %p62
        %s422 = sand.u32 %s30, 1
        %s423 = scalar_lea.sflag [#allocation6], %s422
        %s424 = sand.u32 %s78, 1
        %s425 = smul.addr %s424, 4
        %s426 = scalar_lea.vmem [#allocation5], %s425
        %p427 = pneg %p91
        %p428 = pneg %p88
        %s429 = sand.u32 %s30, 1
        %s430 = scalar_lea.sflag [#allocation6], %s429
        %s431 = sand.u32 %s104, 1
        %s432 = smul.addr %s431, 4
        %s433 = scalar_lea.vmem [#allocation7], %s432
        %p434 = pneg %p117
        %p435 = pneg %p114
        %p436 = pneg %p138
        %p437 = pneg %p135
        %p438 = pneg %p159
        %p439 = pneg %p156
        %p440 = pneg %p180
        %p441 = pneg %p177
        %p442 = pneg %p201
        %p443 = pneg %p198
        %p444 = pneg %p222
        %p445 = pneg %p219
        %p446 = pneg %p250
        %p447 = pneg %p247
        %s448 = sand.u32 %s237, 1
        %s449 = scalar_lea.sflag [#allocation4], %s448
        %s450 = sand.u32 %s237, 1
        %s451 = smul.addr %s450, 8
        %s452 = scalar_lea.vmem [#allocation13], %s451
        %v454 = vld [vmem:[%s380] sm:$0xf]
        %v455 = vld [vmem:[#allocation8] sm:$0xf]
        %v456 = vld [vmem:[#allocation8 + $0x4] sm:$0xf]
        %v457 = vld [vmem:[#allocation8 + $0x8] sm:$0xf]
        %v458 = vld [vmem:[#allocation8 + $0xc] sm:$0xf]
        %v463 = vunpack.c.l.b16 %v455
        %v464 = vunpack.c.l.b16 %v456
        %v465 = vunpack.c.l.b16 %v457
        %v466 = vunpack.c.l.b16 %v458
        %v467 = vpack.c.b16 %v464, %v463
        %v468 = vpack.c.b16 %v466, %v465
        %vm471 = vcmask 261120
        %v473 = vsel %vm471, %v454, 0
        %475 = vmatprep.subr.bf16.mxu0 0
        %476 = vmatpush1.bf16.msra.mxu0 %v467
        %477 = vmatprep.subr.bf16.mxu0 0
        %478 = vmatpush1.bf16.msra.mxu0 %v468
        %479 = vmatprep.subr.bf16.mxu0 0
        %480 = vmatpush1.bf16.msra.mxu0 0
        %481 = vmatprep.subr.bf16.mxu0 0
        %482 = vmatpush1.bf16.msra.mxu0 0
        %483 = vmatprep.subr.bf16.mxu0 0
        %484 = vmatpush1.bf16.msra.mxu0 0
        %485 = vmatprep.subr.bf16.mxu0 0
        %486 = vmatpush1.bf16.msra.mxu0 0
        %487 = vmatprep.subr.bf16.mxu0 0
        %488 = vmatpush1.bf16.msra.mxu0 0
        %489 = vmatprep.subr.bf16.mxu0 0
        %490 = vmatpush1.bf16.msra.mxu0 0
        %491 = vmatprep.subr.bf16.mxu0 0
        %492 = vmatpush1.bf16.msra.mxu0 0
        %493 = vmatprep.subr.bf16.mxu0 0
        %494 = vmatpush1.bf16.msra.mxu0 0
        %495 = vmatprep.subr.bf16.mxu0 0
        %496 = vmatpush1.bf16.msra.mxu0 0
        %497 = vmatprep.subr.bf16.mxu0 0
        %498 = vmatpush1.bf16.msra.mxu0 0
        %499 = vmatprep.subr.bf16.mxu0 0
        %500 = vmatpush1.bf16.msra.mxu0 0
        %501 = vmatprep.subr.bf16.mxu0 0
        %502 = vmatpush1.bf16.msra.mxu0 0
        %503 = vmatprep.subr.bf16.mxu0 0
        %504 = vmatpush1.bf16.msra.mxu0 0
        %505 = vmatprep.subr.bf16.mxu0 0
        %506 = vmatpush1.bf16.msra.mxu0 0
        %507 = vmatprep.mubr.bf16.mxu0 0
        %508 = vmatmul.mubr.bf16.gmra.mrb[0].mxu0 %v473
        %v509 = vpop.f32.mrb[0].mxu0
        %v510 = vadd.f32 0.0, %v509
        %v511 = vpop.f32.mrb[0].mxu0
        %v512 = vpop.f32.mrb[0].mxu0
        %v513 = vpop.f32.mrb[0].mxu0
        %514 = vdwg.mxu0
        %v515 = vld [vmem:[%s389] sm:$0xf]
        %v516 = vld [vmem:[#allocation10] sm:$0xf]
        %v517 = vld [vmem:[#allocation10 + $0x4] sm:$0xf]
        %v518 = vld [vmem:[#allocation10 + $0x8] sm:$0xf]
        %v519 = vld [vmem:[#allocation10 + $0xc] sm:$0xf]
        %v524 = vunpack.c.l.b16 %v516
        %v525 = vunpack.c.l.b16 %v517
        %v526 = vunpack.c.l.b16 %v518
        %v527 = vunpack.c.l.b16 %v519
        %v528 = vpack.c.b16 %v525, %v524
        %v529 = vpack.c.b16 %v527, %v526
        %v533 = vsel %vm471, %v515, 0
        %535 = vmatprep.subr.bf16.mxu0 0
        %536 = vmatpush1.bf16.msra.mxu0 %v528
        %537 = vmatprep.subr.bf16.mxu0 0
        %538 = vmatpush1.bf16.msra.mxu0 %v529
        %539 = vmatprep.subr.bf16.mxu0 0
        %540 = vmatpush1.bf16.msra.mxu0 0
        %541 = vmatprep.subr.bf16.mxu0 0
        %542 = vmatpush1.bf16.msra.mxu0 0
        %543 = vmatprep.subr.bf16.mxu0 0
        %544 = vmatpush1.bf16.msra.mxu0 0
        %545 = vmatprep.subr.bf16.mxu0 0
        %546 = vmatpush1.bf16.msra.mxu0 0
        %547 = vmatprep.subr.bf16.mxu0 0
        %548 = vmatpush1.bf16.msra.mxu0 0
        %549 = vmatprep.subr.bf16.mxu0 0
        %550 = vmatpush1.bf16.msra.mxu0 0
        %551 = vmatprep.subr.bf16.mxu0 0
        %552 = vmatpush1.bf16.msra.mxu0 0
        %553 = vmatprep.subr.bf16.mxu0 0
        %554 = vmatpush1.bf16.msra.mxu0 0
        %555 = vmatprep.subr.bf16.mxu0 0
        %556 = vmatpush1.bf16.msra.mxu0 0
        %557 = vmatprep.subr.bf16.mxu0 0
        %558 = vmatpush1.bf16.msra.mxu0 0
        %559 = vmatprep.subr.bf16.mxu0 0
        %560 = vmatpush1.bf16.msra.mxu0 0
        %561 = vmatprep.subr.bf16.mxu0 0
        %562 = vmatpush1.bf16.msra.mxu0 0
        %563 = vmatprep.subr.bf16.mxu0 0
        %564 = vmatpush1.bf16.msra.mxu0 0
        %565 = vmatprep.subr.bf16.mxu0 0
        %566 = vmatpush1.bf16.msra.mxu0 0
        %567 = vmatprep.mubr.bf16.mxu0 0
        %568 = vmatmul.mubr.bf16.gmra.mrb[0].mxu0 %v533
        %v569 = vpop.f32.mrb[0].mxu0
        %v570 = vadd.f32 0.0, %v569
        %v571 = vpop.f32.mrb[0].mxu0
        %v572 = vpop.f32.mrb[0].mxu0
        %v573 = vpop.f32.mrb[0].mxu0
        %574 = vdwg.mxu0
        %v575 = vld [vmem:[%s398] sm:$0xf]
        %v576 = vld [vmem:[%s5] sm:$0xf]
        %v577 = vld [vmem:[%s5 + $0x4] sm:$0xf]
        %v578 = vld [vmem:[%s5 + $0x8] sm:$0xf]
        %v579 = vld [vmem:[%s5 + $0xc] sm:$0xf]
        %v584 = vunpack.c.l.b16 %v576
        %v585 = vunpack.c.l.b16 %v577
        %v586 = vunpack.c.l.b16 %v578
        %v587 = vunpack.c.l.b16 %v579
        %v588 = vpack.c.b16 %v585, %v584
        %v589 = vpack.c.b16 %v587, %v586
        %v593 = vsel %vm471, %v575, 0
        %595 = vmatprep.subr.bf16.mxu0 0
        %596 = vmatpush1.bf16.msra.mxu0 %v588
        %597 = vmatprep.subr.bf16.mxu0 0
        %598 = vmatpush1.bf16.msra.mxu0 %v589
        %599 = vmatprep.subr.bf16.mxu0 0
        %600 = vmatpush1.bf16.msra.mxu0 0
        %601 = vmatprep.subr.bf16.mxu0 0
        %602 = vmatpush1.bf16.msra.mxu0 0
        %603 = vmatprep.subr.bf16.mxu0 0
        %604 = vmatpush1.bf16.msra.mxu0 0
        %605 = vmatprep.subr.bf16.mxu0 0
        %606 = vmatpush1.bf16.msra.mxu0 0
        %607 = vmatprep.subr.bf16.mxu0 0
        %608 = vmatpush1.bf16.msra.mxu0 0
        %609 = vmatprep.subr.bf16.mxu0 0
        %610 = vmatpush1.bf16.msra.mxu0 0
        %611 = vmatprep.subr.bf16.mxu0 0
        %612 = vmatpush1.bf16.msra.mxu0 0
        %613 = vmatprep.subr.bf16.mxu0 0
        %614 = vmatpush1.bf16.msra.mxu0 0
        %615 = vmatprep.subr.bf16.mxu0 0
        %616 = vmatpush1.bf16.msra.mxu0 0
        %617 = vmatprep.subr.bf16.mxu0 0
        %618 = vmatpush1.bf16.msra.mxu0 0
        %619 = vmatprep.subr.bf16.mxu0 0
        %620 = vmatpush1.bf16.msra.mxu0 0
        %621 = vmatprep.subr.bf16.mxu0 0
        %622 = vmatpush1.bf16.msra.mxu0 0
        %623 = vmatprep.subr.bf16.mxu0 0
        %624 = vmatpush1.bf16.msra.mxu0 0
        %625 = vmatprep.subr.bf16.mxu0 0
        %626 = vmatpush1.bf16.msra.mxu0 0
        %627 = vmatprep.mubr.bf16.mxu0 0
        %628 = vmatmul.mubr.bf16.gmra.mrb[0].mxu0 %v593
        %v629 = vpop.f32.mrb[0].mxu0
        %v630 = vadd.f32 0.0, %v629
        %v631 = vpop.f32.mrb[0].mxu0
        %v632 = vpop.f32.mrb[0].mxu0
        %v633 = vpop.f32.mrb[0].mxu0
        %634 = vdwg.mxu0
        %v635 = vmul.f32 %v510, 0.35355338
        %637 = vrot.lane.b32.xlu0 %v635, 120
        %v638 = vpop.permute.xlu0 %637
        %640 = vrot.lane.b32.xlu0 %v635, 112
        %v641 = vpop.permute.xlu0 %640
        %643 = vrot.lane.b32.xlu0 %v635, 104
        %v644 = vpop.permute.xlu0 %643
        %v646 = vcombine.low %v635, %v641
        %v647 = vcombine.high %v635, %v641
        %v649 = vunpack.c.l.s4 1983009808
        %v650 = vunpack.c.0.s8 %v649
        %v651 = vlaneseq
        %v652 = vshrl.u32 %v651, 7
        %v653 = vsub.s32 %v650, %v652
        %v654 = vrot.slane %v646, %v653
        %v656 = vunpack.c.l.s4 1983009808
        %v657 = vunpack.c.0.s8 %v656
        %v658 = vlaneseq
        %v659 = vshrl.u32 %v658, 7
        %v660 = vsub.s32 %v657, %v659
        %v661 = vrot.slane %v647, %v660
        %v662 = vcombine.low %v638, %v644
        %v663 = vcombine.high %v638, %v644
        %v665 = vunpack.c.l.s4 1983009808
        %v666 = vunpack.c.0.s8 %v665
        %v667 = vlaneseq
        %v668 = vshrl.u32 %v667, 7
        %v669 = vsub.s32 %v666, %v668
        %v670 = vrot.slane %v662, %v669
        %v672 = vunpack.c.l.s4 1983009808
        %v673 = vunpack.c.0.s8 %v672
        %v674 = vlaneseq
        %v675 = vshrl.u32 %v674, 7
        %v676 = vsub.s32 %v673, %v675
        %v677 = vrot.slane %v663, %v676
        %v678 = vcombine.low %v654, %v670
        %v679 = vcombine.high %v654, %v670
        %v681 = vunpack.c.l.s4 1934713408
        %v682 = vunpack.c.0.s8 %v681
        %v683 = vlaneseq
        %v684 = vshrl.u32 %v683, 7
        %v685 = vsub.s32 %v682, %v684
        %v686 = vrot.slane %v678, %v685
        %v688 = vunpack.c.l.s4 1934713408
        %v689 = vunpack.c.0.s8 %v688
        %v690 = vlaneseq
        %v691 = vshrl.u32 %v690, 7
        %v692 = vsub.s32 %v689, %v691
        %v693 = vrot.slane %v679, %v692
        %v694 = vcombine.low %v661, %v677
        %v695 = vcombine.high %v661, %v677
        %v697 = vunpack.c.l.s4 1934713408
        %v698 = vunpack.c.0.s8 %v697
        %v699 = vlaneseq
        %v700 = vshrl.u32 %v699, 7
        %v701 = vsub.s32 %v698, %v700
        %v702 = vrot.slane %v694, %v701
        %v704 = vunpack.c.l.s4 1934713408
        %v705 = vunpack.c.0.s8 %v704
        %v706 = vlaneseq
        %v707 = vshrl.u32 %v706, 7
        %v708 = vsub.s32 %v705, %v707
        %v709 = vrot.slane %v695, %v708
        %v710 = vcombine.high %v686, 0.0
        %v711 = vcombine.high %v693, 0.0
        %v712 = vcombine.high %v702, 0.0
        %v713 = vcombine.high %v709, 0.0
        %v714 = vpack.c.bf16 %v686, %v686
        %v715 = vpack.c.bf16 %v710, %v710
        %v716 = vpack.c.bf16 %v693, %v693
        %v717 = vpack.c.bf16 %v711, %v711
        %v718 = vpack.c.bf16 %v702, %v702
        %v719 = vpack.c.bf16 %v712, %v712
        %v720 = vpack.c.bf16 %v709, %v709
        %v721 = vpack.c.bf16 %v713, %v713
        %v722 = vcombine.low %v714, %v718
        %v724 = vunpack.c.l.s4 1983009808
        %v725 = vunpack.c.0.s8 %v724
        %v726 = vlaneseq
        %v727 = vshrl.u32 %v726, 7
        %v728 = vsub.s32 %v725, %v727
        %v729 = vrot.slane %v722, %v728
        %v730 = vcombine.low %v716, %v720
        %v732 = vunpack.c.l.s4 1983009808
        %v733 = vunpack.c.0.s8 %v732
        %v734 = vlaneseq
        %v735 = vshrl.u32 %v734, 7
        %v736 = vsub.s32 %v733, %v735
        %v737 = vrot.slane %v730, %v736
        %v738 = vcombine.low %v729, %v737
        %v740 = vunpack.c.l.s4 1934713408
        %v741 = vunpack.c.0.s8 %v740
        %v742 = vlaneseq
        %v743 = vshrl.u32 %v742, 7
        %v744 = vsub.s32 %v741, %v743
        %v745 = vrot.slane %v738, %v744
        %v746 = vcombine.high %v745, 0
        %v747 = vcombine.low %v715, %v719
        %v749 = vunpack.c.l.s4 1983009808
        %v750 = vunpack.c.0.s8 %v749
        %v751 = vlaneseq
        %v752 = vshrl.u32 %v751, 7
        %v753 = vsub.s32 %v750, %v752
        %v754 = vrot.slane %v747, %v753
        %v755 = vcombine.low %v717, %v721
        %v757 = vunpack.c.l.s4 1983009808
        %v758 = vunpack.c.0.s8 %v757
        %v759 = vlaneseq
        %v760 = vshrl.u32 %v759, 7
        %v761 = vsub.s32 %v758, %v760
        %v762 = vrot.slane %v755, %v761
        %v763 = vcombine.low %v754, %v762
        %v765 = vunpack.c.l.s4 1934713408
        %v766 = vunpack.c.0.s8 %v765
        %v767 = vlaneseq
        %v768 = vshrl.u32 %v767, 7
        %v769 = vsub.s32 %v766, %v768
        %v770 = vrot.slane %v763, %v769
        %v771 = vcombine.high %v770, 0
        %v774 = vpack.i.b16 %v770, %v745
        %v775 = vshrl.u32 %v745, 16
        %v776 = vshrl.u32 %v770, 16
        %v777 = vpack.i.b16 %v776, %v775
        %v780 = vpack.i.b16 %v771, %v746
        %v781 = vshrl.u32 %v746, 16
        %v782 = vshrl.u32 %v771, 16
        %v783 = vpack.i.b16 %v782, %v781
        %785 = vrot.lane.b32.xlu0 %v570, 120
        %v786 = vpop.permute.xlu0 %785
        %788 = vrot.lane.b32.xlu0 %v570, 112
        %v789 = vpop.permute.xlu0 %788
        %791 = vrot.lane.b32.xlu0 %v570, 104
        %v792 = vpop.permute.xlu0 %791
        %v794 = vcombine.low %v570, %v789
        %v795 = vcombine.high %v570, %v789
        %v797 = vunpack.c.l.s4 1983009808
        %v798 = vunpack.c.0.s8 %v797
        %v799 = vlaneseq
        %v800 = vshrl.u32 %v799, 7
        %v801 = vsub.s32 %v798, %v800
        %v802 = vrot.slane %v794, %v801
        %v804 = vunpack.c.l.s4 1983009808
        %v805 = vunpack.c.0.s8 %v804
        %v806 = vlaneseq
        %v807 = vshrl.u32 %v806, 7
        %v808 = vsub.s32 %v805, %v807
        %v809 = vrot.slane %v795, %v808
        %v810 = vcombine.low %v786, %v792
        %v811 = vcombine.high %v786, %v792
        %v813 = vunpack.c.l.s4 1983009808
        %v814 = vunpack.c.0.s8 %v813
        %v815 = vlaneseq
        %v816 = vshrl.u32 %v815, 7
        %v817 = vsub.s32 %v814, %v816
        %v818 = vrot.slane %v810, %v817
        %v820 = vunpack.c.l.s4 1983009808
        %v821 = vunpack.c.0.s8 %v820
        %v822 = vlaneseq
        %v823 = vshrl.u32 %v822, 7
        %v824 = vsub.s32 %v821, %v823
        %v825 = vrot.slane %v811, %v824
        %v826 = vcombine.low %v802, %v818
        %v827 = vcombine.high %v802, %v818
        %v829 = vunpack.c.l.s4 1934713408
        %v830 = vunpack.c.0.s8 %v829
        %v831 = vlaneseq
        %v832 = vshrl.u32 %v831, 7
        %v833 = vsub.s32 %v830, %v832
        %v834 = vrot.slane %v826, %v833
        %v836 = vunpack.c.l.s4 1934713408
        %v837 = vunpack.c.0.s8 %v836
        %v838 = vlaneseq
        %v839 = vshrl.u32 %v838, 7
        %v840 = vsub.s32 %v837, %v839
        %v841 = vrot.slane %v827, %v840
        %v842 = vcombine.low %v809, %v825
        %v843 = vcombine.high %v809, %v825
        %v845 = vunpack.c.l.s4 1934713408
        %v846 = vunpack.c.0.s8 %v845
        %v847 = vlaneseq
        %v848 = vshrl.u32 %v847, 7
        %v849 = vsub.s32 %v846, %v848
        %v850 = vrot.slane %v842, %v849
        %v852 = vunpack.c.l.s4 1934713408
        %v853 = vunpack.c.0.s8 %v852
        %v854 = vlaneseq
        %v855 = vshrl.u32 %v854, 7
        %v856 = vsub.s32 %v853, %v855
        %v857 = vrot.slane %v843, %v856
        %v858 = vcombine.high %v834, 0.0
        %v859 = vcombine.high %v841, 0.0
        %v860 = vcombine.high %v850, 0.0
        %v861 = vcombine.high %v857, 0.0
        %v862 = vpack.c.bf16 %v834, %v834
        %v863 = vpack.c.bf16 %v858, %v858
        %v864 = vpack.c.bf16 %v841, %v841
        %v865 = vpack.c.bf16 %v859, %v859
        %v866 = vpack.c.bf16 %v850, %v850
        %v867 = vpack.c.bf16 %v860, %v860
        %v868 = vpack.c.bf16 %v857, %v857
        %v869 = vpack.c.bf16 %v861, %v861
        %v870 = vcombine.low %v862, %v866
        %v872 = vunpack.c.l.s4 1983009808
        %v873 = vunpack.c.0.s8 %v872
        %v874 = vlaneseq
        %v875 = vshrl.u32 %v874, 7
        %v876 = vsub.s32 %v873, %v875
        %v877 = vrot.slane %v870, %v876
        %v878 = vcombine.low %v864, %v868
        %v880 = vunpack.c.l.s4 1983009808
        %v881 = vunpack.c.0.s8 %v880
        %v882 = vlaneseq
        %v883 = vshrl.u32 %v882, 7
        %v884 = vsub.s32 %v881, %v883
        %v885 = vrot.slane %v878, %v884
        %v886 = vcombine.low %v877, %v885
        %v888 = vunpack.c.l.s4 1934713408
        %v889 = vunpack.c.0.s8 %v888
        %v890 = vlaneseq
        %v891 = vshrl.u32 %v890, 7
        %v892 = vsub.s32 %v889, %v891
        %v893 = vrot.slane %v886, %v892
        %v894 = vcombine.high %v893, 0
        %v895 = vcombine.low %v863, %v867
        %v897 = vunpack.c.l.s4 1983009808
        %v898 = vunpack.c.0.s8 %v897
        %v899 = vlaneseq
        %v900 = vshrl.u32 %v899, 7
        %v901 = vsub.s32 %v898, %v900
        %v902 = vrot.slane %v895, %v901
        %v903 = vcombine.low %v865, %v869
        %v905 = vunpack.c.l.s4 1983009808
        %v906 = vunpack.c.0.s8 %v905
        %v907 = vlaneseq
        %v908 = vshrl.u32 %v907, 7
        %v909 = vsub.s32 %v906, %v908
        %v910 = vrot.slane %v903, %v909
        %v911 = vcombine.low %v902, %v910
        %v913 = vunpack.c.l.s4 1934713408
        %v914 = vunpack.c.0.s8 %v913
        %v915 = vlaneseq
        %v916 = vshrl.u32 %v915, 7
        %v917 = vsub.s32 %v914, %v916
        %v918 = vrot.slane %v911, %v917
        %v919 = vcombine.high %v918, 0
        %v922 = vpack.i.b16 %v918, %v893
        %v923 = vshrl.u32 %v893, 16
        %v924 = vshrl.u32 %v918, 16
        %v925 = vpack.i.b16 %v924, %v923
        %v928 = vpack.i.b16 %v919, %v894
        %v929 = vshrl.u32 %v894, 16
        %v930 = vshrl.u32 %v919, 16
        %v931 = vpack.i.b16 %v930, %v929
        %933 = vrot.lane.b32.xlu0 %v630, 120
        %v934 = vpop.permute.xlu0 %933
        %936 = vrot.lane.b32.xlu0 %v630, 112
        %v937 = vpop.permute.xlu0 %936
        %939 = vrot.lane.b32.xlu0 %v630, 104
        %v940 = vpop.permute.xlu0 %939
        %v942 = vcombine.low %v630, %v937
        %v943 = vcombine.high %v630, %v937
        %v945 = vunpack.c.l.s4 1983009808
        %v946 = vunpack.c.0.s8 %v945
        %v947 = vlaneseq
        %v948 = vshrl.u32 %v947, 7
        %v949 = vsub.s32 %v946, %v948
        %v950 = vrot.slane %v942, %v949
        %v952 = vunpack.c.l.s4 1983009808
        %v953 = vunpack.c.0.s8 %v952
        %v954 = vlaneseq
        %v955 = vshrl.u32 %v954, 7
        %v956 = vsub.s32 %v953, %v955
        %v957 = vrot.slane %v943, %v956
        %v958 = vcombine.low %v934, %v940
        %v959 = vcombine.high %v934, %v940
        %v961 = vunpack.c.l.s4 1983009808
        %v962 = vunpack.c.0.s8 %v961
        %v963 = vlaneseq
        %v964 = vshrl.u32 %v963, 7
        %v965 = vsub.s32 %v962, %v964
        %v966 = vrot.slane %v958, %v965
        %v968 = vunpack.c.l.s4 1983009808
        %v969 = vunpack.c.0.s8 %v968
        %v970 = vlaneseq
        %v971 = vshrl.u32 %v970, 7
        %v972 = vsub.s32 %v969, %v971
        %v973 = vrot.slane %v959, %v972
        %v974 = vcombine.low %v950, %v966
        %v975 = vcombine.high %v950, %v966
        %v977 = vunpack.c.l.s4 1934713408
        %v978 = vunpack.c.0.s8 %v977
        %v979 = vlaneseq
        %v980 = vshrl.u32 %v979, 7
        %v981 = vsub.s32 %v978, %v980
        %v982 = vrot.slane %v974, %v981
        %v984 = vunpack.c.l.s4 1934713408
        %v985 = vunpack.c.0.s8 %v984
        %v986 = vlaneseq
        %v987 = vshrl.u32 %v986, 7
        %v988 = vsub.s32 %v985, %v987
        %v989 = vrot.slane %v975, %v988
        %v990 = vcombine.low %v957, %v973
        %v991 = vcombine.high %v957, %v973
        %v993 = vunpack.c.l.s4 1934713408
        %v994 = vunpack.c.0.s8 %v993
        %v995 = vlaneseq
        %v996 = vshrl.u32 %v995, 7
        %v997 = vsub.s32 %v994, %v996
        %v998 = vrot.slane %v990, %v997
        %v1000 = vunpack.c.l.s4 1934713408
        %v1001 = vunpack.c.0.s8 %v1000
        %v1002 = vlaneseq
        %v1003 = vshrl.u32 %v1002, 7
        %v1004 = vsub.s32 %v1001, %v1003
        %v1005 = vrot.slane %v991, %v1004
        %v1006 = vcombine.high %v982, 0.0
        %v1007 = vcombine.high %v989, 0.0
        %v1008 = vcombine.high %v998, 0.0
        %v1009 = vcombine.high %v1005, 0.0
        %v1010 = vpack.c.bf16 %v982, %v982
        %v1011 = vpack.c.bf16 %v1006, %v1006
        %v1012 = vpack.c.bf16 %v989, %v989
        %v1013 = vpack.c.bf16 %v1007, %v1007
        %v1014 = vpack.c.bf16 %v998, %v998
        %v1015 = vpack.c.bf16 %v1008, %v1008
        %v1016 = vpack.c.bf16 %v1005, %v1005
        %v1017 = vpack.c.bf16 %v1009, %v1009
        %v1018 = vcombine.low %v1010, %v1014
        %v1020 = vunpack.c.l.s4 1983009808
        %v1021 = vunpack.c.0.s8 %v1020
        %v1022 = vlaneseq
        %v1023 = vshrl.u32 %v1022, 7
        %v1024 = vsub.s32 %v1021, %v1023
        %v1025 = vrot.slane %v1018, %v1024
        %v1026 = vcombine.low %v1012, %v1016
        %v1028 = vunpack.c.l.s4 1983009808
        %v1029 = vunpack.c.0.s8 %v1028
        %v1030 = vlaneseq
        %v1031 = vshrl.u32 %v1030, 7
        %v1032 = vsub.s32 %v1029, %v1031
        %v1033 = vrot.slane %v1026, %v1032
        %v1034 = vcombine.low %v1025, %v1033
        %v1036 = vunpack.c.l.s4 1934713408
        %v1037 = vunpack.c.0.s8 %v1036
        %v1038 = vlaneseq
        %v1039 = vshrl.u32 %v1038, 7
        %v1040 = vsub.s32 %v1037, %v1039
        %v1041 = vrot.slane %v1034, %v1040
        %v1042 = vcombine.high %v1041, 0
        %v1043 = vcombine.low %v1011, %v1015
        %v1045 = vunpack.c.l.s4 1983009808
        %v1046 = vunpack.c.0.s8 %v1045
        %v1047 = vlaneseq
        %v1048 = vshrl.u32 %v1047, 7
        %v1049 = vsub.s32 %v1046, %v1048
        %v1050 = vrot.slane %v1043, %v1049
        %v1051 = vcombine.low %v1013, %v1017
        %v1053 = vunpack.c.l.s4 1983009808
        %v1054 = vunpack.c.0.s8 %v1053
        %v1055 = vlaneseq
        %v1056 = vshrl.u32 %v1055, 7
        %v1057 = vsub.s32 %v1054, %v1056
        %v1058 = vrot.slane %v1051, %v1057
        %v1059 = vcombine.low %v1050, %v1058
        %v1061 = vunpack.c.l.s4 1934713408
        %v1062 = vunpack.c.0.s8 %v1061
        %v1063 = vlaneseq
        %v1064 = vshrl.u32 %v1063, 7
        %v1065 = vsub.s32 %v1062, %v1064
        %v1066 = vrot.slane %v1059, %v1065
        %v1067 = vcombine.high %v1066, 0
        %v1070 = vpack.i.b16 %v1066, %v1041
        %v1071 = vshrl.u32 %v1041, 16
        %v1072 = vshrl.u32 %v1066, 16
        %v1073 = vpack.i.b16 %v1072, %v1071
        %v1076 = vpack.i.b16 %v1067, %v1042
        %v1077 = vshrl.u32 %v1042, 16
        %v1078 = vshrl.u32 %v1067, 16
        %v1079 = vpack.i.b16 %v1078, %v1077
        %vm1080 = vcmask 64512
        %v1082 = vsel %vm1080, %v774, 0
        %v1085 = vsel %vm1080, %v922, 0
        %1087 = vmatprep.subr.bf16.mxu0 0
        %1088 = vmatpush1.bf16.xpose.msra.mxu0 %v1085
        %1089 = vmatprep.subr.bf16.mxu0 0
        %1090 = vmatpush1.bf16.xpose.msra.mxu0 0
        %1091 = vmatprep.subr.bf16.mxu0 0
        %1092 = vmatpush1.bf16.xpose.msra.mxu0 0
        %1093 = vmatprep.subr.bf16.mxu0 0
        %1094 = vmatpush1.bf16.xpose.msra.mxu0 0
        %1095 = vmatprep.subr.bf16.mxu0 0
        %1096 = vmatpush1.bf16.xpose.msra.mxu0 0
        %1097 = vmatprep.subr.bf16.mxu0 0
        %1098 = vmatpush1.bf16.xpose.msra.mxu0 0
        %1099 = vmatprep.subr.bf16.mxu0 0
        %1100 = vmatpush1.bf16.xpose.msra.mxu0 0
        %1101 = vmatprep.subr.bf16.mxu0 0
        %1102 = vmatpush1.bf16.xpose.msra.mxu0 0
        %1103 = vmatprep.subr.bf16.mxu0 0
        %1104 = vmatpush1.bf16.xpose.msra.mxu0 0
        %1105 = vmatprep.subr.bf16.mxu0 0
        %1106 = vmatpush1.bf16.xpose.msra.mxu0 0
        %1107 = vmatprep.subr.bf16.mxu0 0
        %1108 = vmatpush1.bf16.xpose.msra.mxu0 0
        %1109 = vmatprep.subr.bf16.mxu0 0
        %1110 = vmatpush1.bf16.xpose.msra.mxu0 0
        %1111 = vmatprep.subr.bf16.mxu0 0
        %1112 = vmatpush1.bf16.xpose.msra.mxu0 0
        %1113 = vmatprep.subr.bf16.mxu0 0
        %1114 = vmatpush1.bf16.xpose.msra.mxu0 0
        %1115 = vmatprep.subr.bf16.mxu0 0
        %1116 = vmatpush1.bf16.xpose.msra.mxu0 0
        %1117 = vmatprep.subr.bf16.mxu0 0
        %1118 = vmatpush1.bf16.xpose.msra.mxu0 0
        %1119 = vmatprep.mubr.bf16.mxu0 0
        %1120 = vmatmul.mubr.bf16.gmra.mrb[0].mxu0 %v1082
        %v1121 = vpop.f32.mrb[0].mxu0
        %v1122 = vadd.f32 0.0, %v1121
        %v1123 = vpop.f32.mrb[0].mxu0
        %v1124 = vpop.f32.mrb[0].mxu0
        %v1125 = vpop.f32.mrb[0].mxu0
        %1126 = vdwg.mxu0
        %v1128 = vsel %vm1080, %v777, 0
        %v1131 = vsel %vm1080, %v925, 0
        %1133 = vmatprep.subr.bf16.mxu0 0
        %1134 = vmatpush1.bf16.xpose.msra.mxu0 %v1131
        %1135 = vmatprep.subr.bf16.mxu0 0
        %1136 = vmatpush1.bf16.xpose.msra.mxu0 0
        %1137 = vmatprep.subr.bf16.mxu0 0
        %1138 = vmatpush1.bf16.xpose.msra.mxu0 0
        %1139 = vmatprep.subr.bf16.mxu0 0
        %1140 = vmatpush1.bf16.xpose.msra.mxu0 0
        %1141 = vmatprep.subr.bf16.mxu0 0
        %1142 = vmatpush1.bf16.xpose.msra.mxu0 0
        %1143 = vmatprep.subr.bf16.mxu0 0
        %1144 = vmatpush1.bf16.xpose.msra.mxu0 0
        %1145 = vmatprep.subr.bf16.mxu0 0
        %1146 = vmatpush1.bf16.xpose.msra.mxu0 0
        %1147 = vmatprep.subr.bf16.mxu0 0
        %1148 = vmatpush1.bf16.xpose.msra.mxu0 0
        %1149 = vmatprep.subr.bf16.mxu0 0
        %1150 = vmatpush1.bf16.xpose.msra.mxu0 0
        %1151 = vmatprep.subr.bf16.mxu0 0
        %1152 = vmatpush1.bf16.xpose.msra.mxu0 0
        %1153 = vmatprep.subr.bf16.mxu0 0
        %1154 = vmatpush1.bf16.xpose.msra.mxu0 0
        %1155 = vmatprep.subr.bf16.mxu0 0
        %1156 = vmatpush1.bf16.xpose.msra.mxu0 0
        %1157 = vmatprep.subr.bf16.mxu0 0
        %1158 = vmatpush1.bf16.xpose.msra.mxu0 0
        %1159 = vmatprep.subr.bf16.mxu0 0
        %1160 = vmatpush1.bf16.xpose.msra.mxu0 0
        %1161 = vmatprep.subr.bf16.mxu0 0
        %1162 = vmatpush1.bf16.xpose.msra.mxu0 0
        %1163 = vmatprep.subr.bf16.mxu0 0
        %1164 = vmatpush1.bf16.xpose.msra.mxu0 0
        %1165 = vmatprep.mubr.bf16.mxu0 0
        %1166 = vmatmul.mubr.bf16.gmra.mrb[0].mxu0 %v1128
        %v1167 = vpop.f32.mrb[0].mxu0
        %v1168 = vadd.f32 0.0, %v1167
        %v1169 = vpop.f32.mrb[0].mxu0
        %v1170 = vpop.f32.mrb[0].mxu0
        %v1171 = vpop.f32.mrb[0].mxu0
        %1172 = vdwg.mxu0
        %v1174 = vsel %vm1080, %v780, 0
        %v1177 = vsel %vm1080, %v928, 0
        %1179 = vmatprep.subr.bf16.mxu0 0
        %1180 = vmatpush1.bf16.xpose.msra.mxu0 %v1177
        %1181 = vmatprep.subr.bf16.mxu0 0
        %1182 = vmatpush1.bf16.xpose.msra.mxu0 0
        %1183 = vmatprep.subr.bf16.mxu0 0
        %1184 = vmatpush1.bf16.xpose.msra.mxu0 0
        %1185 = vmatprep.subr.bf16.mxu0 0
        %1186 = vmatpush1.bf16.xpose.msra.mxu0 0
        %1187 = vmatprep.subr.bf16.mxu0 0
        %1188 = vmatpush1.bf16.xpose.msra.mxu0 0
        %1189 = vmatprep.subr.bf16.mxu0 0
        %1190 = vmatpush1.bf16.xpose.msra.mxu0 0
        %1191 = vmatprep.subr.bf16.mxu0 0
        %1192 = vmatpush1.bf16.xpose.msra.mxu0 0
        %1193 = vmatprep.subr.bf16.mxu0 0
        %1194 = vmatpush1.bf16.xpose.msra.mxu0 0
        %1195 = vmatprep.subr.bf16.mxu0 0
        %1196 = vmatpush1.bf16.xpose.msra.mxu0 0
        %1197 = vmatprep.subr.bf16.mxu0 0
        %1198 = vmatpush1.bf16.xpose.msra.mxu0 0
        %1199 = vmatprep.subr.bf16.mxu0 0
        %1200 = vmatpush1.bf16.xpose.msra.mxu0 0
        %1201 = vmatprep.subr.bf16.mxu0 0
        %1202 = vmatpush1.bf16.xpose.msra.mxu0 0
        %1203 = vmatprep.subr.bf16.mxu0 0
        %1204 = vmatpush1.bf16.xpose.msra.mxu0 0
        %1205 = vmatprep.subr.bf16.mxu0 0
        %1206 = vmatpush1.bf16.xpose.msra.mxu0 0
        %1207 = vmatprep.subr.bf16.mxu0 0
        %1208 = vmatpush1.bf16.xpose.msra.mxu0 0
        %1209 = vmatprep.subr.bf16.mxu0 0
        %1210 = vmatpush1.bf16.xpose.msra.mxu0 0
        %1211 = vmatprep.mubr.bf16.mxu0 0
        %1212 = vmatmul.mubr.bf16.gmra.mrb[0].mxu0 %v1174
        %v1213 = vpop.f32.mrb[0].mxu0
        %v1214 = vadd.f32 0.0, %v1213
        %v1215 = vpop.f32.mrb[0].mxu0
        %v1216 = vpop.f32.mrb[0].mxu0
        %v1217 = vpop.f32.mrb[0].mxu0
        %1218 = vdwg.mxu0
        %v1220 = vsel %vm1080, %v783, 0
        %v1223 = vsel %vm1080, %v931, 0
        %1225 = vmatprep.subr.bf16.mxu0 0
        %1226 = vmatpush1.bf16.xpose.msra.mxu0 %v1223
        %1227 = vmatprep.subr.bf16.mxu0 0
        %1228 = vmatpush1.bf16.xpose.msra.mxu0 0
        %1229 = vmatprep.subr.bf16.mxu0 0
        %1230 = vmatpush1.bf16.xpose.msra.mxu0 0
        %1231 = vmatprep.subr.bf16.mxu0 0
        %1232 = vmatpush1.bf16.xpose.msra.mxu0 0
        %1233 = vmatprep.subr.bf16.mxu0 0
        %1234 = vmatpush1.bf16.xpose.msra.mxu0 0
        %1235 = vmatprep.subr.bf16.mxu0 0
        %1236 = vmatpush1.bf16.xpose.msra.mxu0 0
        %1237 = vmatprep.subr.bf16.mxu0 0
        %1238 = vmatpush1.bf16.xpose.msra.mxu0 0
        %1239 = vmatprep.subr.bf16.mxu0 0
        %1240 = vmatpush1.bf16.xpose.msra.mxu0 0
        %1241 = vmatprep.subr.bf16.mxu0 0
        %1242 = vmatpush1.bf16.xpose.msra.mxu0 0
        %1243 = vmatprep.subr.bf16.mxu0 0
        %1244 = vmatpush1.bf16.xpose.msra.mxu0 0
        %1245 = vmatprep.subr.bf16.mxu0 0
        %1246 = vmatpush1.bf16.xpose.msra.mxu0 0
        %1247 = vmatprep.subr.bf16.mxu0 0
        %1248 = vmatpush1.bf16.xpose.msra.mxu0 0
        %1249 = vmatprep.subr.bf16.mxu0 0
        %1250 = vmatpush1.bf16.xpose.msra.mxu0 0
        %1251 = vmatprep.subr.bf16.mxu0 0
        %1252 = vmatpush1.bf16.xpose.msra.mxu0 0
        %1253 = vmatprep.subr.bf16.mxu0 0
        %1254 = vmatpush1.bf16.xpose.msra.mxu0 0
        %1255 = vmatprep.subr.bf16.mxu0 0
        %1256 = vmatpush1.bf16.xpose.msra.mxu0 0
        %1257 = vmatprep.mubr.bf16.mxu0 0
        %1258 = vmatmul.mubr.bf16.gmra.mrb[0].mxu0 %v1220
        %v1259 = vpop.f32.mrb[0].mxu0
        %v1260 = vadd.f32 0.0, %v1259
        %v1261 = vpop.f32.mrb[0].mxu0
        %v1262 = vpop.f32.mrb[0].mxu0
        %v1263 = vpop.f32.mrb[0].mxu0
        %1264 = vdwg.mxu0
        %v1265 = vsel %vm1080, %v1122, -inf
        %1266 = vmax.xlane.f32.xlu0 %v1265
        %v1267 = vpop.xlane.xlu0 %1266
        %v1268 = vsel %vm1080, %v1168, -inf
        %1269 = vmax.xlane.f32.xlu0 %v1268
        %v1270 = vpop.xlane.xlu0 %1269
        %v1271 = vsel %vm1080, %v1214, -inf
        %1272 = vmax.xlane.f32.xlu0 %v1271
        %v1273 = vpop.xlane.xlu0 %1272
        %v1274 = vsel %vm1080, %v1260, -inf
        %1275 = vmax.xlane.f32.xlu0 %v1274
        %v1276 = vpop.xlane.xlu0 %1275
        %v1277 = vsub.f32 %v1122, %v1267
        %v1278 = vsub.f32 %v1168, %v1270
        %v1279 = vsub.f32 %v1214, %v1273
        %v1280 = vsub.f32 %v1260, %v1276
        %v1281 = vmul.f32 %v1277, 1.442695
        %v1282 = vpow.pop %v1281
        %v1283 = vmul.f32 %v1278, 1.442695
        %v1284 = vpow.pop %v1283
        %v1285 = vmul.f32 %v1279, 1.442695
        %v1286 = vpow.pop %v1285
        %v1287 = vmul.f32 %v1280, 1.442695
        %v1288 = vpow.pop %v1287
        %v1289 = vsel %vm1080, %v1282, 0.0
        %1290 = vadd.xlane.f32.xlu0 %v1289
        %v1291 = vpop.xlane.xlu0 %1290
        %v1292 = vsel %vm1080, %v1284, 0.0
        %1293 = vadd.xlane.f32.xlu0 %v1292
        %v1294 = vpop.xlane.xlu0 %1293
        %v1295 = vsel %vm1080, %v1286, 0.0
        %1296 = vadd.xlane.f32.xlu0 %v1295
        %v1297 = vpop.xlane.xlu0 %1296
        %v1298 = vsel %vm1080, %v1288, 0.0
        %1299 = vadd.xlane.f32.xlu0 %v1298
        %v1300 = vpop.xlane.xlu0 %1299
        %v1301 = vrcp.pop %v1291
        %v1302 = vrcp.pop %v1294
        %v1303 = vrcp.pop %v1297
        %v1304 = vrcp.pop %v1300
        %v1305 = vmul.f32 %v1282, %v1301
        %v1306 = vmul.f32 %v1284, %v1302
        %v1307 = vmul.f32 %v1286, %v1303
        %v1308 = vmul.f32 %v1288, %v1304
        %v1309 = vpack.c.bf16 %v1305, %v1305
        %v1310 = vpack.c.bf16 %v1306, %v1306
        %v1311 = vpack.c.bf16 %v1307, %v1307
        %v1312 = vpack.c.bf16 %v1308, %v1308
        %v1314 = vsel %vm1080, %v1309, 0
        %vm1316 = vcmask 1043456
        %v1318 = vsel %vm1316, %v1070, 0
        %1320 = vmatprep.subr.bf16.mxu0 0
        %1321 = vmatpush1.bf16.msra.mxu0 %v1318
        %1322 = vmatprep.subr.bf16.mxu0 0
        %1323 = vmatpush1.bf16.msra.mxu0 0
        %1324 = vmatprep.subr.bf16.mxu0 0
        %1325 = vmatpush1.bf16.msra.mxu0 0
        %1326 = vmatprep.subr.bf16.mxu0 0
        %1327 = vmatpush1.bf16.msra.mxu0 0
        %1328 = vmatprep.subr.bf16.mxu0 0
        %1329 = vmatpush1.bf16.msra.mxu0 0
        %1330 = vmatprep.subr.bf16.mxu0 0
        %1331 = vmatpush1.bf16.msra.mxu0 0
        %1332 = vmatprep.subr.bf16.mxu0 0
        %1333 = vmatpush1.bf16.msra.mxu0 0
        %1334 = vmatprep.subr.bf16.mxu0 0
        %1335 = vmatpush1.bf16.msra.mxu0 0
        %1336 = vmatprep.subr.bf16.mxu0 0
        %1337 = vmatpush1.bf16.msra.mxu0 0
        %1338 = vmatprep.subr.bf16.mxu0 0
        %1339 = vmatpush1.bf16.msra.mxu0 0
        %1340 = vmatprep.subr.bf16.mxu0 0
        %1341 = vmatpush1.bf16.msra.mxu0 0
        %1342 = vmatprep.subr.bf16.mxu0 0
        %1343 = vmatpush1.bf16.msra.mxu0 0
        %1344 = vmatprep.subr.bf16.mxu0 0
        %1345 = vmatpush1.bf16.msra.mxu0 0
        %1346 = vmatprep.subr.bf16.mxu0 0
        %1347 = vmatpush1.bf16.msra.mxu0 0
        %1348 = vmatprep.subr.bf16.mxu0 0
        %1349 = vmatpush1.bf16.msra.mxu0 0
        %1350 = vmatprep.subr.bf16.mxu0 0
        %1351 = vmatpush1.bf16.msra.mxu0 0
        %1352 = vmatprep.mubr.bf16.mxu0 0
        %1353 = vmatmul.mubr.bf16.gmra.mrb[0].mxu0 %v1314
        %v1354 = vpop.f32.mrb[0].mxu0
        %v1355 = vadd.f32 0.0, %v1354
        %v1356 = vpop.f32.mrb[0].mxu0
        %v1357 = vpop.f32.mrb[0].mxu0
        %v1358 = vpop.f32.mrb[0].mxu0
        %1359 = vdwg.mxu0
        %v1361 = vsel %vm1080, %v1310, 0
        %v1364 = vsel %vm1316, %v1073, 0
        %1366 = vmatprep.subr.bf16.mxu0 0
        %1367 = vmatpush1.bf16.msra.mxu0 %v1364
        %1368 = vmatprep.subr.bf16.mxu0 0
        %1369 = vmatpush1.bf16.msra.mxu0 0
        %1370 = vmatprep.subr.bf16.mxu0 0
        %1371 = vmatpush1.bf16.msra.mxu0 0
        %1372 = vmatprep.subr.bf16.mxu0 0
        %1373 = vmatpush1.bf16.msra.mxu0 0
        %1374 = vmatprep.subr.bf16.mxu0 0
        %1375 = vmatpush1.bf16.msra.mxu0 0
        %1376 = vmatprep.subr.bf16.mxu0 0
        %1377 = vmatpush1.bf16.msra.mxu0 0
        %1378 = vmatprep.subr.bf16.mxu0 0
        %1379 = vmatpush1.bf16.msra.mxu0 0
        %1380 = vmatprep.subr.bf16.mxu0 0
        %1381 = vmatpush1.bf16.msra.mxu0 0
        %1382 = vmatprep.subr.bf16.mxu0 0
        %1383 = vmatpush1.bf16.msra.mxu0 0
        %1384 = vmatprep.subr.bf16.mxu0 0
        %1385 = vmatpush1.bf16.msra.mxu0 0
        %1386 = vmatprep.subr.bf16.mxu0 0
        %1387 = vmatpush1.bf16.msra.mxu0 0
        %1388 = vmatprep.subr.bf16.mxu0 0
        %1389 = vmatpush1.bf16.msra.mxu0 0
        %1390 = vmatprep.subr.bf16.mxu0 0
        %1391 = vmatpush1.bf16.msra.mxu0 0
        %1392 = vmatprep.subr.bf16.mxu0 0
        %1393 = vmatpush1.bf16.msra.mxu0 0
        %1394 = vmatprep.subr.bf16.mxu0 0
        %1395 = vmatpush1.bf16.msra.mxu0 0
        %1396 = vmatprep.subr.bf16.mxu0 0
        %1397 = vmatpush1.bf16.msra.mxu0 0
        %1398 = vmatprep.mubr.bf16.mxu0 0
        %1399 = vmatmul.mubr.bf16.gmra.mrb[0].mxu0 %v1361
        %v1400 = vpop.f32.mrb[0].mxu0
        %v1401 = vadd.f32 0.0, %v1400
        %v1402 = vpop.f32.mrb[0].mxu0
        %v1403 = vpop.f32.mrb[0].mxu0
        %v1404 = vpop.f32.mrb[0].mxu0
        %1405 = vdwg.mxu0
        %v1407 = vsel %vm1080, %v1311, 0
        %v1410 = vsel %vm1316, %v1076, 0
        %1412 = vmatprep.subr.bf16.mxu0 0
        %1413 = vmatpush1.bf16.msra.mxu0 %v1410
        %1414 = vmatprep.subr.bf16.mxu0 0
        %1415 = vmatpush1.bf16.msra.mxu0 0
        %1416 = vmatprep.subr.bf16.mxu0 0
        %1417 = vmatpush1.bf16.msra.mxu0 0
        %1418 = vmatprep.subr.bf16.mxu0 0
        %1419 = vmatpush1.bf16.msra.mxu0 0
        %1420 = vmatprep.subr.bf16.mxu0 0
        %1421 = vmatpush1.bf16.msra.mxu0 0
        %1422 = vmatprep.subr.bf16.mxu0 0
        %1423 = vmatpush1.bf16.msra.mxu0 0
        %1424 = vmatprep.subr.bf16.mxu0 0
        %1425 = vmatpush1.bf16.msra.mxu0 0
        %1426 = vmatprep.subr.bf16.mxu0 0
        %1427 = vmatpush1.bf16.msra.mxu0 0
        %1428 = vmatprep.subr.bf16.mxu0 0
        %1429 = vmatpush1.bf16.msra.mxu0 0
        %1430 = vmatprep.subr.bf16.mxu0 0
        %1431 = vmatpush1.bf16.msra.mxu0 0
        %1432 = vmatprep.subr.bf16.mxu0 0
        %1433 = vmatpush1.bf16.msra.mxu0 0
        %1434 = vmatprep.subr.bf16.mxu0 0
        %1435 = vmatpush1.bf16.msra.mxu0 0
        %1436 = vmatprep.subr.bf16.mxu0 0
        %1437 = vmatpush1.bf16.msra.mxu0 0
        %1438 = vmatprep.subr.bf16.mxu0 0
        %1439 = vmatpush1.bf16.msra.mxu0 0
        %1440 = vmatprep.subr.bf16.mxu0 0
        %1441 = vmatpush1.bf16.msra.mxu0 0
        %1442 = vmatprep.subr.bf16.mxu0 0
        %1443 = vmatpush1.bf16.msra.mxu0 0
        %1444 = vmatprep.mubr.bf16.mxu0 0
        %1445 = vmatmul.mubr.bf16.gmra.mrb[0].mxu0 %v1407
        %v1446 = vpop.f32.mrb[0].mxu0
        %v1447 = vadd.f32 0.0, %v1446
        %v1448 = vpop.f32.mrb[0].mxu0
        %v1449 = vpop.f32.mrb[0].mxu0
        %v1450 = vpop.f32.mrb[0].mxu0
        %1451 = vdwg.mxu0
        %v1453 = vsel %vm1080, %v1312, 0
        %v1456 = vsel %vm1316, %v1079, 0
        %1458 = vmatprep.subr.bf16.mxu0 0
        %1459 = vmatpush1.bf16.msra.mxu0 %v1456
        %1460 = vmatprep.subr.bf16.mxu0 0
        %1461 = vmatpush1.bf16.msra.mxu0 0
        %1462 = vmatprep.subr.bf16.mxu0 0
        %1463 = vmatpush1.bf16.msra.mxu0 0
        %1464 = vmatprep.subr.bf16.mxu0 0
        %1465 = vmatpush1.bf16.msra.mxu0 0
        %1466 = vmatprep.subr.bf16.mxu0 0
        %1467 = vmatpush1.bf16.msra.mxu0 0
        %1468 = vmatprep.subr.bf16.mxu0 0
        %1469 = vmatpush1.bf16.msra.mxu0 0
        %1470 = vmatprep.subr.bf16.mxu0 0
        %1471 = vmatpush1.bf16.msra.mxu0 0
        %1472 = vmatprep.subr.bf16.mxu0 0
        %1473 = vmatpush1.bf16.msra.mxu0 0
        %1474 = vmatprep.subr.bf16.mxu0 0
        %1475 = vmatpush1.bf16.msra.mxu0 0
        %1476 = vmatprep.subr.bf16.mxu0 0
        %1477 = vmatpush1.bf16.msra.mxu0 0
        %1478 = vmatprep.subr.bf16.mxu0 0
        %1479 = vmatpush1.bf16.msra.mxu0 0
        %1480 = vmatprep.subr.bf16.mxu0 0
        %1481 = vmatpush1.bf16.msra.mxu0 0
        %1482 = vmatprep.subr.bf16.mxu0 0
        %1483 = vmatpush1.bf16.msra.mxu0 0
        %1484 = vmatprep.subr.bf16.mxu0 0
        %1485 = vmatpush1.bf16.msra.mxu0 0
        %1486 = vmatprep.subr.bf16.mxu0 0
        %1487 = vmatpush1.bf16.msra.mxu0 0
        %1488 = vmatprep.subr.bf16.mxu0 0
        %1489 = vmatpush1.bf16.msra.mxu0 0
        %1490 = vmatprep.mubr.bf16.mxu0 0
        %1491 = vmatmul.mubr.bf16.gmra.mrb[0].mxu0 %v1453
        %v1492 = vpop.f32.mrb[0].mxu0
        %v1493 = vadd.f32 0.0, %v1492
        %v1494 = vpop.f32.mrb[0].mxu0
        %v1495 = vpop.f32.mrb[0].mxu0
        %v1496 = vpop.f32.mrb[0].mxu0
        %1497 = vdwg.mxu0
        %v1498 = vcombine.low %v1355, %v1447
        %v1499 = vcombine.high %v1355, %v1447
        %v1501 = vunpack.c.l.s4 1983009808
        %v1502 = vunpack.c.0.s8 %v1501
        %v1503 = vlaneseq
        %v1504 = vshrl.u32 %v1503, 7
        %v1505 = vsub.s32 %v1502, %v1504
        %v1506 = vrot.slane %v1498, %v1505
        %v1508 = vunpack.c.l.s4 1983009808
        %v1509 = vunpack.c.0.s8 %v1508
        %v1510 = vlaneseq
        %v1511 = vshrl.u32 %v1510, 7
        %v1512 = vsub.s32 %v1509, %v1511
        %v1513 = vrot.slane %v1499, %v1512
        %v1514 = vcombine.low %v1401, %v1493
        %v1515 = vcombine.high %v1401, %v1493
        %v1517 = vunpack.c.l.s4 1983009808
        %v1518 = vunpack.c.0.s8 %v1517
        %v1519 = vlaneseq
        %v1520 = vshrl.u32 %v1519, 7
        %v1521 = vsub.s32 %v1518, %v1520
        %v1522 = vrot.slane %v1514, %v1521
        %v1524 = vunpack.c.l.s4 1983009808
        %v1525 = vunpack.c.0.s8 %v1524
        %v1526 = vlaneseq
        %v1527 = vshrl.u32 %v1526, 7
        %v1528 = vsub.s32 %v1525, %v1527
        %v1529 = vrot.slane %v1515, %v1528
        %v1530 = vcombine.low %v1506, %v1522
        %v1531 = vcombine.high %v1506, %v1522
        %v1533 = vunpack.c.l.s4 1934713408
        %v1534 = vunpack.c.0.s8 %v1533
        %v1535 = vlaneseq
        %v1536 = vshrl.u32 %v1535, 7
        %v1537 = vsub.s32 %v1534, %v1536
        %v1538 = vrot.slane %v1530, %v1537
        %v1540 = vunpack.c.l.s4 1934713408
        %v1541 = vunpack.c.0.s8 %v1540
        %v1542 = vlaneseq
        %v1543 = vshrl.u32 %v1542, 7
        %v1544 = vsub.s32 %v1541, %v1543
        %v1545 = vrot.slane %v1531, %v1544
        %v1546 = vcombine.low %v1513, %v1529
        %v1547 = vcombine.high %v1513, %v1529
        %v1549 = vunpack.c.l.s4 1934713408
        %v1550 = vunpack.c.0.s8 %v1549
        %v1551 = vlaneseq
        %v1552 = vshrl.u32 %v1551, 7
        %v1553 = vsub.s32 %v1550, %v1552
        %v1554 = vrot.slane %v1546, %v1553
        %v1556 = vunpack.c.l.s4 1934713408
        %v1557 = vunpack.c.0.s8 %v1556
        %v1558 = vlaneseq
        %v1559 = vshrl.u32 %v1558, 7
        %v1560 = vsub.s32 %v1557, %v1559
        %v1561 = vrot.slane %v1547, %v1560
        %v1562 = vcombine.high %v1538, 0.0
        %v1563 = vcombine.high %v1545, 0.0
        %v1564 = vcombine.high %v1554, 0.0
        %v1565 = vcombine.high %v1561, 0.0
        %v1566 = vcombine.low %v1538, %v1545
        %v1568 = vunpack.c.l.s4 1983009808
        %v1569 = vunpack.c.0.s8 %v1568
        %v1570 = vlaneseq
        %v1571 = vshrl.u32 %v1570, 7
        %v1572 = vsub.s32 %v1569, %v1571
        %v1573 = vrot.slane %v1566, %v1572
        %v1574 = vcombine.low %v1562, %v1563
        %v1576 = vunpack.c.l.s4 1983009808
        %v1577 = vunpack.c.0.s8 %v1576
        %v1578 = vlaneseq
        %v1579 = vshrl.u32 %v1578, 7
        %v1580 = vsub.s32 %v1577, %v1579
        %v1581 = vrot.slane %v1574, %v1580
        %v1582 = vcombine.low %v1554, %v1561
        %v1584 = vunpack.c.l.s4 1983009808
        %v1585 = vunpack.c.0.s8 %v1584
        %v1586 = vlaneseq
        %v1587 = vshrl.u32 %v1586, 7
        %v1588 = vsub.s32 %v1585, %v1587
        %v1589 = vrot.slane %v1582, %v1588
        %v1590 = vcombine.low %v1564, %v1565
        %v1592 = vunpack.c.l.s4 1983009808
        %v1593 = vunpack.c.0.s8 %v1592
        %v1594 = vlaneseq
        %v1595 = vshrl.u32 %v1594, 7
        %v1596 = vsub.s32 %v1593, %v1595
        %v1597 = vrot.slane %v1590, %v1596
        %v1598 = vcombine.low %v1573, %v1581
        %v1599 = vcombine.high %v1573, %v1581
        %v1601 = vunpack.c.l.s4 1934713408
        %v1602 = vunpack.c.0.s8 %v1601
        %v1603 = vlaneseq
        %v1604 = vshrl.u32 %v1603, 7
        %v1605 = vsub.s32 %v1602, %v1604
        %v1606 = vrot.slane %v1598, %v1605
        %v1608 = vunpack.c.l.s4 1934713408
        %v1609 = vunpack.c.0.s8 %v1608
        %v1610 = vlaneseq
        %v1611 = vshrl.u32 %v1610, 7
        %v1612 = vsub.s32 %v1609, %v1611
        %v1613 = vrot.slane %v1599, %v1612
        %v1614 = vcombine.low %v1589, %v1597
        %v1615 = vcombine.high %v1589, %v1597
        %v1617 = vunpack.c.l.s4 1934713408
        %v1618 = vunpack.c.0.s8 %v1617
        %v1619 = vlaneseq
        %v1620 = vshrl.u32 %v1619, 7
        %v1621 = vsub.s32 %v1618, %v1620
        %v1622 = vrot.slane %v1614, %v1621
        %v1624 = vunpack.c.l.s4 1934713408
        %v1625 = vunpack.c.0.s8 %v1624
        %v1626 = vlaneseq
        %v1627 = vshrl.u32 %v1626, 7
        %v1628 = vsub.s32 %v1625, %v1627
        %v1629 = vrot.slane %v1615, %v1628
        %v1630 = vcombine.low %v1606, %v1622
        %v1631 = vcombine.high %v1606, %v1622
        %v1632 = vcombine.low %v1613, %v1629
        %v1633 = vcombine.high %v1613, %v1629
        %1635 = vrot.lane.b32.xlu0 %v1631, 8
        %v1636 = vpop.permute.xlu0 %1635
        %1639 = vrot.lane.b32.xlu0 %v1632, 16
        %v1640 = vpop.permute.xlu0 %1639
        %1643 = vrot.lane.b32.xlu0 %v1633, 24
        %v1644 = vpop.permute.xlu0 %1643
        %v1646 = vsel %vm1080, %v1630, %v1636
        %vm1647 = vcmask 130048
        %v1648 = vsel %vm1647, %v1646, %v1640
        %vm1649 = vcmask 195584
        %v1650 = vsel %vm1649, %v1648, %v1644
        %v1651 = vpack.c.bf16 %v1650, %v1650
        %v1652 = vld [vmem:[#allocation11] sm:$0xf]
        %v1653 = vld [vmem:[#allocation11 + $0x4] sm:$0xf]
        %v1654 = vld [vmem:[#allocation11 + $0x8] sm:$0xf]
        %v1655 = vld [vmem:[#allocation11 + $0xc] sm:$0xf]
        %v1656 = vld [vmem:[%s7] sm:$0x1]
        %v1658 = vlaneseq
        %v1659 = vshrl.u32 %v1658, 7
        %v1660 = vsub.s32 0, %v1659
        %v1661 = vrot.slane %v1656, %v1660
        %v1667 = vunpack.c.l.b16 %v1652
        %v1668 = vunpack.c.l.b16 %v1653
        %v1669 = vunpack.c.l.b16 %v1654
        %v1670 = vunpack.c.l.b16 %v1655
        %v1671 = vpack.c.b16 %v1668, %v1667
        %v1672 = vpack.c.b16 %v1670, %v1669
        %v1676 = vsel %vm471, %v1651, 0
        %1678 = vmatprep.subr.bf16.mxu0 0
        %1679 = vmatpush1.bf16.msra.mxu0 %v1671
        %1680 = vmatprep.subr.bf16.mxu0 0
        %1681 = vmatpush1.bf16.msra.mxu0 %v1672
        %1682 = vmatprep.subr.bf16.mxu0 0
        %1683 = vmatpush1.bf16.msra.mxu0 0
        %1684 = vmatprep.subr.bf16.mxu0 0
        %1685 = vmatpush1.bf16.msra.mxu0 0
        %1686 = vmatprep.subr.bf16.mxu0 0
        %1687 = vmatpush1.bf16.msra.mxu0 0
        %1688 = vmatprep.subr.bf16.mxu0 0
        %1689 = vmatpush1.bf16.msra.mxu0 0
        %1690 = vmatprep.subr.bf16.mxu0 0
        %1691 = vmatpush1.bf16.msra.mxu0 0
        %1692 = vmatprep.subr.bf16.mxu0 0
        %1693 = vmatpush1.bf16.msra.mxu0 0
        %1694 = vmatprep.subr.bf16.mxu0 0
        %1695 = vmatpush1.bf16.msra.mxu0 0
        %1696 = vmatprep.subr.bf16.mxu0 0
        %1697 = vmatpush1.bf16.msra.mxu0 0
        %1698 = vmatprep.subr.bf16.mxu0 0
        %1699 = vmatpush1.bf16.msra.mxu0 0
        %1700 = vmatprep.subr.bf16.mxu0 0
        %1701 = vmatpush1.bf16.msra.mxu0 0
        %1702 = vmatprep.subr.bf16.mxu0 0
        %1703 = vmatpush1.bf16.msra.mxu0 0
        %1704 = vmatprep.subr.bf16.mxu0 0
        %1705 = vmatpush1.bf16.msra.mxu0 0
        %1706 = vmatprep.subr.bf16.mxu0 0
        %1707 = vmatpush1.bf16.msra.mxu0 0
        %1708 = vmatprep.subr.bf16.mxu0 0
        %1709 = vmatpush1.bf16.msra.mxu0 0
        %1710 = vmatprep.mubr.bf16.mxu0 0
        %1711 = vmatmul.mubr.bf16.gmra.mrb[0].mxu0 %v1676
        %v1712 = vpop.f32.mrb[0].mxu0
        %v1713 = vadd.f32 %v1661, %v1712
        %v1714 = vpop.f32.mrb[0].mxu0
        %v1715 = vpop.f32.mrb[0].mxu0
        %v1716 = vpop.f32.mrb[0].mxu0
        %1717 = vdwg.mxu0
        %1718 = vst.msk [vmem:[%s452] sm:$0xff] %vm471, %v1713
        %s1719 = sand.u32 %s237, 1
        %s1720 = scalar_lea.sflag [#allocation4], %s1719
        %s1721 = sand.u32 %s237, 1
        %s1722 = smul.addr %s1721, 8
        %s1723 = scalar_lea.vmem [#allocation13], %s1722
        // Predicated region
        $region77: #{tpu_custom_call.1} parent=51 // pred_check
          %p1724 = pneg %p247
        $region78: #{tpu_custom_call.1} parent=51 // pred_check_branch
          %1726 = sbr.rel (%p1724) target = $region80
        $region79: #{tpu_custom_call.1} parent=51 // pred_region
          %s1728 = ssub.s32 128, 128
          %1729 = vsyncadd %s1720, %s1728
          %s1730 = sadd.s32 %s35, %s34
          %s1731 = smul.addr %s1730, 128
          %s1732 = scalar_lea.hbm %s8, %s1731
          %s1734 = sshll.u32 %s1723, 4
          %s1735 = int_to_ptr.vmem [resolvable:$true] %s1734
          %1737 = dma.vmem_to_hbm [thread:$0]  %s1735, 128, %s1732, %s1720
        $region80: #{tpu_custom_call.1} parent=51 // pred_fallthru
          _
      $region52: #{tpu_custom_call.1} parent=5 // pred_fallthru
        _
      %p1738 = scmp.le.s32.totalorder 2, %s25
      // Predicated region
      $region81: #{tpu_custom_call.1} parent=5 // pred_check
        %p1739 = pneg %p1738
      $region82: #{tpu_custom_call.1} parent=5 // pred_check_branch
        %1741 = sbr.rel (%p1739) target = $region84
      $region83: #{tpu_custom_call.1} parent=5 // pred_region
        %s1742 = ssub.s32 %s25, 2
        // Predicated region
        $region85: #{tpu_custom_call.1} parent=83 // pred_check
          %p1743 = pneg %p253
        $region86: #{tpu_custom_call.1} parent=83 // pred_check_branch
          %1745 = sbr.rel (%p1743) target = $region88
        $region87: #{tpu_custom_call.1} parent=83 // pred_region
          %s1746 = sand.u32 %s238, 1
          %s1747 = scalar_lea.sflag [#allocation4], %s1746
          %s1748 = sand.u32 %s238, 1
          %s1749 = smul.addr %s1748, 8
          %s1750 = scalar_lea.vmem [#allocation13], %s1749
          %1751 = dma.done %s1747, 128
        $region88: #{tpu_custom_call.1} parent=83 // pred_fallthru
          _
      $region84: #{tpu_custom_call.1} parent=5 // pred_fallthru
        _
    $region6: #{tpu_custom_call.1} parent=1 // loop_footer
      %s29 = sadd.s32 1, %s25
    $region7: #{tpu_custom_call.1} parent=1 // loop_footer_branch
      %24 = sbr.rel target = $region3
    $region8: #{tpu_custom_call.1} parent=1 // loop_exit
      _
    %1752 = vsyncpa [#allocation3], 1
    %s1753 = scalar_lea.sflag [#allocation3], 1
    %1754 = vsyncpa %s1753, 1
    %1755 = vsyncpa [#allocation6], 1
    %s1756 = scalar_lea.sflag [#allocation6], 1
    %1757 = vsyncpa %s1756, 1
    %1758 = vsyncpa [#allocation9], 1
    %1759 = vsyncpa [#allocation12], 1
    %1760 = vsyncpa [#allocation4], 1
    %s1761 = scalar_lea.sflag [#allocation4], 1
    %1762 = vsyncpa %s1761, 1

// kernel: tpu_custom_call.1
$region0: #{tpu_custom_call.1}
  #allocation0 [shape = 'u32[]', space=smem, size = 0x4, offset = 0x4, fixed_abs, tag = 'smem constant byte address 0x4 - core index']
  #allocation1 [shape = 'u32[144,128]{1,0:T(1,128)}', space=vmem, size = 0x12000, scoped, tag = 'internal scratch']
  %s0 = inlined_call_operand.hbm [shape: bf16[2,8,32], index: 0, kind: input, shape index: {}]
  %s1 = inlined_call_operand.hbm [shape: bf16[2,8,32], index: 1, kind: input, shape index: {}]
  %s2 = inlined_call_operand.hbm [shape: bf16[2,8,32], index: 2, kind: input, shape index: {}]
  %s3 = inlined_call_operand.hbm [shape: bf16[32,32], index: 3, kind: input, shape index: {}]
  %s4 = inlined_call_operand.hbm [shape: bf16[32,32], index: 4, kind: input, shape index: {}]
  %s5 = inlined_call_operand.vmem [shape: bf16[32,32], index: 5, kind: input, shape index: {}]
  %s6 = inlined_call_operand.hbm [shape: bf16[32,32], index: 6, kind: input, shape index: {}]
  %s7 = inlined_call_operand.vmem [shape: f32[1,32], index: 7, kind: input, shape index: {}]
  %s8 = inlined_call_operand.hbm [shape: f32[2,8,32], index: 8, kind: output, shape index: {}]
  %s9 = sld [smem:[#allocation0]]
  $region89: #{tpu_custom_call.1} parent=0
    _
  %s11 = ssub.s32 1, %s9
  %s12 = scalar_select 0, %s11, %s9
  $region1: #{tpu_custom_call.1} parent=0
    #allocation2 [shape = 'u8[4096]{0}', space=vmem, size = 0x1000, scoped, tag = 'input window, operand 0']
    #allocation3 [shape = 's32[2]{0}', space=sflag, size = 0x8, scoped, tag = 'scoped memory for tpu_custom_call.1']
    #allocation4 [shape = 's32[2]{0}', space=sflag, size = 0x8, scoped, tag = 'scoped memory for tpu_custom_call.1']
    #allocation5 [shape = 'u8[4096]{0}', space=vmem, size = 0x1000, scoped, tag = 'input window, operand 1']
    #allocation6 [shape = 's32[2]{0}', space=sflag, size = 0x8, scoped, tag = 'scoped memory for tpu_custom_call.1']
    #allocation7 [shape = 'u8[4096]{0}', space=vmem, size = 0x1000, scoped, tag = 'input window, operand 2']
    #allocation8 [shape = 'u8[8192]{0}', space=vmem, size = 0x2000, scoped, tag = 'input window, operand 3, single buffered']
    #allocation9 [shape = 's32[1]{0}', space=sflag, size = 0x4, scoped, tag = 'scoped memory for tpu_custom_call.1']
    #allocation10 [shape = 'u8[8192]{0}', space=vmem, size = 0x2000, scoped, tag = 'input window, operand 4, single buffered']
    #allocation11 [shape = 'u8[8192]{0}', space=vmem, size = 0x2000, scoped, tag = 'input window, operand 6, single buffered']
    #allocation12 [shape = 's32[1]{0}', space=sflag, size = 0x4, scoped, tag = 'scoped memory for tpu_custom_call.1']
    #allocation13 [shape = 'u8[8192]{0}', space=vmem, size = 0x2000, scoped, tag = 'output window, operand 0']
    %13 = vsyncpa [#allocation3], 0
    %s14 = scalar_lea.sflag [#allocation3], 1
    %15 = vsyncpa %s14, 0
    %16 = vsyncpa [#allocation6], 0
    %s17 = scalar_lea.sflag [#allocation6], 1
    %18 = vsyncpa %s17, 0
    %19 = vsyncpa [#allocation9], 0
    %20 = vsyncpa [#allocation12], 0
    %21 = vsyncpa [#allocation4], 0
    %s22 = scalar_lea.sflag [#allocation4], 1
    %23 = vsyncpa %s22, 0
    loop: start=0, step=1, limit=4
    $region2: #{tpu_custom_call.1} parent=1 // loop_pre_header
      _
    $region3: #{tpu_custom_call.1} parent=1 // loop_header
      %s25 = sphi 0, %s29
      %p26 = scmp.ge.s32.totalorder %s25, 4
      %s32 = sphi 0, %s44
      %s33 = sphi 0, %s40
      %s34 = sphi 0, %s32
      %s35 = sphi 0, %s33
      %s36 = sphi 0, %s34
      %s37 = sphi 0, %s35
      %s49 = sphi 0, %s51
      %s52 = sphi 0, %s49
      %s53 = sphi 0, %s52
      %s69 = sphi 0, %s53
      %s75 = sphi 0, %s77
      %s78 = sphi 0, %s75
      %s79 = sphi 0, %s78
      %s95 = sphi 0, %s79
      %s101 = sphi 0, %s103
      %s104 = sphi 0, %s101
      %s105 = sphi 0, %s104
      %s121 = sphi 0, %s105
      %s125 = sphi 0, %s125
      %s127 = sphi 0, %s125
      %s128 = sphi 0, %s127
      %s142 = sphi 0, %s128
      %s146 = sphi 0, %s146
      %s148 = sphi 0, %s146
      %s149 = sphi 0, %s148
      %s163 = sphi 0, %s149
      %s167 = sphi 0, %s167
      %s169 = sphi 0, %s167
      %s170 = sphi 0, %s169
      %s184 = sphi 0, %s170
      %s188 = sphi 0, %s188
      %s190 = sphi 0, %s188
      %s191 = sphi 0, %s190
      %s205 = sphi 0, %s191
      %s209 = sphi 0, %s209
      %s211 = sphi 0, %s209
      %s212 = sphi 0, %s211
      %s226 = sphi 0, %s212
      %s234 = sphi 0, %s236
      %s237 = sphi 0, %s234
      %s238 = sphi 0, %s237
      %s254 = sphi 0, %s238
    $region4: #{tpu_custom_call.1} parent=1 // loop_header_branch
      %28 = sbr.rel (%p26) target = $region8
    $region5: #{tpu_custom_call.1} parent=1 // loop_body
      %s30 = ssub.s32 %s25, 1
      %s31 = ssub.s32 %s25, 2
      %s38 = sadd.s32 1, %s33
      %p39 = scmp.ge.s32.totalorder %s38, 1
      %s40 = scalar_select %p39, 0, %s38
      %s41 = sadd.s32 1, %s32
      %s42 = scalar_select %p39, %s41, %s32
      %p43 = scmp.ge.s32.totalorder %s42, 2
      %s44 = scalar_select %p43, 0, %s42
      %s45 = ssub.s32 %s32, %s44
      %s46 = ssub.s32 %s33, %s40
      %s47 = sor.u32 %s45, %s46
      %p48 = scmp.eq.s32.totalorder %s47, 0
      %s50 = sadd.s32 %s49, 1
      %s51 = scalar_select %p48, %s49, %s50
      %p54 = pneg %p48
      %p55 = scmp.eq.s32.totalorder %s25, 1
      %p56 = por %p54, %p55
      %p57 = scmp.ne.s32.totalorder %s49, %s52
      %p58 = scmp.eq.s32.totalorder %s25, 0
      %p59 = por %p57, %p58
      %p60 = scmp.ne.s32.totalorder %s49, %s52
      %p61 = scmp.eq.s32.totalorder %s30, 1
      %p62 = por %p60, %p61
      %p63 = scmp.ne.s32.totalorder %s52, %s53
      %p64 = scmp.eq.s32.totalorder %s30, 0
      %p65 = por %p63, %p64
      %p66 = scmp.ne.s32.totalorder %s52, %s53
      %p67 = scmp.eq.s32.totalorder %s31, 1
      %p68 = por %p66, %p67
      %p70 = scmp.ne.s32.totalorder %s53, %s69
      %p71 = scmp.eq.s32.totalorder %s31, 0
      %p72 = por %p70, %p71
      %s73 = ssub.s32 %s32, %s44
      %p74 = scmp.eq.s32.totalorder %s73, 0
      %s76 = sadd.s32 %s75, 1
      %s77 = scalar_select %p74, %s75, %s76
      %p80 = pneg %p74
      %p81 = scmp.eq.s32.totalorder %s25, 1
      %p82 = por %p80, %p81
      %p83 = scmp.ne.s32.totalorder %s75, %s78
      %p84 = scmp.eq.s32.totalorder %s25, 0
      %p85 = por %p83, %p84
      %p86 = scmp.ne.s32.totalorder %s75, %s78
      %p87 = scmp.eq.s32.totalorder %s30, 1
      %p88 = por %p86, %p87
      %p89 = scmp.ne.s32.totalorder %s78, %s79
      %p90 = scmp.eq.s32.totalorder %s30, 0
      %p91 = por %p89, %p90
      %p92 = scmp.ne.s32.totalorder %s78, %s79
      %p93 = scmp.eq.s32.totalorder %s31, 1
      %p94 = por %p92, %p93
      %p96 = scmp.ne.s32.totalorder %s79, %s95
      %p97 = scmp.eq.s32.totalorder %s31, 0
      %p98 = por %p96, %p97
      %s99 = ssub.s32 %s32, %s44
      %p100 = scmp.eq.s32.totalorder %s99, 0
      %s102 = sadd.s32 %s101, 1
      %s103 = scalar_select %p100, %s101, %s102
      %p106 = pneg %p100
      %p107 = scmp.eq.s32.totalorder %s25, 1
      %p108 = por %p106, %p107
      %p109 = scmp.ne.s32.totalorder %s101, %s104
      %p110 = scmp.eq.s32.totalorder %s25, 0
      %p111 = por %p109, %p110
      %p112 = scmp.ne.s32.totalorder %s101, %s104
      %p113 = scmp.eq.s32.totalorder %s30, 1
      %p114 = por %p112, %p113
      %p115 = scmp.ne.s32.totalorder %s104, %s105
      %p116 = scmp.eq.s32.totalorder %s30, 0
      %p117 = por %p115, %p116
      %p118 = scmp.ne.s32.totalorder %s104, %s105
      %p119 = scmp.eq.s32.totalorder %s31, 1
      %p120 = por %p118, %p119
      %p122 = scmp.ne.s32.totalorder %s105, %s121
      %p123 = scmp.eq.s32.totalorder %s31, 0
      %p124 = por %p122, %p123
      %s126 = sadd.s32 %s125, 1
      %p129 = scmp.eq.s32.totalorder %s25, 1
      %p130 = scmp.ne.s32.totalorder %s125, %s127
      %p131 = scmp.eq.s32.totalorder %s25, 0
      %p132 = por %p130, %p131
      %p133 = scmp.ne.s32.totalorder %s125, %s127
      %p134 = scmp.eq.s32.totalorder %s30, 1
      %p135 = por %p133, %p134
      %p136 = scmp.ne.s32.totalorder %s127, %s128
      %p137 = scmp.eq.s32.totalorder %s30, 0
      %p138 = por %p136, %p137
      %p139 = scmp.ne.s32.totalorder %s127, %s128
      %p140 = scmp.eq.s32.totalorder %s31, 1
      %p141 = por %p139, %p140
      %p143 = scmp.ne.s32.totalorder %s128, %s142
      %p144 = scmp.eq.s32.totalorder %s31, 0
      %p145 = por %p143, %p144
      %s147 = sadd.s32 %s146, 1
      %p150 = scmp.eq.s32.totalorder %s25, 1
      %p151 = scmp.ne.s32.totalorder %s146, %s148
      %p152 = scmp.eq.s32.totalorder %s25, 0
      %p153 = por %p151, %p152
      %p154 = scmp.ne.s32.totalorder %s146, %s148
      %p155 = scmp.eq.s32.totalorder %s30, 1
      %p156 = por %p154, %p155
      %p157 = scmp.ne.s32.totalorder %s148, %s149
      %p158 = scmp.eq.s32.totalorder %s30, 0
      %p159 = por %p157, %p158
      %p160 = scmp.ne.s32.totalorder %s148, %s149
      %p161 = scmp.eq.s32.totalorder %s31, 1
      %p162 = por %p160, %p161
      %p164 = scmp.ne.s32.totalorder %s149, %s163
      %p165 = scmp.eq.s32.totalorder %s31, 0
      %p166 = por %p164, %p165
      %s168 = sadd.s32 %s167, 1
      %p171 = scmp.eq.s32.totalorder %s25, 1
      %p172 = scmp.ne.s32.totalorder %s167, %s169
      %p173 = scmp.eq.s32.totalorder %s25, 0
      %p174 = por %p172, %p173
      %p175 = scmp.ne.s32.totalorder %s167, %s169
      %p176 = scmp.eq.s32.totalorder %s30, 1
      %p177 = por %p175, %p176
      %p178 = scmp.ne.s32.totalorder %s169, %s170
      %p179 = scmp.eq.s32.totalorder %s30, 0
      %p180 = por %p178, %p179
      %p181 = scmp.ne.s32.totalorder %s169, %s170
      %p182 = scmp.eq.s32.totalorder %s31, 1
      %p183 = por %p181, %p182
      %p185 = scmp.ne.s32.totalorder %s170, %s184
      %p186 = scmp.eq.s32.totalorder %s31, 0
      %p187 = por %p185, %p186
      %s189 = sadd.s32 %s188, 1
      %p192 = scmp.eq.s32.totalorder %s25, 1
      %p193 = scmp.ne.s32.totalorder %s188, %s190
      %p194 = scmp.eq.s32.totalorder %s25, 0
      %p195 = por %p193, %p194
      %p196 = scmp.ne.s32.totalorder %s188, %s190
      %p197 = scmp.eq.s32.totalorder %s30, 1
      %p198 = por %p196, %p197
      %p199 = scmp.ne.s32.totalorder %s190, %s191
      %p200 = scmp.eq.s32.totalorder %s30, 0
      %p201 = por %p199, %p200
      %p202 = scmp.ne.s32.totalorder %s190, %s191
      %p203 = scmp.eq.s32.totalorder %s31, 1
      %p204 = por %p202, %p203
      %p206 = scmp.ne.s32.totalorder %s191, %s205
      %p207 = scmp.eq.s32.totalorder %s31, 0
      %p208 = por %p206, %p207
      %s210 = sadd.s32 %s209, 1
      %p213 = scmp.eq.s32.totalorder %s25, 1
      %p214 = scmp.ne.s32.totalorder %s209, %s211
      %p215 = scmp.eq.s32.totalorder %s25, 0
      %p216 = por %p214, %p215
      %p217 = scmp.ne.s32.totalorder %s209, %s211
      %p218 = scmp.eq.s32.totalorder %s30, 1
      %p219 = por %p217, %p218
      %p220 = scmp.ne.s32.totalorder %s211, %s212
      %p221 = scmp.eq.s32.totalorder %s30, 0
      %p222 = por %p220, %p221
      %p223 = scmp.ne.s32.totalorder %s211, %s212
      %p224 = scmp.eq.s32.totalorder %s31, 1
      %p225 = por %p223, %p224
      %p227 = scmp.ne.s32.totalorder %s212, %s226
      %p228 = scmp.eq.s32.totalorder %s31, 0
      %p229 = por %p227, %p228
      %s230 = ssub.s32 %s32, %s44
      %s231 = ssub.s32 %s33, %s40
      %s232 = sor.u32 %s230, %s231
      %p233 = scmp.eq.s32.totalorder %s232, 0
      %s235 = sadd.s32 %s234, 1
      %s236 = scalar_select %p233, %s234, %s235
      %p239 = pneg %p233
      %p240 = scmp.eq.s32.totalorder %s25, 1
      %p241 = por %p239, %p240
      %p242 = scmp.ne.s32.totalorder %s234, %s237
      %p243 = scmp.eq.s32.totalorder %s25, 0
      %p244 = por %p242, %p243
      %p245 = scmp.ne.s32.totalorder %s234, %s237
      %p246 = scmp.eq.s32.totalorder %s30, 1
      %p247 = por %p245, %p246
      %p248 = scmp.ne.s32.totalorder %s237, %s238
      %p249 = scmp.eq.s32.totalorder %s30, 0
      %p250 = por %p248, %p249
      %p251 = scmp.ne.s32.totalorder %s237, %s238
      %p252 = scmp.eq.s32.totalorder %s31, 1
      %p253 = por %p251, %p252
      %p255 = scmp.ne.s32.totalorder %s238, %s254
      %p256 = scmp.eq.s32.totalorder %s31, 0
      %p257 = por %p255, %p256
      %p258 = scmp.le.s32.totalorder 1, %s25
      %p259 = scmp.lt.s32.totalorder %s25, 3
      %p260 = pnand %p258, %p259
      %p261 = pneg %p260
      // Predicated region
      $region9: #{tpu_custom_call.1} parent=5 // pred_check
        _
      $region10: #{tpu_custom_call.1} parent=5 // pred_check_branch
        %263 = sbr.rel (%p260) target = $region12
      $region11: #{tpu_custom_call.1} parent=5 // pred_region
        %s264 = ssub.s32 %s25, 1
        // Predicated region
        $region13: #{tpu_custom_call.1} parent=11 // pred_check
          %p265 = pneg %p138
        $region14: #{tpu_custom_call.1} parent=11 // pred_check_branch
          %267 = sbr.rel (%p265) target = $region16
        $region15: #{tpu_custom_call.1} parent=11 // pred_region
          %s269 = ssub.s32 256, 256
          %270 = vsyncadd [#allocation9], %s269
          %s271 = sshll.u32 [#allocation8], 4
          %s272 = int_to_ptr.vmem [resolvable:$true] %s271
          %277 = dma.hbm_to_vmem [thread:$0]  %s3, 256, %s272, [#allocation9], 64, 64, 4
        $region16: #{tpu_custom_call.1} parent=11 // pred_fallthru
          _
        // Predicated region
        $region17: #{tpu_custom_call.1} parent=11 // pred_check
          %p278 = pneg %p159
        $region18: #{tpu_custom_call.1} parent=11 // pred_check_branch
          %280 = sbr.rel (%p278) target = $region20
        $region19: #{tpu_custom_call.1} parent=11 // pred_region
          %s282 = ssub.s32 256, 256
          %283 = vsyncadd [#allocation9], %s282
          %s284 = sshll.u32 [#allocation10], 4
          %s285 = int_to_ptr.vmem [resolvable:$true] %s284
          %290 = dma.hbm_to_vmem [thread:$0]  %s4, 256, %s285, [#allocation9], 64, 64, 4
        $region20: #{tpu_custom_call.1} parent=11 // pred_fallthru
          _
        // Predicated region
        $region21: #{tpu_custom_call.1} parent=11 // pred_check
          %p291 = pneg %p180
        $region22: #{tpu_custom_call.1} parent=11 // pred_check_branch
          %293 = sbr.rel (%p291) target = $region24
        $region23: #{tpu_custom_call.1} parent=11 // pred_region
          _
        $region24: #{tpu_custom_call.1} parent=11 // pred_fallthru
          _
        // Predicated region
        $region25: #{tpu_custom_call.1} parent=11 // pred_check
          %p294 = pneg %p201
        $region26: #{tpu_custom_call.1} parent=11 // pred_check_branch
          %296 = sbr.rel (%p294) target = $region28
        $region27: #{tpu_custom_call.1} parent=11 // pred_region
          %s298 = ssub.s32 256, 256
          %299 = vsyncadd [#allocation12], %s298
          %s300 = sshll.u32 [#allocation11], 4
          %s301 = int_to_ptr.vmem [resolvable:$true] %s300
          %306 = dma.hbm_to_vmem [thread:$0]  %s6, 256, %s301, [#allocation12], 64, 64, 4
        $region28: #{tpu_custom_call.1} parent=11 // pred_fallthru
          _
        // Predicated region
        $region29: #{tpu_custom_call.1} parent=11 // pred_check
          %p307 = pneg %p222
        $region30: #{tpu_custom_call.1} parent=11 // pred_check_branch
          %309 = sbr.rel (%p307) target = $region32
        $region31: #{tpu_custom_call.1} parent=11 // pred_region
          _
        $region32: #{tpu_custom_call.1} parent=11 // pred_fallthru
          _
      $region12: #{tpu_custom_call.1} parent=5 // pred_fallthru
        _
      %p310 = scmp.lt.s32.totalorder %s25, 2
      // Predicated region
      $region33: #{tpu_custom_call.1} parent=5 // pred_check
        %p311 = pneg %p310
      $region34: #{tpu_custom_call.1} parent=5 // pred_check_branch
        %313 = sbr.rel (%p311) target = $region36
      $region35: #{tpu_custom_call.1} parent=5 // pred_region
        // Predicated region
        $region37: #{tpu_custom_call.1} parent=35 // pred_check
          %p314 = pneg %p59
        $region38: #{tpu_custom_call.1} parent=35 // pred_check_branch
          %316 = sbr.rel (%p314) target = $region40
        $region39: #{tpu_custom_call.1} parent=35 // pred_region
          %s317 = sand.u32 %s49, 1
          %s318 = scalar_lea.sflag [#allocation3], %s317
          %s319 = sand.u32 %s49, 1
          %s320 = smul.addr %s319, 4
          %s321 = scalar_lea.vmem [#allocation2], %s320
          %s323 = ssub.s32 64, 64
          %324 = vsyncadd %s318, %s323
          %s325 = sadd.s32 %s33, %s32
          %s326 = smul.addr %s325, 64
          %s327 = scalar_lea.hbm %s0, %s326
          %s329 = sshll.u32 %s321, 4
          %s330 = int_to_ptr.vmem [resolvable:$true] %s329
          %332 = dma.hbm_to_vmem [thread:$0]  %s327, 64, %s330, %s318
        $region40: #{tpu_custom_call.1} parent=35 // pred_fallthru
          _
        // Predicated region
        $region41: #{tpu_custom_call.1} parent=35 // pred_check
          %p333 = pneg %p85
        $region42: #{tpu_custom_call.1} parent=35 // pred_check_branch
          %335 = sbr.rel (%p333) target = $region44
        $region43: #{tpu_custom_call.1} parent=35 // pred_region
          %s336 = sand.u32 %s25, 1
          %s337 = scalar_lea.sflag [#allocation6], %s336
          %s338 = sand.u32 %s75, 1
          %s339 = smul.addr %s338, 4
          %s340 = scalar_lea.vmem [#allocation5], %s339
          %s342 = ssub.s32 64, 64
          %343 = vsyncadd %s337, %s342
          %s344 = smul.addr %s32, 64
          %s345 = scalar_lea.hbm %s1, %s344
          %s347 = sshll.u32 %s340, 4
          %s348 = int_to_ptr.vmem [resolvable:$true] %s347
          %350 = dma.hbm_to_vmem [thread:$0]  %s345, 64, %s348, %s337
        $region44: #{tpu_custom_call.1} parent=35 // pred_fallthru
          _
        // Predicated region
        $region45: #{tpu_custom_call.1} parent=35 // pred_check
          %p351 = pneg %p111
        $region46: #{tpu_custom_call.1} parent=35 // pred_check_branch
          %353 = sbr.rel (%p351) target = $region48
        $region47: #{tpu_custom_call.1} parent=35 // pred_region
          %s354 = sand.u32 %s25, 1
          %s355 = scalar_lea.sflag [#allocation6], %s354
          %s356 = sand.u32 %s101, 1
          %s357 = smul.addr %s356, 4
          %s358 = scalar_lea.vmem [#allocation7], %s357
          %s360 = ssub.s32 64, 64
          %361 = vsyncadd %s355, %s360
          %s362 = smul.addr %s32, 64
          %s363 = scalar_lea.hbm %s2, %s362
          %s365 = sshll.u32 %s358, 4
          %s366 = int_to_ptr.vmem [resolvable:$true] %s365
          %368 = dma.hbm_to_vmem [thread:$0]  %s363, 64, %s366, %s355
        $region48: #{tpu_custom_call.1} parent=35 // pred_fallthru
          _
      $region36: #{tpu_custom_call.1} parent=5 // pred_fallthru
        _
      %p369 = scmp.le.s32.totalorder 1, %s25
      %p370 = scmp.lt.s32.totalorder %s25, 3
      %p371 = pnand %p369, %p370
      %p372 = pneg %p371
      // Predicated region
      $region49: #{tpu_custom_call.1} parent=5 // pred_check
        _
      $region50: #{tpu_custom_call.1} parent=5 // pred_check_branch
        %374 = sbr.rel (%p371) target = $region52
      $region51: #{tpu_custom_call.1} parent=5 // pred_region
        %s375 = ssub.s32 %s25, 1
        %s376 = sand.u32 %s52, 1
        %s377 = scalar_lea.sflag [#allocation3], %s376
        %s378 = sand.u32 %s52, 1
        %s379 = smul.addr %s378, 4
        %s380 = scalar_lea.vmem [#allocation2], %s379
        // Predicated region
        $region53: #{tpu_custom_call.1} parent=51 // pred_check
          %p381 = pneg %p65
        $region54: #{tpu_custom_call.1} parent=51 // pred_check_branch
          %383 = sbr.rel (%p381) target = $region56
        $region55: #{tpu_custom_call.1} parent=51 // pred_region
          %384 = dma.done %s377, 64
        $region56: #{tpu_custom_call.1} parent=51 // pred_fallthru
          _
        %s385 = sand.u32 %s30, 1
        %s386 = scalar_lea.sflag [#allocation6], %s385
        %s387 = sand.u32 %s78, 1
        %s388 = smul.addr %s387, 4
        %s389 = scalar_lea.vmem [#allocation5], %s388
        // Predicated region
        $region57: #{tpu_custom_call.1} parent=51 // pred_check
          %p390 = pneg %p91
        $region58: #{tpu_custom_call.1} parent=51 // pred_check_branch
          %392 = sbr.rel (%p390) target = $region60
        $region59: #{tpu_custom_call.1} parent=51 // pred_region
          %393 = dma.done %s386, 64
        $region60: #{tpu_custom_call.1} parent=51 // pred_fallthru
          _
        %s394 = sand.u32 %s30, 1
        %s395 = scalar_lea.sflag [#allocation6], %s394
        %s396 = sand.u32 %s104, 1
        %s397 = smul.addr %s396, 4
        %s398 = scalar_lea.vmem [#allocation7], %s397
        // Predicated region
        $region61: #{tpu_custom_call.1} parent=51 // pred_check
          %p399 = pneg %p117
        $region62: #{tpu_custom_call.1} parent=51 // pred_check_branch
          %401 = sbr.rel (%p399) target = $region64
        $region63: #{tpu_custom_call.1} parent=51 // pred_region
          %402 = dma.done %s395, 64
        $region64: #{tpu_custom_call.1} parent=51 // pred_fallthru
          _
        // Predicated region
        $region65: #{tpu_custom_call.1} parent=51 // pred_check
          %p403 = pneg %p138
        $region66: #{tpu_custom_call.1} parent=51 // pred_check_branch
          %405 = sbr.rel (%p403) target = $region68
        $region67: #{tpu_custom_call.1} parent=51 // pred_region
          %406 = dma.done [#allocation9], 256
        $region68: #{tpu_custom_call.1} parent=51 // pred_fallthru
          _
        // Predicated region
        $region69: #{tpu_custom_call.1} parent=51 // pred_check
          %p407 = pneg %p159
        $region70: #{tpu_custom_call.1} parent=51 // pred_check_branch
          %409 = sbr.rel (%p407) target = $region72
        $region71: #{tpu_custom_call.1} parent=51 // pred_region
          %410 = dma.done [#allocation9], 256
        $region72: #{tpu_custom_call.1} parent=51 // pred_fallthru
          _
        // Predicated region
        $region73: #{tpu_custom_call.1} parent=51 // pred_check
          %p411 = pneg %p201
        $region74: #{tpu_custom_call.1} parent=51 // pred_check_branch
          %413 = sbr.rel (%p411) target = $region76
        $region75: #{tpu_custom_call.1} parent=51 // pred_region
          %414 = dma.done [#allocation12], 256
        $region76: #{tpu_custom_call.1} parent=51 // pred_fallthru
          _
        %s415 = sand.u32 %s52, 1
        %s416 = scalar_lea.sflag [#allocation3], %s415
        %s417 = sand.u32 %s52, 1
        %s418 = smul.addr %s417, 4
        %s419 = scalar_lea.vmem [#allocation2], %s418
        %p420 = pneg %p65
        %p421 = pneg %p62
        %s422 = sand.u32 %s30, 1
        %s423 = scalar_lea.sflag [#allocation6], %s422
        %s424 = sand.u32 %s78, 1
        %s425 = smul.addr %s424, 4
        %s426 = scalar_lea.vmem [#allocation5], %s425
        %p427 = pneg %p91
        %p428 = pneg %p88
        %s429 = sand.u32 %s30, 1
        %s430 = scalar_lea.sflag [#allocation6], %s429
        %s431 = sand.u32 %s104, 1
        %s432 = smul.addr %s431, 4
        %s433 = scalar_lea.vmem [#allocation7], %s432
        %p434 = pneg %p117
        %p435 = pneg %p114
        %p436 = pneg %p138
        %p437 = pneg %p135
        %p438 = pneg %p159
        %p439 = pneg %p156
        %p440 = pneg %p180
        %p441 = pneg %p177
        %p442 = pneg %p201
        %p443 = pneg %p198
        %p444 = pneg %p222
        %p445 = pneg %p219
        %p446 = pneg %p250
        %p447 = pneg %p247
        %s448 = sand.u32 %s237, 1
        %s449 = scalar_lea.sflag [#allocation4], %s448
        %s450 = sand.u32 %s237, 1
        %s451 = smul.addr %s450, 8
        %s452 = scalar_lea.vmem [#allocation13], %s451
        %v454 = vld [vmem:[%s380] sm:$0xf]
        %v455 = vld [vmem:[#allocation8] sm:$0xf]
        %v456 = vld [vmem:[#allocation8 + $0x4] sm:$0xf]
        %v457 = vld [vmem:[#allocation8 + $0x8] sm:$0xf]
        %v458 = vld [vmem:[#allocation8 + $0xc] sm:$0xf]
        %v463 = vunpack.c.l.b16 %v455
        %v464 = vunpack.c.l.b16 %v456
        %v465 = vunpack.c.l.b16 %v457
        %v466 = vunpack.c.l.b16 %v458
        %v467 = vpack.c.b16 %v464, %v463
        %v468 = vpack.c.b16 %v466, %v465
        %vm471 = vcmask 261120
        %v473 = vsel %vm471, %v454, 0
        %475 = vmatprep.subr.bf16.mxu0 0
        %476 = vmatpush1.bf16.msra.mxu0 %v467
        %477 = vmatprep.subr.bf16.mxu0 0
        %478 = vmatpush1.bf16.msra.mxu0 %v468
        %479 = vmatprep.subr.bf16.mxu0 0
        %480 = vmatpush1.bf16.msra.mxu0 0
        %481 = vmatprep.subr.bf16.mxu0 0
        %482 = vmatpush1.bf16.msra.mxu0 0
        %483 = vmatprep.subr.bf16.mxu0 0
        %484 = vmatpush1.bf16.msra.mxu0 0
        %485 = vmatprep.subr.bf16.mxu0 0
        %486 = vmatpush1.bf16.msra.mxu0 0
        %487 = vmatprep.subr.bf16.mxu0 0
        %488 = vmatpush1.bf16.msra.mxu0 0
        %489 = vmatprep.subr.bf16.mxu0 0
        %490 = vmatpush1.bf16.msra.mxu0 0
        %491 = vmatprep.subr.bf16.mxu0 0
        %492 = vmatpush1.bf16.msra.mxu0 0
        %493 = vmatprep.subr.bf16.mxu0 0
        %494 = vmatpush1.bf16.msra.mxu0 0
        %495 = vmatprep.subr.bf16.mxu0 0
        %496 = vmatpush1.bf16.msra.mxu0 0
        %497 = vmatprep.subr.bf16.mxu0 0
        %498 = vmatpush1.bf16.msra.mxu0 0
        %499 = vmatprep.subr.bf16.mxu0 0
        %500 = vmatpush1.bf16.msra.mxu0 0
        %501 = vmatprep.subr.bf16.mxu0 0
        %502 = vmatpush1.bf16.msra.mxu0 0
        %503 = vmatprep.subr.bf16.mxu0 0
        %504 = vmatpush1.bf16.msra.mxu0 0
        %505 = vmatprep.subr.bf16.mxu0 0
        %506 = vmatpush1.bf16.msra.mxu0 0
        %507 = vmatprep.mubr.bf16.mxu0 0
        %508 = vmatmul.mubr.bf16.gmra.mrb[0].mxu0 %v473
        %v509 = vpop.f32.mrb[0].mxu0
        %v510 = vadd.f32 0.0, %v509
        %v511 = vpop.f32.mrb[0].mxu0
        %v512 = vpop.f32.mrb[0].mxu0
        %v513 = vpop.f32.mrb[0].mxu0
        %514 = vdwg.mxu0
        %v515 = vld [vmem:[%s389] sm:$0xf]
        %v516 = vld [vmem:[#allocation10] sm:$0xf]
        %v517 = vld [vmem:[#allocation10 + $0x4] sm:$0xf]
        %v518 = vld [vmem:[#allocation10 + $0x8] sm:$0xf]
        %v519 = vld [vmem:[#allocation10 + $0xc] sm:$0xf]
        %v524 = vunpack.c.l.b16 %v516
        %v525 = vunpack.c.l.b16 %v517
        %v526 = vunpack.c.l.b16 %v518
        %v527 = vunpack.c.l.b16 %v519
        %v528 = vpack.c.b16 %v525, %v524
        %v529 = vpack.c.b16 %v527, %v526
        %v533 = vsel %vm471, %v515, 0
        %535 = vmatprep.subr.bf16.mxu0 0
        %536 = vmatpush1.bf16.msra.mxu0 %v528
        %537 = vmatprep.subr.bf16.mxu0 0
        %538 = vmatpush1.bf16.msra.mxu0 %v529
        %539 = vmatprep.subr.bf16.mxu0 0
        %540 = vmatpush1.bf16.msra.mxu0 0
        %541 = vmatprep.subr.bf16.mxu0 0
        %542 = vmatpush1.bf16.msra.mxu0 0
        %543 = vmatprep.subr.bf16.mxu0 0
        %544 = vmatpush1.bf16.msra.mxu0 0
        %545 = vmatprep.subr.bf16.mxu0 0
        %546 = vmatpush1.bf16.msra.mxu0 0
        %547 = vmatprep.subr.bf16.mxu0 0
        %548 = vmatpush1.bf16.msra.mxu0 0
        %549 = vmatprep.subr.bf16.mxu0 0
        %550 = vmatpush1.bf16.msra.mxu0 0
        %551 = vmatprep.subr.bf16.mxu0 0
        %552 = vmatpush1.bf16.msra.mxu0 0
        %553 = vmatprep.subr.bf16.mxu0 0
        %554 = vmatpush1.bf16.msra.mxu0 0
        %555 = vmatprep.subr.bf16.mxu0 0
        %556 = vmatpush1.bf16.msra.mxu0 0
        %557 = vmatprep.subr.bf16.mxu0 0
        %558 = vmatpush1.bf16.msra.mxu0 0
        %559 = vmatprep.subr.bf16.mxu0 0
        %560 = vmatpush1.bf16.msra.mxu0 0
        %561 = vmatprep.subr.bf16.mxu0 0
        %562 = vmatpush1.bf16.msra.mxu0 0
        %563 = vmatprep.subr.bf16.mxu0 0
        %564 = vmatpush1.bf16.msra.mxu0 0
        %565 = vmatprep.subr.bf16.mxu0 0
        %566 = vmatpush1.bf16.msra.mxu0 0
        %567 = vmatprep.mubr.bf16.mxu0 0
        %568 = vmatmul.mubr.bf16.gmra.mrb[0].mxu0 %v533
        %v569 = vpop.f32.mrb[0].mxu0
        %v570 = vadd.f32 0.0, %v569
        %v571 = vpop.f32.mrb[0].mxu0
        %v572 = vpop.f32.mrb[0].mxu0
        %v573 = vpop.f32.mrb[0].mxu0
        %574 = vdwg.mxu0
        %v575 = vld [vmem:[%s398] sm:$0xf]
        %v576 = vld [vmem:[%s5] sm:$0xf]
        %v577 = vld [vmem:[%s5 + $0x4] sm:$0xf]
        %v578 = vld [vmem:[%s5 + $0x8] sm:$0xf]
        %v579 = vld [vmem:[%s5 + $0xc] sm:$0xf]
        %v584 = vunpack.c.l.b16 %v576
        %v585 = vunpack.c.l.b16 %v577
        %v586 = vunpack.c.l.b16 %v578
        %v587 = vunpack.c.l.b16 %v579
        %v588 = vpack.c.b16 %v585, %v584
        %v589 = vpack.c.b16 %v587, %v586
        %v593 = vsel %vm471, %v575, 0
        %595 = vmatprep.subr.bf16.mxu0 0
        %596 = vmatpush1.bf16.msra.mxu0 %v588
        %597 = vmatprep.subr.bf16.mxu0 0
        %598 = vmatpush1.bf16.msra.mxu0 %v589
        %599 = vmatprep.subr.bf16.mxu0 0
        %600 = vmatpush1.bf16.msra.mxu0 0
        %601 = vmatprep.subr.bf16.mxu0 0
        %602 = vmatpush1.bf16.msra.mxu0 0
        %603 = vmatprep.subr.bf16.mxu0 0
        %604 = vmatpush1.bf16.msra.mxu0 0
        %605 = vmatprep.subr.bf16.mxu0 0
        %606 = vmatpush1.bf16.msra.mxu0 0
        %607 = vmatprep.subr.bf16.mxu0 0
        %608 = vmatpush1.bf16.msra.mxu0 0
        %609 = vmatprep.subr.bf16.mxu0 0
        %610 = vmatpush1.bf16.msra.mxu0 0
        %611 = vmatprep.subr.bf16.mxu0 0
        %612 = vmatpush1.bf16.msra.mxu0 0
        %613 = vmatprep.subr.bf16.mxu0 0
        %614 = vmatpush1.bf16.msra.mxu0 0
        %615 = vmatprep.subr.bf16.mxu0 0
        %616 = vmatpush1.bf16.msra.mxu0 0
        %617 = vmatprep.subr.bf16.mxu0 0
        %618 = vmatpush1.bf16.msra.mxu0 0
        %619 = vmatprep.subr.bf16.mxu0 0
        %620 = vmatpush1.bf16.msra.mxu0 0
        %621 = vmatprep.subr.bf16.mxu0 0
        %622 = vmatpush1.bf16.msra.mxu0 0
        %623 = vmatprep.subr.bf16.mxu0 0
        %624 = vmatpush1.bf16.msra.mxu0 0
        %625 = vmatprep.subr.bf16.mxu0 0
        %626 = vmatpush1.bf16.msra.mxu0 0
        %627 = vmatprep.mubr.bf16.mxu0 0
        %628 = vmatmul.mubr.bf16.gmra.mrb[0].mxu0 %v593
        %v629 = vpop.f32.mrb[0].mxu0
        %v630 = vadd.f32 0.0, %v629
        %v631 = vpop.f32.mrb[0].mxu0
        %v632 = vpop.f32.mrb[0].mxu0
        %v633 = vpop.f32.mrb[0].mxu0
        %634 = vdwg.mxu0
        %v635 = vmul.f32 %v510, 0.35355338
        %637 = vrot.lane.b32.xlu0 %v635, 120
        %v638 = vpop.permute.xlu0 %637
        %640 = vrot.lane.b32.xlu0 %v635, 112
        %v641 = vpop.permute.xlu0 %640
        %643 = vrot.lane.b32.xlu0 %v635, 104
        %v644 = vpop.permute.xlu0 %643
        %v646 = vcombine.low %v635, %v641
        %v647 = vcombine.high %v635, %v641
        %v649 = vunpack.c.l.s4 1983009808
        %v650 = vunpack.c.0.s8 %v649
        %v651 = vlaneseq
        %v652 = vshrl.u32 %v651, 7
        %v653 = vsub.s32 %v650, %v652
        %v654 = vrot.slane %v646, %v653
        %v656 = vunpack.c.l.s4 1983009808
        %v657 = vunpack.c.0.s8 %v656
        %v658 = vlaneseq
        %v659 = vshrl.u32 %v658, 7
        %v660 = vsub.s32 %v657, %v659
        %v661 = vrot.slane %v647, %v660
        %v662 = vcombine.low %v638, %v644
        %v663 = vcombine.high %v638, %v644
        %v665 = vunpack.c.l.s4 1983009808
        %v666 = vunpack.c.0.s8 %v665
        %v667 = vlaneseq
        %v668 = vshrl.u32 %v667, 7
        %v669 = vsub.s32 %v666, %v668
        %v670 = vrot.slane %v662, %v669
        %v672 = vunpack.c.l.s4 1983009808
        %v673 = vunpack.c.0.s8 %v672
        %v674 = vlaneseq
        %v675 = vshrl.u32 %v674, 7
        %v676 = vsub.s32 %v673, %v675
        %v677 = vrot.slane %v663, %v676
        %v678 = vcombine.low %v654, %v670
        %v679 = vcombine.high %v654, %v670
        %v681 = vunpack.c.l.s4 1934713408
        %v682 = vunpack.c.0.s8 %v681
        %v683 = vlaneseq
        %v684 = vshrl.u32 %v683, 7
        %v685 = vsub.s32 %v682, %v684
        %v686 = vrot.slane %v678, %v685
        %v688 = vunpack.c.l.s4 1934713408
        %v689 = vunpack.c.0.s8 %v688
        %v690 = vlaneseq
        %v691 = vshrl.u32 %v690, 7
        %v692 = vsub.s32 %v689, %v691
        %v693 = vrot.slane %v679, %v692
        %v694 = vcombine.low %v661, %v677
        %v695 = vcombine.high %v661, %v677
        %v697 = vunpack.c.l.s4 1934713408
        %v698 = vunpack.c.0.s8 %v697
        %v699 = vlaneseq
        %v700 = vshrl.u32 %v699, 7
        %v701 = vsub.s32 %v698, %v700
        %v702 = vrot.slane %v694, %v701
        %v704 = vunpack.c.l.s4 1934713408
        %v705 = vunpack.c.0.s8 %v704
        %v706 = vlaneseq
        %v707 = vshrl.u32 %v706, 7
        %v708 = vsub.s32 %v705, %v707
        %v709 = vrot.slane %v695, %v708
        %v710 = vcombine.high %v686, 0.0
        %v711 = vcombine.high %v693, 0.0
        %v712 = vcombine.high %v702, 0.0
        %v713 = vcombine.high %v709, 0.0
        %v714 = vpack.c.bf16 %v686, %v686
        %v715 = vpack.c.bf16 %v710, %v710
        %v716 = vpack.c.bf16 %v693, %v693
        %v717 = vpack.c.bf16 %v711, %v711
        %v718 = vpack.c.bf16 %v702, %v702
        %v719 = vpack.c.bf16 %v712, %v712
        %v720 = vpack.c.bf16 %v709, %v709
        %v721 = vpack.c.bf16 %v713, %v713
        %v722 = vcombine.low %v714, %v718
        %v724 = vunpack.c.l.s4 1983009808
        %v725 = vunpack.c.0.s8 %v724
        %v726 = vlaneseq
        %v727 = vshrl.u32 %v726, 7
        %v728 = vsub.s32 %v725, %v727
        %v729 = vrot.slane %v722, %v728
        %v730 = vcombine.low %v716, %v720
        %v732 = vunpack.c.l.s4 1983009808
        %v733 = vunpack.c.0.s8 %v732
        %v734 = vlaneseq
        %v735 = vshrl.u32 %v734, 7
        %v736 = vsub.s32 %v733, %v735
        %v737 = vrot.slane %v730, %v736
        %v738 = vcombine.low %v729, %v737
        %v740 = vunpack.c.l.s4 1934713408
        %v741 = vunpack.c.0.s8 %v740
        %v742 = vlaneseq
        %v743 = vshrl.u32 %v742, 7
        %v744 = vsub.s32 %v741, %v743
        %v745 = vrot.slane %v738, %v744
        %v746 = vcombine.high %v745, 0
        %v747 = vcombine.low %v715, %v719
        %v749 = vunpack.c.l.s4 1983009808
        %v750 = vunpack.c.0.s8 %v749
        %v751 = vlaneseq
        %v752 = vshrl.u32 %v751, 7
        %v753 = vsub.s32 %v750, %v752
        %v754 = vrot.slane %v747, %v753
        %v755 = vcombine.low %v717, %v721
        %v757 = vunpack.c.l.s4 1983009808
        %v758 = vunpack.c.0.s8 %v757
        %v759 = vlaneseq
        %v760 = vshrl.u32 %v759, 7
        %v761 = vsub.s32 %v758, %v760
        %v762 = vrot.slane %v755, %v761
        %v763 = vcombine.low %v754, %v762
        %v765 = vunpack.c.l.s4 1934713408
        %v766 = vunpack.c.0.s8 %v765
        %v767 = vlaneseq
        %v768 = vshrl.u32 %v767, 7
        %v769 = vsub.s32 %v766, %v768
        %v770 = vrot.slane %v763, %v769
        %v771 = vcombine.high %v770, 0
        %v774 = vpack.i.b16 %v770, %v745
        %v775 = vshrl.u32 %v745, 16
        %v776 = vshrl.u32 %v770, 16
        %v777 = vpack.i.b16 %v776, %v775
        %v780 = vpack.i.b16 %v771, %v746
        %v781 = vshrl.u32 %v746, 16
        %v782 = vshrl.u32 %v771, 16
        %v783 = vpack.i.b16 %v782, %v781
        %785 = vrot.lane.b32.xlu0 %v570, 120
        %v786 = vpop.permute.xlu0 %785
        %788 = vrot.lane.b32.xlu0 %v570, 112
        %v789 = vpop.permute.xlu0 %788
        %791 = vrot.lane.b32.xlu0 %v570, 104
        %v792 = vpop.permute.xlu0 %791
        %v794 = vcombine.low %v570, %v789
        %v795 = vcombine.high %v570, %v789
        %v797 = vunpack.c.l.s4 1983009808
        %v798 = vunpack.c.0.s8 %v797
        %v799 = vlaneseq
        %v800 = vshrl.u32 %v799, 7
        %v801 = vsub.s32 %v798, %v800
        %v802 = vrot.slane %v794, %v801
        %v804 = vunpack.c.l.s4 1983009808
        %v805 = vunpack.c.0.s8 %v804
        %v806 = vlaneseq
        %v807 = vshrl.u32 %v806, 7
        %v808 = vsub.s32 %v805, %v807
        %v809 = vrot.slane %v795, %v808
        %v810 = vcombine.low %v786, %v792
        %v811 = vcombine.high %v786, %v792
        %v813 = vunpack.c.l.s4 1983009808
        %v814 = vunpack.c.0.s8 %v813
        %v815 = vlaneseq
        %v816 = vshrl.u32 %v815, 7
        %v817 = vsub.s32 %v814, %v816
        %v818 = vrot.slane %v810, %v817
        %v820 = vunpack.c.l.s4 1983009808
        %v821 = vunpack.c.0.s8 %v820
        %v822 = vlaneseq
        %v823 = vshrl.u32 %v822, 7
        %v824 = vsub.s32 %v821, %v823
        %v825 = vrot.slane %v811, %v824
        %v826 = vcombine.low %v802, %v818
        %v827 = vcombine.high %v802, %v818
        %v829 = vunpack.c.l.s4 1934713408
        %v830 = vunpack.c.0.s8 %v829
        %v831 = vlaneseq
        %v832 = vshrl.u32 %v831, 7
        %v833 = vsub.s32 %v830, %v832
        %v834 = vrot.slane %v826, %v833
        %v836 = vunpack.c.l.s4 1934713408
        %v837 = vunpack.c.0.s8 %v836
        %v838 = vlaneseq
        %v839 = vshrl.u32 %v838, 7
        %v840 = vsub.s32 %v837, %v839
        %v841 = vrot.slane %v827, %v840
        %v842 = vcombine.low %v809, %v825
        %v843 = vcombine.high %v809, %v825
        %v845 = vunpack.c.l.s4 1934713408
        %v846 = vunpack.c.0.s8 %v845
        %v847 = vlaneseq
        %v848 = vshrl.u32 %v847, 7
        %v849 = vsub.s32 %v846, %v848
        %v850 = vrot.slane %v842, %v849
        %v852 = vunpack.c.l.s4 1934713408
        %v853 = vunpack.c.0.s8 %v852
        %v854 = vlaneseq
        %v855 = vshrl.u32 %v854, 7
        %v856 = vsub.s32 %v853, %v855
        %v857 = vrot.slane %v843, %v856
        %v858 = vcombine.high %v834, 0.0
        %v859 = vcombine.high %v841, 0.0
        %v860 = vcombine.high %v850, 0.0
        %v861 = vcombine.high %v857, 0.0
        %v862 = vpack.c.bf16 %v834, %v834
        %v863 = vpack.c.bf16 %v858, %v858
        %v864 = vpack.c.bf16 %v841, %v841
        %v865 = vpack.c.bf16 %v859, %v859
        %v866 = vpack.c.bf16 %v850, %v850
        %v867 = vpack.c.bf16 %v860, %v860
        %v868 = vpack.c.bf16 %v857, %v857
        %v869 = vpack.c.bf16 %v861, %v861
        %v870 = vcombine.low %v862, %v866
        %v872 = vunpack.c.l.s4 1983009808
        %v873 = vunpack.c.0.s8 %v872
        %v874 = vlaneseq
        %v875 = vshrl.u32 %v874, 7
        %v876 = vsub.s32 %v873, %v875
        %v877 = vrot.slane %v870, %v876
        %v878 = vcombine.low %v864, %v868
        %v880 = vunpack.c.l.s4 1983009808
        %v881 = vunpack.c.0.s8 %v880
        %v882 = vlaneseq
        %v883 = vshrl.u32 %v882, 7
        %v884 = vsub.s32 %v881, %v883
        %v885 = vrot.slane %v878, %v884
        %v886 = vcombine.low %v877, %v885
        %v888 = vunpack.c.l.s4 1934713408
        %v889 = vunpack.c.0.s8 %v888
        %v890 = vlaneseq
        %v891 = vshrl.u32 %v890, 7
        %v892 = vsub.s32 %v889, %v891
        %v893 = vrot.slane %v886, %v892
        %v894 = vcombine.high %v893, 0
        %v895 = vcombine.low %v863, %v867
        %v897 = vunpack.c.l.s4 1983009808
        %v898 = vunpack.c.0.s8 %v897
        %v899 = vlaneseq
        %v900 = vshrl.u32 %v899, 7
        %v901 = vsub.s32 %v898, %v900
        %v902 = vrot.slane %v895, %v901
        %v903 = vcombine.low %v865, %v869
        %v905 = vunpack.c.l.s4 1983009808
        %v906 = vunpack.c.0.s8 %v905
        %v907 = vlaneseq
        %v908 = vshrl.u32 %v907, 7
        %v909 = vsub.s32 %v906, %v908
        %v910 = vrot.slane %v903, %v909
        %v911 = vcombine.low %v902, %v910
        %v913 = vunpack.c.l.s4 1934713408
        %v914 = vunpack.c.0.s8 %v913
        %v915 = vlaneseq
        %v916 = vshrl.u32 %v915, 7
        %v917 = vsub.s32 %v914, %v916
        %v918 = vrot.slane %v911, %v917
        %v919 = vcombine.high %v918, 0
        %v922 = vpack.i.b16 %v918, %v893
        %v923 = vshrl.u32 %v893, 16
        %v924 = vshrl.u32 %v918, 16
        %v925 = vpack.i.b16 %v924, %v923
        %v928 = vpack.i.b16 %v919, %v894
        %v929 = vshrl.u32 %v894, 16
        %v930 = vshrl.u32 %v919, 16
        %v931 = vpack.i.b16 %v930, %v929
        %933 = vrot.lane.b32.xlu0 %v630, 120
        %v934 = vpop.permute.xlu0 %933
        %936 = vrot.lane.b32.xlu0 %v630, 112
        %v937 = vpop.permute.xlu0 %936
        %939 = vrot.lane.b32.xlu0 %v630, 104
        %v940 = vpop.permute.xlu0 %939
        %v942 = vcombine.low %v630, %v937
        %v943 = vcombine.high %v630, %v937
        %v945 = vunpack.c.l.s4 1983009808
        %v946 = vunpack.c.0.s8 %v945
        %v947 = vlaneseq
        %v948 = vshrl.u32 %v947, 7
        %v949 = vsub.s32 %v946, %v948
        %v950 = vrot.slane %v942, %v949
        %v952 = vunpack.c.l.s4 1983009808
        %v953 = vunpack.c.0.s8 %v952
        %v954 = vlaneseq
        %v955 = vshrl.u32 %v954, 7
        %v956 = vsub.s32 %v953, %v955
        %v957 = vrot.slane %v943, %v956
        %v958 = vcombine.low %v934, %v940
        %v959 = vcombine.high %v934, %v940
        %v961 = vunpack.c.l.s4 1983009808
        %v962 = vunpack.c.0.s8 %v961
        %v963 = vlaneseq
        %v964 = vshrl.u32 %v963, 7
        %v965 = vsub.s32 %v962, %v964
        %v966 = vrot.slane %v958, %v965
        %v968 = vunpack.c.l.s4 1983009808
        %v969 = vunpack.c.0.s8 %v968
        %v970 = vlaneseq
        %v971 = vshrl.u32 %v970, 7
        %v972 = vsub.s32 %v969, %v971
        %v973 = vrot.slane %v959, %v972
        %v974 = vcombine.low %v950, %v966
        %v975 = vcombine.high %v950, %v966
        %v977 = vunpack.c.l.s4 1934713408
        %v978 = vunpack.c.0.s8 %v977
        %v979 = vlaneseq
        %v980 = vshrl.u32 %v979, 7
        %v981 = vsub.s32 %v978, %v980
        %v982 = vrot.slane %v974, %v981
        %v984 = vunpack.c.l.s4 1934713408
        %v985 = vunpack.c.0.s8 %v984
        %v986 = vlaneseq
        %v987 = vshrl.u32 %v986, 7
        %v988 = vsub.s32 %v985, %v987
        %v989 = vrot.slane %v975, %v988
        %v990 = vcombine.low %v957, %v973
        %v991 = vcombine.high %v957, %v973
        %v993 = vunpack.c.l.s4 1934713408
        %v994 = vunpack.c.0.s8 %v993
        %v995 = vlaneseq
        %v996 = vshrl.u32 %v995, 7
        %v997 = vsub.s32 %v994, %v996
        %v998 = vrot.slane %v990, %v997
        %v1000 = vunpack.c.l.s4 1934713408
        %v1001 = vunpack.c.0.s8 %v1000
        %v1002 = vlaneseq
        %v1003 = vshrl.u32 %v1002, 7
        %v1004 = vsub.s32 %v1001, %v1003
        %v1005 = vrot.slane %v991, %v1004
        %v1006 = vcombine.high %v982, 0.0
        %v1007 = vcombine.high %v989, 0.0
        %v1008 = vcombine.high %v998, 0.0
        %v1009 = vcombine.high %v1005, 0.0
        %v1010 = vpack.c.bf16 %v982, %v982
        %v1011 = vpack.c.bf16 %v1006, %v1006
        %v1012 = vpack.c.bf16 %v989, %v989
        %v1013 = vpack.c.bf16 %v1007, %v1007
        %v1014 = vpack.c.bf16 %v998, %v998
        %v1015 = vpack.c.bf16 %v1008, %v1008
        %v1016 = vpack.c.bf16 %v1005, %v1005
        %v1017 = vpack.c.bf16 %v1009, %v1009
        %v1018 = vcombine.low %v1010, %v1014
        %v1020 = vunpack.c.l.s4 1983009808
        %v1021 = vunpack.c.0.s8 %v1020
        %v1022 = vlaneseq
        %v1023 = vshrl.u32 %v1022, 7
        %v1024 = vsub.s32 %v1021, %v1023
        %v1025 = vrot.slane %v1018, %v1024
        %v1026 = vcombine.low %v1012, %v1016
        %v1028 = vunpack.c.l.s4 1983009808
        %v1029 = vunpack.c.0.s8 %v1028
        %v1030 = vlaneseq
        %v1031 = vshrl.u32 %v1030, 7
        %v1032 = vsub.s32 %v1029, %v1031
        %v1033 = vrot.slane %v1026, %v1032
        %v1034 = vcombine.low %v1025, %v1033
        %v1036 = vunpack.c.l.s4 1934713408
        %v1037 = vunpack.c.0.s8 %v1036
        %v1038 = vlaneseq
        %v1039 = vshrl.u32 %v1038, 7
        %v1040 = vsub.s32 %v1037, %v1039
        %v1041 = vrot.slane %v1034, %v1040
        %v1042 = vcombine.high %v1041, 0
        %v1043 = vcombine.low %v1011, %v1015
        %v1045 = vunpack.c.l.s4 1983009808
        %v1046 = vunpack.c.0.s8 %v1045
        %v1047 = vlaneseq
        %v1048 = vshrl.u32 %v1047, 7
        %v1049 = vsub.s32 %v1046, %v1048
        %v1050 = vrot.slane %v1043, %v1049
        %v1051 = vcombine.low %v1013, %v1017
        %v1053 = vunpack.c.l.s4 1983009808
        %v1054 = vunpack.c.0.s8 %v1053
        %v1055 = vlaneseq
        %v1056 = vshrl.u32 %v1055, 7
        %v1057 = vsub.s32 %v1054, %v1056
        %v1058 = vrot.slane %v1051, %v1057
        %v1059 = vcombine.low %v1050, %v1058
        %v1061 = vunpack.c.l.s4 1934713408
        %v1062 = vunpack.c.0.s8 %v1061
        %v1063 = vlaneseq
        %v1064 = vshrl.u32 %v1063, 7
        %v1065 = vsub.s32 %v1062, %v1064
        %v1066 = vrot.slane %v1059, %v1065
        %v1067 = vcombine.high %v1066, 0
        %v1070 = vpack.i.b16 %v1066, %v1041
        %v1071 = vshrl.u32 %v1041, 16
        %v1072 = vshrl.u32 %v1066, 16
        %v1073 = vpack.i.b16 %v1072, %v1071
        %v1076 = vpack.i.b16 %v1067, %v1042
        %v1077 = vshrl.u32 %v1042, 16
        %v1078 = vshrl.u32 %v1067, 16
        %v1079 = vpack.i.b16 %v1078, %v1077
        %vm1080 = vcmask 64512
        %v1082 = vsel %vm1080, %v774, 0
        %v1085 = vsel %vm1080, %v922, 0
        %1087 = vmatprep.subr.bf16.mxu0 0
        %1088 = vmatpush1.bf16.xpose.msra.mxu0 %v1085
        %1089 = vmatprep.subr.bf16.mxu0 0
        %1090 = vmatpush1.bf16.xpose.msra.mxu0 0
        %1091 = vmatprep.subr.bf16.mxu0 0
        %1092 = vmatpush1.bf16.xpose.msra.mxu0 0
        %1093 = vmatprep.subr.bf16.mxu0 0
        %1094 = vmatpush1.bf16.xpose.msra.mxu0 0
        %1095 = vmatprep.subr.bf16.mxu0 0
        %1096 = vmatpush1.bf16.xpose.msra.mxu0 0
        %1097 = vmatprep.subr.bf16.mxu0 0
        %1098 = vmatpush1.bf16.xpose.msra.mxu0 0
        %1099 = vmatprep.subr.bf16.mxu0 0
        %1100 = vmatpush1.bf16.xpose.msra.mxu0 0
        %1101 = vmatprep.subr.bf16.mxu0 0
        %1102 = vmatpush1.bf16.xpose.msra.mxu0 0
        %1103 = vmatprep.subr.bf16.mxu0 0
        %1104 = vmatpush1.bf16.xpose.msra.mxu0 0
        %1105 = vmatprep.subr.bf16.mxu0 0
        %1106 = vmatpush1.bf16.xpose.msra.mxu0 0
        %1107 = vmatprep.subr.bf16.mxu0 0
        %1108 = vmatpush1.bf16.xpose.msra.mxu0 0
        %1109 = vmatprep.subr.bf16.mxu0 0
        %1110 = vmatpush1.bf16.xpose.msra.mxu0 0
        %1111 = vmatprep.subr.bf16.mxu0 0
        %1112 = vmatpush1.bf16.xpose.msra.mxu0 0
        %1113 = vmatprep.subr.bf16.mxu0 0
        %1114 = vmatpush1.bf16.xpose.msra.mxu0 0
        %1115 = vmatprep.subr.bf16.mxu0 0
        %1116 = vmatpush1.bf16.xpose.msra.mxu0 0
        %1117 = vmatprep.subr.bf16.mxu0 0
        %1118 = vmatpush1.bf16.xpose.msra.mxu0 0
        %1119 = vmatprep.mubr.bf16.mxu0 0
        %1120 = vmatmul.mubr.bf16.gmra.mrb[0].mxu0 %v1082
        %v1121 = vpop.f32.mrb[0].mxu0
        %v1122 = vadd.f32 0.0, %v1121
        %v1123 = vpop.f32.mrb[0].mxu0
        %v1124 = vpop.f32.mrb[0].mxu0
        %v1125 = vpop.f32.mrb[0].mxu0
        %1126 = vdwg.mxu0
        %v1128 = vsel %vm1080, %v777, 0
        %v1131 = vsel %vm1080, %v925, 0
        %1133 = vmatprep.subr.bf16.mxu0 0
        %1134 = vmatpush1.bf16.xpose.msra.mxu0 %v1131
        %1135 = vmatprep.subr.bf16.mxu0 0
        %1136 = vmatpush1.bf16.xpose.msra.mxu0 0
        %1137 = vmatprep.subr.bf16.mxu0 0
        %1138 = vmatpush1.bf16.xpose.msra.mxu0 0
        %1139 = vmatprep.subr.bf16.mxu0 0
        %1140 = vmatpush1.bf16.xpose.msra.mxu0 0
        %1141 = vmatprep.subr.bf16.mxu0 0
        %1142 = vmatpush1.bf16.xpose.msra.mxu0 0
        %1143 = vmatprep.subr.bf16.mxu0 0
        %1144 = vmatpush1.bf16.xpose.msra.mxu0 0
        %1145 = vmatprep.subr.bf16.mxu0 0
        %1146 = vmatpush1.bf16.xpose.msra.mxu0 0
        %1147 = vmatprep.subr.bf16.mxu0 0
        %1148 = vmatpush1.bf16.xpose.msra.mxu0 0
        %1149 = vmatprep.subr.bf16.mxu0 0
        %1150 = vmatpush1.bf16.xpose.msra.mxu0 0
        %1151 = vmatprep.subr.bf16.mxu0 0
        %1152 = vmatpush1.bf16.xpose.msra.mxu0 0
        %1153 = vmatprep.subr.bf16.mxu0 0
        %1154 = vmatpush1.bf16.xpose.msra.mxu0 0
        %1155 = vmatprep.subr.bf16.mxu0 0
        %1156 = vmatpush1.bf16.xpose.msra.mxu0 0
        %1157 = vmatprep.subr.bf16.mxu0 0
        %1158 = vmatpush1.bf16.xpose.msra.mxu0 0
        %1159 = vmatprep.subr.bf16.mxu0 0
        %1160 = vmatpush1.bf16.xpose.msra.mxu0 0
        %1161 = vmatprep.subr.bf16.mxu0 0
        %1162 = vmatpush1.bf16.xpose.msra.mxu0 0
        %1163 = vmatprep.subr.bf16.mxu0 0
        %1164 = vmatpush1.bf16.xpose.msra.mxu0 0
        %1165 = vmatprep.mubr.bf16.mxu0 0
        %1166 = vmatmul.mubr.bf16.gmra.mrb[0].mxu0 %v1128
        %v1167 = vpop.f32.mrb[0].mxu0
        %v1168 = vadd.f32 0.0, %v1167
        %v1169 = vpop.f32.mrb[0].mxu0
        %v1170 = vpop.f32.mrb[0].mxu0
        %v1171 = vpop.f32.mrb[0].mxu0
        %1172 = vdwg.mxu0
        %v1174 = vsel %vm1080, %v780, 0
        %v1177 = vsel %vm1080, %v928, 0
        %1179 = vmatprep.subr.bf16.mxu0 0
        %1180 = vmatpush1.bf16.xpose.msra.mxu0 %v1177
        %1181 = vmatprep.subr.bf16.mxu0 0
        %1182 = vmatpush1.bf16.xpose.msra.mxu0 0
        %1183 = vmatprep.subr.bf16.mxu0 0
        %1184 = vmatpush1.bf16.xpose.msra.mxu0 0
        %1185 = vmatprep.subr.bf16.mxu0 0
        %1186 = vmatpush1.bf16.xpose.msra.mxu0 0
        %1187 = vmatprep.subr.bf16.mxu0 0
        %1188 = vmatpush1.bf16.xpose.msra.mxu0 0
        %1189 = vmatprep.subr.bf16.mxu0 0
        %1190 = vmatpush1.bf16.xpose.msra.mxu0 0
        %1191 = vmatprep.subr.bf16.mxu0 0
        %1192 = vmatpush1.bf16.xpose.msra.mxu0 0
        %1193 = vmatprep.subr.bf16.mxu0 0
        %1194 = vmatpush1.bf16.xpose.msra.mxu0 0
        %1195 = vmatprep.subr.bf16.mxu0 0
        %1196 = vmatpush1.bf16.xpose.msra.mxu0 0
        %1197 = vmatprep.subr.bf16.mxu0 0
        %1198 = vmatpush1.bf16.xpose.msra.mxu0 0
        %1199 = vmatprep.subr.bf16.mxu0 0
        %1200 = vmatpush1.bf16.xpose.msra.mxu0 0
        %1201 = vmatprep.subr.bf16.mxu0 0
        %1202 = vmatpush1.bf16.xpose.msra.mxu0 0
        %1203 = vmatprep.subr.bf16.mxu0 0
        %1204 = vmatpush1.bf16.xpose.msra.mxu0 0
        %1205 = vmatprep.subr.bf16.mxu0 0
        %1206 = vmatpush1.bf16.xpose.msra.mxu0 0
        %1207 = vmatprep.subr.bf16.mxu0 0
        %1208 = vmatpush1.bf16.xpose.msra.mxu0 0
        %1209 = vmatprep.subr.bf16.mxu0 0
        %1210 = vmatpush1.bf16.xpose.msra.mxu0 0
        %1211 = vmatprep.mubr.bf16.mxu0 0
        %1212 = vmatmul.mubr.bf16.gmra.mrb[0].mxu0 %v1174
        %v1213 = vpop.f32.mrb[0].mxu0
        %v1214 = vadd.f32 0.0, %v1213
        %v1215 = vpop.f32.mrb[0].mxu0
        %v1216 = vpop.f32.mrb[0].mxu0
        %v1217 = vpop.f32.mrb[0].mxu0
        %1218 = vdwg.mxu0
        %v1220 = vsel %vm1080, %v783, 0
        %v1223 = vsel %vm1080, %v931, 0
        %1225 = vmatprep.subr.bf16.mxu0 0
        %1226 = vmatpush1.bf16.xpose.msra.mxu0 %v1223
        %1227 = vmatprep.subr.bf16.mxu0 0
        %1228 = vmatpush1.bf16.xpose.msra.mxu0 0
        %1229 = vmatprep.subr.bf16.mxu0 0
        %1230 = vmatpush1.bf16.xpose.msra.mxu0 0
        %1231 = vmatprep.subr.bf16.mxu0 0
        %1232 = vmatpush1.bf16.xpose.msra.mxu0 0
        %1233 = vmatprep.subr.bf16.mxu0 0
        %1234 = vmatpush1.bf16.xpose.msra.mxu0 0
        %1235 = vmatprep.subr.bf16.mxu0 0
        %1236 = vmatpush1.bf16.xpose.msra.mxu0 0
        %1237 = vmatprep.subr.bf16.mxu0 0
        %1238 = vmatpush1.bf16.xpose.msra.mxu0 0
        %1239 = vmatprep.subr.bf16.mxu0 0
        %1240 = vmatpush1.bf16.xpose.msra.mxu0 0
        %1241 = vmatprep.subr.bf16.mxu0 0
        %1242 = vmatpush1.bf16.xpose.msra.mxu0 0
        %1243 = vmatprep.subr.bf16.mxu0 0
        %1244 = vmatpush1.bf16.xpose.msra.mxu0 0
        %1245 = vmatprep.subr.bf16.mxu0 0
        %1246 = vmatpush1.bf16.xpose.msra.mxu0 0
        %1247 = vmatprep.subr.bf16.mxu0 0
        %1248 = vmatpush1.bf16.xpose.msra.mxu0 0
        %1249 = vmatprep.subr.bf16.mxu0 0
        %1250 = vmatpush1.bf16.xpose.msra.mxu0 0
        %1251 = vmatprep.subr.bf16.mxu0 0
        %1252 = vmatpush1.bf16.xpose.msra.mxu0 0
        %1253 = vmatprep.subr.bf16.mxu0 0
        %1254 = vmatpush1.bf16.xpose.msra.mxu0 0
        %1255 = vmatprep.subr.bf16.mxu0 0
        %1256 = vmatpush1.bf16.xpose.msra.mxu0 0
        %1257 = vmatprep.mubr.bf16.mxu0 0
        %1258 = vmatmul.mubr.bf16.gmra.mrb[0].mxu0 %v1220
        %v1259 = vpop.f32.mrb[0].mxu0
        %v1260 = vadd.f32 0.0, %v1259
        %v1261 = vpop.f32.mrb[0].mxu0
        %v1262 = vpop.f32.mrb[0].mxu0
        %v1263 = vpop.f32.mrb[0].mxu0
        %1264 = vdwg.mxu0
        %v1265 = vsel %vm1080, %v1122, -inf
        %1266 = vmax.xlane.f32.xlu0 %v1265
        %v1267 = vpop.xlane.xlu0 %1266
        %v1268 = vsel %vm1080, %v1168, -inf
        %1269 = vmax.xlane.f32.xlu0 %v1268
        %v1270 = vpop.xlane.xlu0 %1269
        %v1271 = vsel %vm1080, %v1214, -inf
        %1272 = vmax.xlane.f32.xlu0 %v1271
        %v1273 = vpop.xlane.xlu0 %1272
        %v1274 = vsel %vm1080, %v1260, -inf
        %1275 = vmax.xlane.f32.xlu0 %v1274
        %v1276 = vpop.xlane.xlu0 %1275
        %v1277 = vsub.f32 %v1122, %v1267
        %v1278 = vsub.f32 %v1168, %v1270
        %v1279 = vsub.f32 %v1214, %v1273
        %v1280 = vsub.f32 %v1260, %v1276
        %v1281 = vmul.f32 %v1277, 1.442695
        %v1282 = vpow.pop %v1281
        %v1283 = vmul.f32 %v1278, 1.442695
        %v1284 = vpow.pop %v1283
        %v1285 = vmul.f32 %v1279, 1.442695
        %v1286 = vpow.pop %v1285
        %v1287 = vmul.f32 %v1280, 1.442695
        %v1288 = vpow.pop %v1287
        %v1289 = vsel %vm1080, %v1282, 0.0
        %1290 = vadd.xlane.f32.xlu0 %v1289
        %v1291 = vpop.xlane.xlu0 %1290
        %v1292 = vsel %vm1080, %v1284, 0.0
        %1293 = vadd.xlane.f32.xlu0 %v1292
        %v1294 = vpop.xlane.xlu0 %1293
        %v1295 = vsel %vm1080, %v1286, 0.0
        %1296 = vadd.xlane.f32.xlu0 %v1295
        %v1297 = vpop.xlane.xlu0 %1296
        %v1298 = vsel %vm1080, %v1288, 0.0
        %1299 = vadd.xlane.f32.xlu0 %v1298
        %v1300 = vpop.xlane.xlu0 %1299
        %v1301 = vrcp.pop %v1291
        %v1302 = vrcp.pop %v1294
        %v1303 = vrcp.pop %v1297
        %v1304 = vrcp.pop %v1300
        %v1305 = vmul.f32 %v1282, %v1301
        %v1306 = vmul.f32 %v1284, %v1302
        %v1307 = vmul.f32 %v1286, %v1303
        %v1308 = vmul.f32 %v1288, %v1304
        %v1309 = vpack.c.bf16 %v1305, %v1305
        %v1310 = vpack.c.bf16 %v1306, %v1306
        %v1311 = vpack.c.bf16 %v1307, %v1307
        %v1312 = vpack.c.bf16 %v1308, %v1308
        %v1314 = vsel %vm1080, %v1309, 0
        %vm1316 = vcmask 1043456
        %v1318 = vsel %vm1316, %v1070, 0
        %1320 = vmatprep.subr.bf16.mxu0 0
        %1321 = vmatpush1.bf16.msra.mxu0 %v1318
        %1322 = vmatprep.subr.bf16.mxu0 0
        %1323 = vmatpush1.bf16.msra.mxu0 0
        %1324 = vmatprep.subr.bf16.mxu0 0
        %1325 = vmatpush1.bf16.msra.mxu0 0
        %1326 = vmatprep.subr.bf16.mxu0 0
        %1327 = vmatpush1.bf16.msra.mxu0 0
        %1328 = vmatprep.subr.bf16.mxu0 0
        %1329 = vmatpush1.bf16.msra.mxu0 0
        %1330 = vmatprep.subr.bf16.mxu0 0
        %1331 = vmatpush1.bf16.msra.mxu0 0
        %1332 = vmatprep.subr.bf16.mxu0 0
        %1333 = vmatpush1.bf16.msra.mxu0 0
        %1334 = vmatprep.subr.bf16.mxu0 0
        %1335 = vmatpush1.bf16.msra.mxu0 0
        %1336 = vmatprep.subr.bf16.mxu0 0
        %1337 = vmatpush1.bf16.msra.mxu0 0
        %1338 = vmatprep.subr.bf16.mxu0 0
        %1339 = vmatpush1.bf16.msra.mxu0 0
        %1340 = vmatprep.subr.bf16.mxu0 0
        %1341 = vmatpush1.bf16.msra.mxu0 0
        %1342 = vmatprep.subr.bf16.mxu0 0
        %1343 = vmatpush1.bf16.msra.mxu0 0
        %1344 = vmatprep.subr.bf16.mxu0 0
        %1345 = vmatpush1.bf16.msra.mxu0 0
        %1346 = vmatprep.subr.bf16.mxu0 0
        %1347 = vmatpush1.bf16.msra.mxu0 0
        %1348 = vmatprep.subr.bf16.mxu0 0
        %1349 = vmatpush1.bf16.msra.mxu0 0
        %1350 = vmatprep.subr.bf16.mxu0 0
        %1351 = vmatpush1.bf16.msra.mxu0 0
        %1352 = vmatprep.mubr.bf16.mxu0 0
        %1353 = vmatmul.mubr.bf16.gmra.mrb[0].mxu0 %v1314
        %v1354 = vpop.f32.mrb[0].mxu0
        %v1355 = vadd.f32 0.0, %v1354
        %v1356 = vpop.f32.mrb[0].mxu0
        %v1357 = vpop.f32.mrb[0].mxu0
        %v1358 = vpop.f32.mrb[0].mxu0
        %1359 = vdwg.mxu0
        %v1361 = vsel %vm1080, %v1310, 0
        %v1364 = vsel %vm1316, %v1073, 0
        %1366 = vmatprep.subr.bf16.mxu0 0
        %1367 = vmatpush1.bf16.msra.mxu0 %v1364
        %1368 = vmatprep.subr.bf16.mxu0 0
        %1369 = vmatpush1.bf16.msra.mxu0 0
        %1370 = vmatprep.subr.bf16.mxu0 0
        %1371 = vmatpush1.bf16.msra.mxu0 0
        %1372 = vmatprep.subr.bf16.mxu0 0
        %1373 = vmatpush1.bf16.msra.mxu0 0
        %1374 = vmatprep.subr.bf16.mxu0 0
        %1375 = vmatpush1.bf16.msra.mxu0 0
        %1376 = vmatprep.subr.bf16.mxu0 0
        %1377 = vmatpush1.bf16.msra.mxu0 0
        %1378 = vmatprep.subr.bf16.mxu0 0
        %1379 = vmatpush1.bf16.msra.mxu0 0
        %1380 = vmatprep.subr.bf16.mxu0 0
        %1381 = vmatpush1.bf16.msra.mxu0 0
        %1382 = vmatprep.subr.bf16.mxu0 0
        %1383 = vmatpush1.bf16.msra.mxu0 0
        %1384 = vmatprep.subr.bf16.mxu0 0
        %1385 = vmatpush1.bf16.msra.mxu0 0
        %1386 = vmatprep.subr.bf16.mxu0 0
        %1387 = vmatpush1.bf16.msra.mxu0 0
        %1388 = vmatprep.subr.bf16.mxu0 0
        %1389 = vmatpush1.bf16.msra.mxu0 0
        %1390 = vmatprep.subr.bf16.mxu0 0
        %1391 = vmatpush1.bf16.msra.mxu0 0
        %1392 = vmatprep.subr.bf16.mxu0 0
        %1393 = vmatpush1.bf16.msra.mxu0 0
        %1394 = vmatprep.subr.bf16.mxu0 0
        %1395 = vmatpush1.bf16.msra.mxu0 0
        %1396 = vmatprep.subr.bf16.mxu0 0
        %1397 = vmatpush1.bf16.msra.mxu0 0
        %1398 = vmatprep.mubr.bf16.mxu0 0
        %1399 = vmatmul.mubr.bf16.gmra.mrb[0].mxu0 %v1361
        %v1400 = vpop.f32.mrb[0].mxu0
        %v1401 = vadd.f32 0.0, %v1400
        %v1402 = vpop.f32.mrb[0].mxu0
        %v1403 = vpop.f32.mrb[0].mxu0
        %v1404 = vpop.f32.mrb[0].mxu0
        %1405 = vdwg.mxu0
        %v1407 = vsel %vm1080, %v1311, 0
        %v1410 = vsel %vm1316, %v1076, 0
        %1412 = vmatprep.subr.bf16.mxu0 0
        %1413 = vmatpush1.bf16.msra.mxu0 %v1410
        %1414 = vmatprep.subr.bf16.mxu0 0
        %1415 = vmatpush1.bf16.msra.mxu0 0
        %1416 = vmatprep.subr.bf16.mxu0 0
        %1417 = vmatpush1.bf16.msra.mxu0 0
        %1418 = vmatprep.subr.bf16.mxu0 0
        %1419 = vmatpush1.bf16.msra.mxu0 0
        %1420 = vmatprep.subr.bf16.mxu0 0
        %1421 = vmatpush1.bf16.msra.mxu0 0
        %1422 = vmatprep.subr.bf16.mxu0 0
        %1423 = vmatpush1.bf16.msra.mxu0 0
        %1424 = vmatprep.subr.bf16.mxu0 0
        %1425 = vmatpush1.bf16.msra.mxu0 0
        %1426 = vmatprep.subr.bf16.mxu0 0
        %1427 = vmatpush1.bf16.msra.mxu0 0
        %1428 = vmatprep.subr.bf16.mxu0 0
        %1429 = vmatpush1.bf16.msra.mxu0 0
        %1430 = vmatprep.subr.bf16.mxu0 0
        %1431 = vmatpush1.bf16.msra.mxu0 0
        %1432 = vmatprep.subr.bf16.mxu0 0
        %1433 = vmatpush1.bf16.msra.mxu0 0
        %1434 = vmatprep.subr.bf16.mxu0 0
        %1435 = vmatpush1.bf16.msra.mxu0 0
        %1436 = vmatprep.subr.bf16.mxu0 0
        %1437 = vmatpush1.bf16.msra.mxu0 0
        %1438 = vmatprep.subr.bf16.mxu0 0
        %1439 = vmatpush1.bf16.msra.mxu0 0
        %1440 = vmatprep.subr.bf16.mxu0 0
        %1441 = vmatpush1.bf16.msra.mxu0 0
        %1442 = vmatprep.subr.bf16.mxu0 0
        %1443 = vmatpush1.bf16.msra.mxu0 0
        %1444 = vmatprep.mubr.bf16.mxu0 0
        %1445 = vmatmul.mubr.bf16.gmra.mrb[0].mxu0 %v1407
        %v1446 = vpop.f32.mrb[0].mxu0
        %v1447 = vadd.f32 0.0, %v1446
        %v1448 = vpop.f32.mrb[0].mxu0
        %v1449 = vpop.f32.mrb[0].mxu0
        %v1450 = vpop.f32.mrb[0].mxu0
        %1451 = vdwg.mxu0
        %v1453 = vsel %vm1080, %v1312, 0
        %v1456 = vsel %vm1316, %v1079, 0
        %1458 = vmatprep.subr.bf16.mxu0 0
        %1459 = vmatpush1.bf16.msra.mxu0 %v1456
        %1460 = vmatprep.subr.bf16.mxu0 0
        %1461 = vmatpush1.bf16.msra.mxu0 0
        %1462 = vmatprep.subr.bf16.mxu0 0
        %1463 = vmatpush1.bf16.msra.mxu0 0
        %1464 = vmatprep.subr.bf16.mxu0 0
        %1465 = vmatpush1.bf16.msra.mxu0 0
        %1466 = vmatprep.subr.bf16.mxu0 0
        %1467 = vmatpush1.bf16.msra.mxu0 0
        %1468 = vmatprep.subr.bf16.mxu0 0
        %1469 = vmatpush1.bf16.msra.mxu0 0
        %1470 = vmatprep.subr.bf16.mxu0 0
        %1471 = vmatpush1.bf16.msra.mxu0 0
        %1472 = vmatprep.subr.bf16.mxu0 0
        %1473 = vmatpush1.bf16.msra.mxu0 0
        %1474 = vmatprep.subr.bf16.mxu0 0
        %1475 = vmatpush1.bf16.msra.mxu0 0
        %1476 = vmatprep.subr.bf16.mxu0 0
        %1477 = vmatpush1.bf16.msra.mxu0 0
        %1478 = vmatprep.subr.bf16.mxu0 0
        %1479 = vmatpush1.bf16.msra.mxu0 0
        %1480 = vmatprep.subr.bf16.mxu0 0
        %1481 = vmatpush1.bf16.msra.mxu0 0
        %1482 = vmatprep.subr.bf16.mxu0 0
        %1483 = vmatpush1.bf16.msra.mxu0 0
        %1484 = vmatprep.subr.bf16.mxu0 0
        %1485 = vmatpush1.bf16.msra.mxu0 0
        %1486 = vmatprep.subr.bf16.mxu0 0
        %1487 = vmatpush1.bf16.msra.mxu0 0
        %1488 = vmatprep.subr.bf16.mxu0 0
        %1489 = vmatpush1.bf16.msra.mxu0 0
        %1490 = vmatprep.mubr.bf16.mxu0 0
        %1491 = vmatmul.mubr.bf16.gmra.mrb[0].mxu0 %v1453
        %v1492 = vpop.f32.mrb[0].mxu0
        %v1493 = vadd.f32 0.0, %v1492
        %v1494 = vpop.f32.mrb[0].mxu0
        %v1495 = vpop.f32.mrb[0].mxu0
        %v1496 = vpop.f32.mrb[0].mxu0
        %1497 = vdwg.mxu0
        %v1498 = vcombine.low %v1355, %v1447
        %v1499 = vcombine.high %v1355, %v1447
        %v1501 = vunpack.c.l.s4 1983009808
        %v1502 = vunpack.c.0.s8 %v1501
        %v1503 = vlaneseq
        %v1504 = vshrl.u32 %v1503, 7
        %v1505 = vsub.s32 %v1502, %v1504
        %v1506 = vrot.slane %v1498, %v1505
        %v1508 = vunpack.c.l.s4 1983009808
        %v1509 = vunpack.c.0.s8 %v1508
        %v1510 = vlaneseq
        %v1511 = vshrl.u32 %v1510, 7
        %v1512 = vsub.s32 %v1509, %v1511
        %v1513 = vrot.slane %v1499, %v1512
        %v1514 = vcombine.low %v1401, %v1493
        %v1515 = vcombine.high %v1401, %v1493
        %v1517 = vunpack.c.l.s4 1983009808
        %v1518 = vunpack.c.0.s8 %v1517
        %v1519 = vlaneseq
        %v1520 = vshrl.u32 %v1519, 7
        %v1521 = vsub.s32 %v1518, %v1520
        %v1522 = vrot.slane %v1514, %v1521
        %v1524 = vunpack.c.l.s4 1983009808
        %v1525 = vunpack.c.0.s8 %v1524
        %v1526 = vlaneseq
        %v1527 = vshrl.u32 %v1526, 7
        %v1528 = vsub.s32 %v1525, %v1527
        %v1529 = vrot.slane %v1515, %v1528
        %v1530 = vcombine.low %v1506, %v1522
        %v1531 = vcombine.high %v1506, %v1522
        %v1533 = vunpack.c.l.s4 1934713408
        %v1534 = vunpack.c.0.s8 %v1533
        %v1535 = vlaneseq
        %v1536 = vshrl.u32 %v1535, 7
        %v1537 = vsub.s32 %v1534, %v1536
        %v1538 = vrot.slane %v1530, %v1537
        %v1540 = vunpack.c.l.s4 1934713408
        %v1541 = vunpack.c.0.s8 %v1540
        %v1542 = vlaneseq
        %v1543 = vshrl.u32 %v1542, 7
        %v1544 = vsub.s32 %v1541, %v1543
        %v1545 = vrot.slane %v1531, %v1544
        %v1546 = vcombine.low %v1513, %v1529
        %v1547 = vcombine.high %v1513, %v1529
        %v1549 = vunpack.c.l.s4 1934713408
        %v1550 = vunpack.c.0.s8 %v1549
        %v1551 = vlaneseq
        %v1552 = vshrl.u32 %v1551, 7
        %v1553 = vsub.s32 %v1550, %v1552
        %v1554 = vrot.slane %v1546, %v1553
        %v1556 = vunpack.c.l.s4 1934713408
        %v1557 = vunpack.c.0.s8 %v1556
        %v1558 = vlaneseq
        %v1559 = vshrl.u32 %v1558, 7
        %v1560 = vsub.s32 %v1557, %v1559
        %v1561 = vrot.slane %v1547, %v1560
        %v1562 = vcombine.high %v1538, 0.0
        %v1563 = vcombine.high %v1545, 0.0
        %v1564 = vcombine.high %v1554, 0.0
        %v1565 = vcombine.high %v1561, 0.0
        %v1566 = vcombine.low %v1538, %v1545
        %v1568 = vunpack.c.l.s4 1983009808
        %v1569 = vunpack.c.0.s8 %v1568
        %v1570 = vlaneseq
        %v1571 = vshrl.u32 %v1570, 7
        %v1572 = vsub.s32 %v1569, %v1571
        %v1573 = vrot.slane %v1566, %v1572
        %v1574 = vcombine.low %v1562, %v1563
        %v1576 = vunpack.c.l.s4 1983009808
        %v1577 = vunpack.c.0.s8 %v1576
        %v1578 = vlaneseq
        %v1579 = vshrl.u32 %v1578, 7
        %v1580 = vsub.s32 %v1577, %v1579
        %v1581 = vrot.slane %v1574, %v1580
        %v1582 = vcombine.low %v1554, %v1561
        %v1584 = vunpack.c.l.s4 1983009808
        %v1585 = vunpack.c.0.s8 %v1584
        %v1586 = vlaneseq
        %v1587 = vshrl.u32 %v1586, 7
        %v1588 = vsub.s32 %v1585, %v1587
        %v1589 = vrot.slane %v1582, %v1588
        %v1590 = vcombine.low %v1564, %v1565
        %v1592 = vunpack.c.l.s4 1983009808
        %v1593 = vunpack.c.0.s8 %v1592
        %v1594 = vlaneseq
        %v1595 = vshrl.u32 %v1594, 7
        %v1596 = vsub.s32 %v1593, %v1595
        %v1597 = vrot.slane %v1590, %v1596
        %v1598 = vcombine.low %v1573, %v1581
        %v1599 = vcombine.high %v1573, %v1581
        %v1601 = vunpack.c.l.s4 1934713408
        %v1602 = vunpack.c.0.s8 %v1601
        %v1603 = vlaneseq
        %v1604 = vshrl.u32 %v1603, 7
        %v1605 = vsub.s32 %v1602, %v1604
        %v1606 = vrot.slane %v1598, %v1605
        %v1608 = vunpack.c.l.s4 1934713408
        %v1609 = vunpack.c.0.s8 %v1608
        %v1610 = vlaneseq
        %v1611 = vshrl.u32 %v1610, 7
        %v1612 = vsub.s32 %v1609, %v1611
        %v1613 = vrot.slane %v1599, %v1612
        %v1614 = vcombine.low %v1589, %v1597
        %v1615 = vcombine.high %v1589, %v1597
        %v1617 = vunpack.c.l.s4 1934713408
        %v1618 = vunpack.c.0.s8 %v1617
        %v1619 = vlaneseq
        %v1620 = vshrl.u32 %v1619, 7
        %v1621 = vsub.s32 %v1618, %v1620
        %v1622 = vrot.slane %v1614, %v1621
        %v1624 = vunpack.c.l.s4 1934713408
        %v1625 = vunpack.c.0.s8 %v1624
        %v1626 = vlaneseq
        %v1627 = vshrl.u32 %v1626, 7
        %v1628 = vsub.s32 %v1625, %v1627
        %v1629 = vrot.slane %v1615, %v1628
        %v1630 = vcombine.low %v1606, %v1622
        %v1631 = vcombine.high %v1606, %v1622
        %v1632 = vcombine.low %v1613, %v1629
        %v1633 = vcombine.high %v1613, %v1629
        %1635 = vrot.lane.b32.xlu0 %v1631, 8
        %v1636 = vpop.permute.xlu0 %1635
        %1639 = vrot.lane.b32.xlu0 %v1632, 16
        %v1640 = vpop.permute.xlu0 %1639
        %1643 = vrot.lane.b32.xlu0 %v1633, 24
        %v1644 = vpop.permute.xlu0 %1643
        %v1646 = vsel %vm1080, %v1630, %v1636
        %vm1647 = vcmask 130048
        %v1648 = vsel %vm1647, %v1646, %v1640
        %vm1649 = vcmask 195584
        %v1650 = vsel %vm1649, %v1648, %v1644
        %v1651 = vpack.c.bf16 %v1650, %v1650
        %v1652 = vld [vmem:[#allocation11] sm:$0xf]
        %v1653 = vld [vmem:[#allocation11 + $0x4] sm:$0xf]
        %v1654 = vld [vmem:[#allocation11 + $0x8] sm:$0xf]
        %v1655 = vld [vmem:[#allocation11 + $0xc] sm:$0xf]
        %v1656 = vld [vmem:[%s7] sm:$0x1]
        %v1658 = vlaneseq
        %v1659 = vshrl.u32 %v1658, 7
        %v1660 = vsub.s32 0, %v1659
        %v1661 = vrot.slane %v1656, %v1660
        %v1667 = vunpack.c.l.b16 %v1652
        %v1668 = vunpack.c.l.b16 %v1653
        %v1669 = vunpack.c.l.b16 %v1654
        %v1670 = vunpack.c.l.b16 %v1655
        %v1671 = vpack.c.b16 %v1668, %v1667
        %v1672 = vpack.c.b16 %v1670, %v1669
        %v1676 = vsel %vm471, %v1651, 0
        %1678 = vmatprep.subr.bf16.mxu0 0
        %1679 = vmatpush1.bf16.msra.mxu0 %v1671
        %1680 = vmatprep.subr.bf16.mxu0 0
        %1681 = vmatpush1.bf16.msra.mxu0 %v1672
        %1682 = vmatprep.subr.bf16.mxu0 0
        %1683 = vmatpush1.bf16.msra.mxu0 0
        %1684 = vmatprep.subr.bf16.mxu0 0
        %1685 = vmatpush1.bf16.msra.mxu0 0
        %1686 = vmatprep.subr.bf16.mxu0 0
        %1687 = vmatpush1.bf16.msra.mxu0 0
        %1688 = vmatprep.subr.bf16.mxu0 0
        %1689 = vmatpush1.bf16.msra.mxu0 0
        %1690 = vmatprep.subr.bf16.mxu0 0
        %1691 = vmatpush1.bf16.msra.mxu0 0
        %1692 = vmatprep.subr.bf16.mxu0 0
        %1693 = vmatpush1.bf16.msra.mxu0 0
        %1694 = vmatprep.subr.bf16.mxu0 0
        %1695 = vmatpush1.bf16.msra.mxu0 0
        %1696 = vmatprep.subr.bf16.mxu0 0
        %1697 = vmatpush1.bf16.msra.mxu0 0
        %1698 = vmatprep.subr.bf16.mxu0 0
        %1699 = vmatpush1.bf16.msra.mxu0 0
        %1700 = vmatprep.subr.bf16.mxu0 0
        %1701 = vmatpush1.bf16.msra.mxu0 0
        %1702 = vmatprep.subr.bf16.mxu0 0
        %1703 = vmatpush1.bf16.msra.mxu0 0
        %1704 = vmatprep.subr.bf16.mxu0 0
        %1705 = vmatpush1.bf16.msra.mxu0 0
        %1706 = vmatprep.subr.bf16.mxu0 0
        %1707 = vmatpush1.bf16.msra.mxu0 0
        %1708 = vmatprep.subr.bf16.mxu0 0
        %1709 = vmatpush1.bf16.msra.mxu0 0
        %1710 = vmatprep.mubr.bf16.mxu0 0
        %1711 = vmatmul.mubr.bf16.gmra.mrb[0].mxu0 %v1676
        %v1712 = vpop.f32.mrb[0].mxu0
        %v1713 = vadd.f32 %v1661, %v1712
        %v1714 = vpop.f32.mrb[0].mxu0
        %v1715 = vpop.f32.mrb[0].mxu0
        %v1716 = vpop.f32.mrb[0].mxu0
        %1717 = vdwg.mxu0
        %1718 = vst.msk [vmem:[%s452] sm:$0xff] %vm471, %v1713
        %s1719 = sand.u32 %s237, 1
        %s1720 = scalar_lea.sflag [#allocation4], %s1719
        %s1721 = sand.u32 %s237, 1
        %s1722 = smul.addr %s1721, 8
        %s1723 = scalar_lea.vmem [#allocation13], %s1722
        // Predicated region
        $region77: #{tpu_custom_call.1} parent=51 // pred_check
          %p1724 = pneg %p247
        $region78: #{tpu_custom_call.1} parent=51 // pred_check_branch
          %1726 = sbr.rel (%p1724) target = $region80
        $region79: #{tpu_custom_call.1} parent=51 // pred_region
          %s1728 = ssub.s32 128, 128
          %1729 = vsyncadd %s1720, %s1728
          %s1730 = sadd.s32 %s35, %s34
          %s1731 = smul.addr %s1730, 128
          %s1732 = scalar_lea.hbm %s8, %s1731
          %s1734 = sshll.u32 %s1723, 4
          %s1735 = int_to_ptr.vmem [resolvable:$true] %s1734
          %1737 = dma.vmem_to_hbm [thread:$0]  %s1735, 128, %s1732, %s1720
        $region80: #{tpu_custom_call.1} parent=51 // pred_fallthru
          _
      $region52: #{tpu_custom_call.1} parent=5 // pred_fallthru
        _
      %p1738 = scmp.le.s32.totalorder 2, %s25
      // Predicated region
      $region81: #{tpu_custom_call.1} parent=5 // pred_check
        %p1739 = pneg %p1738
      $region82: #{tpu_custom_call.1} parent=5 // pred_check_branch
        %1741 = sbr.rel (%p1739) target = $region84
      $region83: #{tpu_custom_call.1} parent=5 // pred_region
        %s1742 = ssub.s32 %s25, 2
        // Predicated region
        $region85: #{tpu_custom_call.1} parent=83 // pred_check
          %p1743 = pneg %p253
        $region86: #{tpu_custom_call.1} parent=83 // pred_check_branch
          %1745 = sbr.rel (%p1743) target = $region88
        $region87: #{tpu_custom_call.1} parent=83 // pred_region
          %s1746 = sand.u32 %s238, 1
          %s1747 = scalar_lea.sflag [#allocation4], %s1746
          %s1748 = sand.u32 %s238, 1
          %s1749 = smul.addr %s1748, 8
          %s1750 = scalar_lea.vmem [#allocation13], %s1749
          %1751 = dma.done %s1747, 128
        $region88: #{tpu_custom_call.1} parent=83 // pred_fallthru
          _
      $region84: #{tpu_custom_call.1} parent=5 // pred_fallthru
        _
    $region6: #{tpu_custom_call.1} parent=1 // loop_footer
      %s29 = sadd.s32 1, %s25
    $region7: #{tpu_custom_call.1} parent=1 // loop_footer_branch
      %24 = sbr.rel target = $region3
    $region8: #{tpu_custom_call.1} parent=1 // loop_exit
      _
    %1752 = vsyncpa [#allocation3], 1
    %s1753 = scalar_lea.sflag [#allocation3], 1
    %1754 = vsyncpa %s1753, 1
    %1755 = vsyncpa [#allocation6], 1
    %s1756 = scalar_lea.sflag [#allocation6], 1
    %1757 = vsyncpa %s1756, 1
    %1758 = vsyncpa [#allocation9], 1
    %1759 = vsyncpa [#allocation12], 1
    %1760 = vsyncpa [#allocation4], 1
    %s1761 = scalar_lea.sflag [#allocation4], 1
    %1762 = vsyncpa %s1761, 1

</llo_original>
